<compile_context>
chip_gen: v7x
topology: tpu7x:2x2x1
jax: 0.10.0
libtpu: 0.0.40
codegen_flags: <defaults>
</compile_context>

<pallas_src>
import math

import jax
import jax.numpy as jnp
from jax.experimental import pallas as pl
from jax.experimental.pallas import tpu as pltpu


# ------------------------------- kernel -------------------------------------

def _make_kernel(B, L, K, n_hid, n_out, dils):
    BL = B * L
    Lp = L // 2
    H = n_hid
    eps = 1e-5
    f32 = jnp.float32

    def kernel(x_ref,
               wskip0_ref, bskip0_ref,
               wgs10_ref, bgs10_ref, wgs20_ref, bgs20_ref,
               wskip1_ref, bskip1_ref,
               wgs11_ref, bgs11_ref, wgs21_ref, bgs21_ref,
               whead_ref, bhead_ref,
               out_ref):

        def causal_shift(h, s):
            # Shift rows down by s within each length-L batch segment, zero fill.
            if s == 0:
                return h
            if s >= L:
                return jnp.zeros_like(h)
            rolled = pltpu.roll(h, shift=s, axis=0)            # sublane rotate
            row = jax.lax.broadcasted_iota(jnp.int32, (BL, 1), 0)
            return jnp.where((row % L) >= s, rolled, 0.0)

        def gated_conv(h, d, w_ref, b_ref):
            # w_ref: [K, Cin, 2H] fused gate||sig weights; b_ref: [1, 2H].
            acc = jnp.zeros((BL, 2 * H), f32) + b_ref[...]
            for t in range(K):
                s = d * (K - 1 - t)
                if s >= L:            # tap only sees the zero left padding
                    continue
                hs = causal_shift(h, s)
                acc = acc + jnp.dot(hs, w_ref[t], preferred_element_type=f32)
            return jax.nn.sigmoid(acc[:, :H]) * jnp.tanh(acc[:, H:2 * H])

        def batchnorm(h):
            # training-mode BatchNorm1d: biased stats over (B, L), weight=1 bias=0
            mean = jnp.sum(h, axis=0, keepdims=True) * (1.0 / BL)
            c = h - mean
            var = jnp.sum(c * c, axis=0, keepdims=True) * (1.0 / BL)
            return c * jax.lax.rsqrt(var + eps)

        def res_block(h, d, wskip_ref, bskip_ref,
                      wgs1_ref, bgs1_ref, wgs2_ref, bgs2_ref):
            skip = jnp.dot(h, wskip_ref[...], preferred_element_type=f32) + bskip_ref[...]
            h = batchnorm(gated_conv(h, d, wgs1_ref, bgs1_ref))
            h = batchnorm(gated_conv(h, 2 * d, wgs2_ref, bgs2_ref))
            return h + skip

        h = x_ref[...]
        h = res_block(h, dils[0], wskip0_ref, bskip0_ref,
                      wgs10_ref, bgs10_ref, wgs20_ref, bgs20_ref)
        h = res_block(h, dils[1], wskip1_ref, bskip1_ref,
                      wgs11_ref, bgs11_ref, wgs21_ref, bgs21_ref)

        # F.dropout(p=0.0) == identity.
        # MaxPool1d(2,2): pair-max of row i with row i+1; only even rows are
        # valid pool outputs — odd rows are excluded below via the softmax mask.
        pooled = jnp.maximum(h, pltpu.roll(h, shift=BL - 1, axis=0))

        # Fused prediction + attention head: [n_hid, n_out + 1].
        z = jnp.dot(pooled, whead_ref[...], preferred_element_type=f32) + bhead_ref[...]
        z3 = z.reshape(B, L, n_out + 1)
        pred = z3[:, :, :n_out]                 # [B, L, n_out]
        logit = z3[:, :, n_out:]                # [B, L, 1]
        t_idx = jax.lax.broadcasted_iota(jnp.int32, (B, L, 1), 1)
        logit = jnp.where((t_idx % 2) == 0, logit, jnp.float32(-1e30))
        m = jnp.max(logit, axis=1, keepdims=True)
        ex = jnp.exp(logit - m)                 # odd rows underflow to exactly 0
        att = ex / jnp.sum(ex, axis=1, keepdims=True)   # exact divide (precision)
        # mean over the Lp pooled timesteps; odd rows contribute 0.
        out_ref[...] = jnp.sum(pred * att, axis=1) * (1.0 / Lp)   # single store

    return kernel


# ----------------------------- glue (plain JAX) -----------------------------

def init_params(key, n_in, n_hid, n_out, ks=5, depth=2):
    keys = iter(jax.random.split(key, depth * 5 + 2))

    def conv_w(cin, cout, k_size):
        # PyTorch: weight ~ N(0, sqrt(2 / (k * out_channels))), stored [k, Cin, Cout]
        std = math.sqrt(2.0 / (k_size * cout))
        return std * jax.random.normal(next(keys), (k_size, cin, cout), jnp.float32)

    def bias(cout):
        return jnp.full((1, cout), 0.1, jnp.float32)

    params = {}
    for i in range(depth):
        cin = n_in if i == 0 else n_hid
        params[f"block{i}"] = {
            "wskip": conv_w(cin, n_hid, 1)[0], "bskip": bias(n_hid),
            "wg1": conv_w(cin, n_hid, ks), "bg1": bias(n_hid),
            "ws1": conv_w(cin, n_hid, ks), "bs1": bias(n_hid),
            "wg2": conv_w(n_hid, n_hid, ks), "bg2": bias(n_hid),
            "ws2": conv_w(n_hid, n_hid, ks), "bs2": bias(n_hid),
        }
    params["wpred"] = conv_w(n_hid, n_out, 1)[0]
    params["bpred"] = bias(n_out)
    params["watt"] = conv_w(n_hid, 1, 1)[0]
    params["batt"] = bias(1)
    return params


def gated_res_causal_cnn(x_bcl, params, ks=5):
    """x_bcl: [B, n_in, L] (PyTorch NCL). Returns edge_prob [B, n_out]."""
    x = jnp.transpose(x_bcl, (0, 2, 1)).astype(jnp.float32)   # [B, L, n_in]
    B, L, n_in = x.shape
    n_hid = params["block0"]["wg1"].shape[2]
    n_out = params["wpred"].shape[1]
    xf = x.reshape(B * L, n_in)                                # flat batch*time slab

    def fuse(p):  # fuse gate || sig weights and biases per gated conv
        return (jnp.concatenate([p["wg1"], p["ws1"]], axis=2),
                jnp.concatenate([p["bg1"], p["bs1"]], axis=1),
                jnp.concatenate([p["wg2"], p["ws2"]], axis=2),
                jnp.concatenate([p["bg2"], p["bs2"]], axis=1))

    wgs10, bgs10, wgs20, bgs20 = fuse(params["block0"])
    wgs11, bgs11, wgs21, bgs21 = fuse(params["block1"])
    whead = jnp.concatenate([params["wpred"], params["watt"]], axis=1)   # [H, n_out+1]
    bhead = jnp.concatenate([params["bpred"], params["batt"]], axis=1)   # [1, n_out+1]

    # block i uses dilation 2**(2i) for conv1 and 2x that for conv2 (depth=2)
    kernel = _make_kernel(B, L, ks, n_hid, n_out, dils=(1, 4))

    inputs = [
        xf,
        params["block0"]["wskip"], params["block0"]["bskip"],
        wgs10, bgs10, wgs20, bgs20,
        params["block1"]["wskip"], params["block1"]["bskip"],
        wgs11, bgs11, wgs21, bgs21,
        whead, bhead,
    ]
    return pl.pallas_call(
        kernel,
        out_shape=jax.ShapeDtypeStruct((B, n_out), jnp.float32),
        in_specs=[pl.BlockSpec(memory_space=pltpu.MemorySpace.VMEM)] * len(inputs),
        out_specs=pl.BlockSpec(memory_space=pltpu.MemorySpace.VMEM),
    )(*inputs)


# --------------------------- pure-JAX reference ------------------------------

def _reference(x_bcl, params, ks=5):
    x = jnp.transpose(x_bcl, (0, 2, 1)).astype(jnp.float32)   # [B, L, C]
    B, L, _ = x.shape
    hp = jax.lax.Precision.HIGHEST

    def causal_conv(h, w, b, d):
        K = w.shape[0]
        y = jnp.zeros((B, L, w.shape[2]), jnp.float32) + b
        for t in range(K):
            s = d * (K - 1 - t)
            if s >= L:
                continue
            hs = h if s == 0 else jnp.concatenate(
                [jnp.zeros((B, s, h.shape[2]), jnp.float32), h[:, :L - s, :]], axis=1)
            y = y + jnp.einsum("blc,cd->bld", hs, w[t], precision=hp)
        return y

    def gated(h, p, idx, d):
        return (jax.nn.sigmoid(causal_conv(h, p[f"wg{idx}"], p[f"bg{idx}"], d))
                * jnp.tanh(causal_conv(h, p[f"ws{idx}"], p[f"bs{idx}"], d)))

    def bn(h):
        mean = h.mean(axis=(0, 1), keepdims=True)
        var = ((h - mean) ** 2).mean(axis=(0, 1), keepdims=True)
        return (h - mean) * jax.lax.rsqrt(var + 1e-5)

    def block(h, p, d):
        skip = jnp.einsum("blc,cd->bld", h, p["wskip"], precision=hp) + p["bskip"]
        h = bn(gated(h, p, 1, d))
        h = bn(gated(h, p, 2, 2 * d))
        return h + skip

    h = block(x, params["block0"], 1)
    h = block(h, params["block1"], 4)
    h = jnp.max(h.reshape(B, L // 2, 2, -1), axis=2)                       # MaxPool1d(2,2)
    pred = jnp.einsum("blc,cd->bld", h, params["wpred"], precision=hp) + params["bpred"]
    logit = jnp.einsum("blc,cd->bld", h, params["watt"], precision=hp) + params["batt"]
    att = jax.nn.softmax(logit, axis=1)
    return jnp.mean(pred * att, axis=1)


if __name__ == "__main__":
    key = jax.random.PRNGKey(0)
    B, n_in, n_hid, n_out, L = 2, 4, 32, 8, 16
    kp, kx = jax.random.split(key)
    params = init_params(kp, n_in, n_hid, n_out)
    x = jax.random.normal(kx, (B, n_in, L), jnp.float32)   # PyTorch NCL layout

    out = jax.block_until_ready(gated_res_causal_cnn(x, params))
    ref = _reference(x, params)

    assert out.shape == (B, n_out)
    assert bool(jnp.all(jnp.isfinite(out)))
    assert bool(jnp.allclose(out, ref, atol=2e-3, rtol=2e-3)), (out, ref)
    print("KERNEL_OK")
</pallas_src>

<mosaic_0001>
module attributes {stable_mosaic.version = 11 : i64} {
  func.func @kernel(%arg0: memref<32x4xf32, #tpu.memory_space<vmem>>, %arg1: memref<4x32xf32, #tpu.memory_space<vmem>>, %arg2: memref<1x32xf32, #tpu.memory_space<vmem>>, %arg3: memref<5x4x64xf32, #tpu.memory_space<vmem>>, %arg4: memref<1x64xf32, #tpu.memory_space<vmem>>, %arg5: memref<5x32x64xf32, #tpu.memory_space<vmem>>, %arg6: memref<1x64xf32, #tpu.memory_space<vmem>>, %arg7: memref<32x32xf32, #tpu.memory_space<vmem>>, %arg8: memref<1x32xf32, #tpu.memory_space<vmem>>, %arg9: memref<5x32x64xf32, #tpu.memory_space<vmem>>, %arg10: memref<1x64xf32, #tpu.memory_space<vmem>>, %arg11: memref<5x32x64xf32, #tpu.memory_space<vmem>>, %arg12: memref<1x64xf32, #tpu.memory_space<vmem>>, %arg13: memref<32x9xf32, #tpu.memory_space<vmem>>, %arg14: memref<1x9xf32, #tpu.memory_space<vmem>>, %arg15: memref<2x8xf32, #tpu.memory_space<vmem>>) attributes {dimension_semantics = [], scalar_prefetch = 0 : i64, scratch_operands = 0 : i64, tpu.core_type = #tpu.core_type<tc>} {
    %c0 = arith.constant 0 : index
    %c0_0 = arith.constant 0 : index
    %0 = vector.load %arg0[%c0, %c0_0] : memref<32x4xf32, #tpu.memory_space<vmem>>, vector<32x4xf32>
    %c0_1 = arith.constant 0 : index
    %c0_2 = arith.constant 0 : index
    %1 = vector.load %arg1[%c0_1, %c0_2] : memref<4x32xf32, #tpu.memory_space<vmem>>, vector<4x32xf32>
    %cst = arith.constant dense<0.000000e+00> : vector<32x32xf32>
    %2 = tpu.matmul %0, %1, %cst {dimension_numbers = #tpu.dot_dimension_numbers<[1], [0], [0], [1], [0, 0, 1, 1], [], []>} : vector<32x4xf32>, vector<4x32xf32>, vector<32x32xf32> -> vector<32x32xf32>
    %c0_3 = arith.constant 0 : index
    %c0_4 = arith.constant 0 : index
    %3 = vector.load %arg2[%c0_3, %c0_4] : memref<1x32xf32, #tpu.memory_space<vmem>>, vector<1x32xf32>
    %4 = vector.broadcast %3 : vector<1x32xf32> to vector<32x32xf32>
    %5 = arith.addf %2, %4 : vector<32x32xf32>
    %cst_5 = arith.constant 0.000000e+00 : f32
    %6 = vector.broadcast %cst_5 : f32 to vector<32x64xf32>
    %c0_6 = arith.constant 0 : index
    %c0_7 = arith.constant 0 : index
    %7 = vector.load %arg4[%c0_6, %c0_7] : memref<1x64xf32, #tpu.memory_space<vmem>>, vector<1x64xf32>
    %8 = vector.broadcast %7 : vector<1x64xf32> to vector<32x64xf32>
    %9 = arith.addf %6, %8 : vector<32x64xf32>
    %c4_i32 = arith.constant 4 : i32
    %10 = tpu.dynamic_rotate %0 by %c4_i32 dim 0 : vector<32x4xf32>, i32 -> vector<32x4xf32>
    %11 = tpu.iota {dimensions = array<i32: 0>} : vector<32x1xi32>
    %c16_i32 = arith.constant 16 : i32
    %c0_i32 = arith.constant 0 : i32
    %12 = arith.cmpi eq, %c16_i32, %c0_i32 : i32
    %c1_i32 = arith.constant 1 : i32
    %13 = arith.select %12, %c1_i32, %c16_i32 : i32
    %14 = vector.broadcast %13 : i32 to vector<32x1xi32>
    %15 = arith.remsi %11, %14 : vector<32x1xi32>
    %c0_i32_8 = arith.constant 0 : i32
    %16 = vector.broadcast %c0_i32_8 : i32 to vector<32x1xi32>
    %17 = arith.cmpi ne, %15, %16 : vector<32x1xi32>
    %c0_i32_9 = arith.constant 0 : i32
    %18 = vector.broadcast %c0_i32_9 : i32 to vector<32x1xi32>
    %19 = arith.cmpi slt, %15, %18 : vector<32x1xi32>
    %c0_i32_10 = arith.constant 0 : i32
    %20 = arith.cmpi slt, %13, %c0_i32_10 : i32
    %21 = vector.broadcast %20 : i1 to vector<32x1xi1>
    %22 = vector.broadcast %21 : vector<32x1xi1> to vector<32x1xi1>
    %23 = arith.xori %19, %22 : vector<32x1xi1>
    %24 = arith.andi %23, %17 : vector<32x1xi1>
    %25 = vector.broadcast %13 : i32 to vector<32x1xi32>
    %26 = arith.addi %15, %25 : vector<32x1xi32>
    %27 = arith.select %24, %26, %15 : vector<32x1xi1>, vector<32x1xi32>
    %c4_i32_11 = arith.constant 4 : i32
    %28 = vector.broadcast %c4_i32_11 : i32 to vector<32x1xi32>
    %29 = arith.cmpi sge, %27, %28 : vector<32x1xi32>
    %cst_12 = arith.constant 0.000000e+00 : f32
    %30 = vector.shape_cast %29 : vector<32x1xi1> to vector<32x1xi1>
    %31 = vector.broadcast %30 : vector<32x1xi1> to vector<32x4xi1>
    %32 = vector.broadcast %cst_12 : f32 to vector<32x4xf32>
    %33 = arith.select %31, %10, %32 : vector<32x4xi1>, vector<32x4xf32>
    %c0_13 = arith.constant 0 : index
    %c0_14 = arith.constant 0 : index
    %c0_15 = arith.constant 0 : index
    %34 = vector.load %arg3[%c0_13, %c0_14, %c0_15] : memref<5x4x64xf32, #tpu.memory_space<vmem>>, vector<1x4x64xf32>
    %35 = vector.shape_cast %34 : vector<1x4x64xf32> to vector<4x64xf32>
    %cst_16 = arith.constant dense<0.000000e+00> : vector<32x64xf32>
    %36 = tpu.matmul %33, %35, %cst_16 {dimension_numbers = #tpu.dot_dimension_numbers<[1], [0], [0], [1], [0, 0, 1, 1], [], []>} : vector<32x4xf32>, vector<4x64xf32>, vector<32x64xf32> -> vector<32x64xf32>
    %37 = arith.addf %9, %36 : vector<32x64xf32>
    %c3_i32 = arith.constant 3 : i32
    %38 = tpu.dynamic_rotate %0 by %c3_i32 dim 0 : vector<32x4xf32>, i32 -> vector<32x4xf32>
    %39 = tpu.iota {dimensions = array<i32: 0>} : vector<32x1xi32>
    %c16_i32_17 = arith.constant 16 : i32
    %c0_i32_18 = arith.constant 0 : i32
    %40 = arith.cmpi eq, %c16_i32_17, %c0_i32_18 : i32
    %c1_i32_19 = arith.constant 1 : i32
    %41 = arith.select %40, %c1_i32_19, %c16_i32_17 : i32
    %42 = vector.broadcast %41 : i32 to vector<32x1xi32>
    %43 = arith.remsi %39, %42 : vector<32x1xi32>
    %c0_i32_20 = arith.constant 0 : i32
    %44 = vector.broadcast %c0_i32_20 : i32 to vector<32x1xi32>
    %45 = arith.cmpi ne, %43, %44 : vector<32x1xi32>
    %c0_i32_21 = arith.constant 0 : i32
    %46 = vector.broadcast %c0_i32_21 : i32 to vector<32x1xi32>
    %47 = arith.cmpi slt, %43, %46 : vector<32x1xi32>
    %c0_i32_22 = arith.constant 0 : i32
    %48 = arith.cmpi slt, %41, %c0_i32_22 : i32
    %49 = vector.broadcast %48 : i1 to vector<32x1xi1>
    %50 = vector.broadcast %49 : vector<32x1xi1> to vector<32x1xi1>
    %51 = arith.xori %47, %50 : vector<32x1xi1>
    %52 = arith.andi %51, %45 : vector<32x1xi1>
    %53 = vector.broadcast %41 : i32 to vector<32x1xi32>
    %54 = arith.addi %43, %53 : vector<32x1xi32>
    %55 = arith.select %52, %54, %43 : vector<32x1xi1>, vector<32x1xi32>
    %c3_i32_23 = arith.constant 3 : i32
    %56 = vector.broadcast %c3_i32_23 : i32 to vector<32x1xi32>
    %57 = arith.cmpi sge, %55, %56 : vector<32x1xi32>
    %cst_24 = arith.constant 0.000000e+00 : f32
    %58 = vector.shape_cast %57 : vector<32x1xi1> to vector<32x1xi1>
    %59 = vector.broadcast %58 : vector<32x1xi1> to vector<32x4xi1>
    %60 = vector.broadcast %cst_24 : f32 to vector<32x4xf32>
    %61 = arith.select %59, %38, %60 : vector<32x4xi1>, vector<32x4xf32>
    %c1 = arith.constant 1 : index
    %c0_25 = arith.constant 0 : index
    %c0_26 = arith.constant 0 : index
    %62 = vector.load %arg3[%c1, %c0_25, %c0_26] : memref<5x4x64xf32, #tpu.memory_space<vmem>>, vector<1x4x64xf32>
    %63 = vector.shape_cast %62 : vector<1x4x64xf32> to vector<4x64xf32>
    %cst_27 = arith.constant dense<0.000000e+00> : vector<32x64xf32>
    %64 = tpu.matmul %61, %63, %cst_27 {dimension_numbers = #tpu.dot_dimension_numbers<[1], [0], [0], [1], [0, 0, 1, 1], [], []>} : vector<32x4xf32>, vector<4x64xf32>, vector<32x64xf32> -> vector<32x64xf32>
    %65 = arith.addf %37, %64 : vector<32x64xf32>
    %c2_i32 = arith.constant 2 : i32
    %66 = tpu.dynamic_rotate %0 by %c2_i32 dim 0 : vector<32x4xf32>, i32 -> vector<32x4xf32>
    %67 = tpu.iota {dimensions = array<i32: 0>} : vector<32x1xi32>
    %c16_i32_28 = arith.constant 16 : i32
    %c0_i32_29 = arith.constant 0 : i32
    %68 = arith.cmpi eq, %c16_i32_28, %c0_i32_29 : i32
    %c1_i32_30 = arith.constant 1 : i32
    %69 = arith.select %68, %c1_i32_30, %c16_i32_28 : i32
    %70 = vector.broadcast %69 : i32 to vector<32x1xi32>
    %71 = arith.remsi %67, %70 : vector<32x1xi32>
    %c0_i32_31 = arith.constant 0 : i32
    %72 = vector.broadcast %c0_i32_31 : i32 to vector<32x1xi32>
    %73 = arith.cmpi ne, %71, %72 : vector<32x1xi32>
    %c0_i32_32 = arith.constant 0 : i32
    %74 = vector.broadcast %c0_i32_32 : i32 to vector<32x1xi32>
    %75 = arith.cmpi slt, %71, %74 : vector<32x1xi32>
    %c0_i32_33 = arith.constant 0 : i32
    %76 = arith.cmpi slt, %69, %c0_i32_33 : i32
    %77 = vector.broadcast %76 : i1 to vector<32x1xi1>
    %78 = vector.broadcast %77 : vector<32x1xi1> to vector<32x1xi1>
    %79 = arith.xori %75, %78 : vector<32x1xi1>
    %80 = arith.andi %79, %73 : vector<32x1xi1>
    %81 = vector.broadcast %69 : i32 to vector<32x1xi32>
    %82 = arith.addi %71, %81 : vector<32x1xi32>
    %83 = arith.select %80, %82, %71 : vector<32x1xi1>, vector<32x1xi32>
    %c2_i32_34 = arith.constant 2 : i32
    %84 = vector.broadcast %c2_i32_34 : i32 to vector<32x1xi32>
    %85 = arith.cmpi sge, %83, %84 : vector<32x1xi32>
    %cst_35 = arith.constant 0.000000e+00 : f32
    %86 = vector.shape_cast %85 : vector<32x1xi1> to vector<32x1xi1>
    %87 = vector.broadcast %86 : vector<32x1xi1> to vector<32x4xi1>
    %88 = vector.broadcast %cst_35 : f32 to vector<32x4xf32>
    %89 = arith.select %87, %66, %88 : vector<32x4xi1>, vector<32x4xf32>
    %c2 = arith.constant 2 : index
    %c0_36 = arith.constant 0 : index
    %c0_37 = arith.constant 0 : index
    %90 = vector.load %arg3[%c2, %c0_36, %c0_37] : memref<5x4x64xf32, #tpu.memory_space<vmem>>, vector<1x4x64xf32>
    %91 = vector.shape_cast %90 : vector<1x4x64xf32> to vector<4x64xf32>
    %cst_38 = arith.constant dense<0.000000e+00> : vector<32x64xf32>
    %92 = tpu.matmul %89, %91, %cst_38 {dimension_numbers = #tpu.dot_dimension_numbers<[1], [0], [0], [1], [0, 0, 1, 1], [], []>} : vector<32x4xf32>, vector<4x64xf32>, vector<32x64xf32> -> vector<32x64xf32>
    %93 = arith.addf %65, %92 : vector<32x64xf32>
    %c1_i32_39 = arith.constant 1 : i32
    %94 = tpu.dynamic_rotate %0 by %c1_i32_39 dim 0 : vector<32x4xf32>, i32 -> vector<32x4xf32>
    %95 = tpu.iota {dimensions = array<i32: 0>} : vector<32x1xi32>
    %c16_i32_40 = arith.constant 16 : i32
    %c0_i32_41 = arith.constant 0 : i32
    %96 = arith.cmpi eq, %c16_i32_40, %c0_i32_41 : i32
    %c1_i32_42 = arith.constant 1 : i32
    %97 = arith.select %96, %c1_i32_42, %c16_i32_40 : i32
    %98 = vector.broadcast %97 : i32 to vector<32x1xi32>
    %99 = arith.remsi %95, %98 : vector<32x1xi32>
    %c0_i32_43 = arith.constant 0 : i32
    %100 = vector.broadcast %c0_i32_43 : i32 to vector<32x1xi32>
    %101 = arith.cmpi ne, %99, %100 : vector<32x1xi32>
    %c0_i32_44 = arith.constant 0 : i32
    %102 = vector.broadcast %c0_i32_44 : i32 to vector<32x1xi32>
    %103 = arith.cmpi slt, %99, %102 : vector<32x1xi32>
    %c0_i32_45 = arith.constant 0 : i32
    %104 = arith.cmpi slt, %97, %c0_i32_45 : i32
    %105 = vector.broadcast %104 : i1 to vector<32x1xi1>
    %106 = vector.broadcast %105 : vector<32x1xi1> to vector<32x1xi1>
    %107 = arith.xori %103, %106 : vector<32x1xi1>
    %108 = arith.andi %107, %101 : vector<32x1xi1>
    %109 = vector.broadcast %97 : i32 to vector<32x1xi32>
    %110 = arith.addi %99, %109 : vector<32x1xi32>
    %111 = arith.select %108, %110, %99 : vector<32x1xi1>, vector<32x1xi32>
    %c1_i32_46 = arith.constant 1 : i32
    %112 = vector.broadcast %c1_i32_46 : i32 to vector<32x1xi32>
    %113 = arith.cmpi sge, %111, %112 : vector<32x1xi32>
    %cst_47 = arith.constant 0.000000e+00 : f32
    %114 = vector.shape_cast %113 : vector<32x1xi1> to vector<32x1xi1>
    %115 = vector.broadcast %114 : vector<32x1xi1> to vector<32x4xi1>
    %116 = vector.broadcast %cst_47 : f32 to vector<32x4xf32>
    %117 = arith.select %115, %94, %116 : vector<32x4xi1>, vector<32x4xf32>
    %c3 = arith.constant 3 : index
    %c0_48 = arith.constant 0 : index
    %c0_49 = arith.constant 0 : index
    %118 = vector.load %arg3[%c3, %c0_48, %c0_49] : memref<5x4x64xf32, #tpu.memory_space<vmem>>, vector<1x4x64xf32>
    %119 = vector.shape_cast %118 : vector<1x4x64xf32> to vector<4x64xf32>
    %cst_50 = arith.constant dense<0.000000e+00> : vector<32x64xf32>
    %120 = tpu.matmul %117, %119, %cst_50 {dimension_numbers = #tpu.dot_dimension_numbers<[1], [0], [0], [1], [0, 0, 1, 1], [], []>} : vector<32x4xf32>, vector<4x64xf32>, vector<32x64xf32> -> vector<32x64xf32>
    %121 = arith.addf %93, %120 : vector<32x64xf32>
    %c4 = arith.constant 4 : index
    %c0_51 = arith.constant 0 : index
    %c0_52 = arith.constant 0 : index
    %122 = vector.load %arg3[%c4, %c0_51, %c0_52] : memref<5x4x64xf32, #tpu.memory_space<vmem>>, vector<1x4x64xf32>
    %123 = vector.shape_cast %122 : vector<1x4x64xf32> to vector<4x64xf32>
    %cst_53 = arith.constant dense<0.000000e+00> : vector<32x64xf32>
    %124 = tpu.matmul %0, %123, %cst_53 {dimension_numbers = #tpu.dot_dimension_numbers<[1], [0], [0], [1], [0, 0, 1, 1], [], []>} : vector<32x4xf32>, vector<4x64xf32>, vector<32x64xf32> -> vector<32x64xf32>
    %125 = arith.addf %121, %124 : vector<32x64xf32>
    %126 = vector.extract_strided_slice %125 {offsets = [0, 0], sizes = [32, 32], strides = [1, 1]} : vector<32x64xf32> to vector<32x32xf32>
    %127 = arith.negf %126 : vector<32x32xf32>
    %128 = math.exp %127 : vector<32x32xf32>
    %cst_54 = arith.constant 1.000000e+00 : f32
    %129 = vector.broadcast %cst_54 : f32 to vector<32x32xf32>
    %130 = arith.addf %129, %128 : vector<32x32xf32>
    %131 = arith.divf %129, %130 : vector<32x32xf32>
    %132 = vector.extract_strided_slice %125 {offsets = [0, 32], sizes = [32, 32], strides = [1, 1]} : vector<32x64xf32> to vector<32x32xf32>
    %133 = math.tanh %132 : vector<32x32xf32>
    %134 = arith.mulf %131, %133 : vector<32x32xf32>
    %cst_55 = arith.constant dense<0.000000e+00> : vector<32xf32>
    %135 = vector.multi_reduction <add>, %134, %cst_55 [0] : vector<32x32xf32> to vector<32xf32>
    %136 = vector.shape_cast %135 : vector<32xf32> to vector<1x32xf32>
    %cst_56 = arith.constant 3.125000e-02 : f32
    %137 = vector.broadcast %cst_56 : f32 to vector<1x32xf32>
    %138 = arith.mulf %136, %137 : vector<1x32xf32>
    %139 = vector.broadcast %138 : vector<1x32xf32> to vector<32x32xf32>
    %140 = arith.subf %134, %139 : vector<32x32xf32>
    %141 = arith.mulf %140, %140 : vector<32x32xf32>
    %cst_57 = arith.constant dense<0.000000e+00> : vector<32xf32>
    %142 = vector.multi_reduction <add>, %141, %cst_57 [0] : vector<32x32xf32> to vector<32xf32>
    %143 = vector.shape_cast %142 : vector<32xf32> to vector<1x32xf32>
    %cst_58 = arith.constant 3.125000e-02 : f32
    %144 = vector.broadcast %cst_58 : f32 to vector<1x32xf32>
    %145 = arith.mulf %143, %144 : vector<1x32xf32>
    %cst_59 = arith.constant 9.99999974E-6 : f32
    %146 = vector.broadcast %cst_59 : f32 to vector<1x32xf32>
    %147 = arith.addf %145, %146 : vector<1x32xf32>
    %148 = math.rsqrt %147 : vector<1x32xf32>
    %149 = vector.broadcast %148 : vector<1x32xf32> to vector<32x32xf32>
    %150 = arith.mulf %140, %149 : vector<32x32xf32>
    %cst_60 = arith.constant 0.000000e+00 : f32
    %151 = vector.broadcast %cst_60 : f32 to vector<32x64xf32>
    %c0_61 = arith.constant 0 : index
    %c0_62 = arith.constant 0 : index
    %152 = vector.load %arg6[%c0_61, %c0_62] : memref<1x64xf32, #tpu.memory_space<vmem>>, vector<1x64xf32>
    %153 = vector.broadcast %152 : vector<1x64xf32> to vector<32x64xf32>
    %154 = arith.addf %151, %153 : vector<32x64xf32>
    %c8_i32 = arith.constant 8 : i32
    %155 = tpu.dynamic_rotate %150 by %c8_i32 dim 0 : vector<32x32xf32>, i32 -> vector<32x32xf32>
    %156 = tpu.iota {dimensions = array<i32: 0>} : vector<32x1xi32>
    %c16_i32_63 = arith.constant 16 : i32
    %c0_i32_64 = arith.constant 0 : i32
    %157 = arith.cmpi eq, %c16_i32_63, %c0_i32_64 : i32
    %c1_i32_65 = arith.constant 1 : i32
    %158 = arith.select %157, %c1_i32_65, %c16_i32_63 : i32
    %159 = vector.broadcast %158 : i32 to vector<32x1xi32>
    %160 = arith.remsi %156, %159 : vector<32x1xi32>
    %c0_i32_66 = arith.constant 0 : i32
    %161 = vector.broadcast %c0_i32_66 : i32 to vector<32x1xi32>
    %162 = arith.cmpi ne, %160, %161 : vector<32x1xi32>
    %c0_i32_67 = arith.constant 0 : i32
    %163 = vector.broadcast %c0_i32_67 : i32 to vector<32x1xi32>
    %164 = arith.cmpi slt, %160, %163 : vector<32x1xi32>
    %c0_i32_68 = arith.constant 0 : i32
    %165 = arith.cmpi slt, %158, %c0_i32_68 : i32
    %166 = vector.broadcast %165 : i1 to vector<32x1xi1>
    %167 = vector.broadcast %166 : vector<32x1xi1> to vector<32x1xi1>
    %168 = arith.xori %164, %167 : vector<32x1xi1>
    %169 = arith.andi %168, %162 : vector<32x1xi1>
    %170 = vector.broadcast %158 : i32 to vector<32x1xi32>
    %171 = arith.addi %160, %170 : vector<32x1xi32>
    %172 = arith.select %169, %171, %160 : vector<32x1xi1>, vector<32x1xi32>
    %c8_i32_69 = arith.constant 8 : i32
    %173 = vector.broadcast %c8_i32_69 : i32 to vector<32x1xi32>
    %174 = arith.cmpi sge, %172, %173 : vector<32x1xi32>
    %cst_70 = arith.constant 0.000000e+00 : f32
    %175 = vector.shape_cast %174 : vector<32x1xi1> to vector<32x1xi1>
    %176 = vector.broadcast %175 : vector<32x1xi1> to vector<32x32xi1>
    %177 = vector.broadcast %cst_70 : f32 to vector<32x32xf32>
    %178 = arith.select %176, %155, %177 : vector<32x32xi1>, vector<32x32xf32>
    %c0_71 = arith.constant 0 : index
    %c0_72 = arith.constant 0 : index
    %c0_73 = arith.constant 0 : index
    %179 = vector.load %arg5[%c0_71, %c0_72, %c0_73] : memref<5x32x64xf32, #tpu.memory_space<vmem>>, vector<1x32x64xf32>
    %180 = vector.shape_cast %179 : vector<1x32x64xf32> to vector<32x64xf32>
    %cst_74 = arith.constant dense<0.000000e+00> : vector<32x64xf32>
    %181 = tpu.matmul %178, %180, %cst_74 {dimension_numbers = #tpu.dot_dimension_numbers<[1], [0], [0], [1], [0, 0, 1, 1], [], []>} : vector<32x32xf32>, vector<32x64xf32>, vector<32x64xf32> -> vector<32x64xf32>
    %182 = arith.addf %154, %181 : vector<32x64xf32>
    %c6_i32 = arith.constant 6 : i32
    %183 = tpu.dynamic_rotate %150 by %c6_i32 dim 0 : vector<32x32xf32>, i32 -> vector<32x32xf32>
    %184 = tpu.iota {dimensions = array<i32: 0>} : vector<32x1xi32>
    %c16_i32_75 = arith.constant 16 : i32
    %c0_i32_76 = arith.constant 0 : i32
    %185 = arith.cmpi eq, %c16_i32_75, %c0_i32_76 : i32
    %c1_i32_77 = arith.constant 1 : i32
    %186 = arith.select %185, %c1_i32_77, %c16_i32_75 : i32
    %187 = vector.broadcast %186 : i32 to vector<32x1xi32>
    %188 = arith.remsi %184, %187 : vector<32x1xi32>
    %c0_i32_78 = arith.constant 0 : i32
    %189 = vector.broadcast %c0_i32_78 : i32 to vector<32x1xi32>
    %190 = arith.cmpi ne, %188, %189 : vector<32x1xi32>
    %c0_i32_79 = arith.constant 0 : i32
    %191 = vector.broadcast %c0_i32_79 : i32 to vector<32x1xi32>
    %192 = arith.cmpi slt, %188, %191 : vector<32x1xi32>
    %c0_i32_80 = arith.constant 0 : i32
    %193 = arith.cmpi slt, %186, %c0_i32_80 : i32
    %194 = vector.broadcast %193 : i1 to vector<32x1xi1>
    %195 = vector.broadcast %194 : vector<32x1xi1> to vector<32x1xi1>
    %196 = arith.xori %192, %195 : vector<32x1xi1>
    %197 = arith.andi %196, %190 : vector<32x1xi1>
    %198 = vector.broadcast %186 : i32 to vector<32x1xi32>
    %199 = arith.addi %188, %198 : vector<32x1xi32>
    %200 = arith.select %197, %199, %188 : vector<32x1xi1>, vector<32x1xi32>
    %c6_i32_81 = arith.constant 6 : i32
    %201 = vector.broadcast %c6_i32_81 : i32 to vector<32x1xi32>
    %202 = arith.cmpi sge, %200, %201 : vector<32x1xi32>
    %cst_82 = arith.constant 0.000000e+00 : f32
    %203 = vector.shape_cast %202 : vector<32x1xi1> to vector<32x1xi1>
    %204 = vector.broadcast %203 : vector<32x1xi1> to vector<32x32xi1>
    %205 = vector.broadcast %cst_82 : f32 to vector<32x32xf32>
    %206 = arith.select %204, %183, %205 : vector<32x32xi1>, vector<32x32xf32>
    %c1_83 = arith.constant 1 : index
    %c0_84 = arith.constant 0 : index
    %c0_85 = arith.constant 0 : index
    %207 = vector.load %arg5[%c1_83, %c0_84, %c0_85] : memref<5x32x64xf32, #tpu.memory_space<vmem>>, vector<1x32x64xf32>
    %208 = vector.shape_cast %207 : vector<1x32x64xf32> to vector<32x64xf32>
    %cst_86 = arith.constant dense<0.000000e+00> : vector<32x64xf32>
    %209 = tpu.matmul %206, %208, %cst_86 {dimension_numbers = #tpu.dot_dimension_numbers<[1], [0], [0], [1], [0, 0, 1, 1], [], []>} : vector<32x32xf32>, vector<32x64xf32>, vector<32x64xf32> -> vector<32x64xf32>
    %210 = arith.addf %182, %209 : vector<32x64xf32>
    %c4_i32_87 = arith.constant 4 : i32
    %211 = tpu.dynamic_rotate %150 by %c4_i32_87 dim 0 : vector<32x32xf32>, i32 -> vector<32x32xf32>
    %212 = tpu.iota {dimensions = array<i32: 0>} : vector<32x1xi32>
    %c16_i32_88 = arith.constant 16 : i32
    %c0_i32_89 = arith.constant 0 : i32
    %213 = arith.cmpi eq, %c16_i32_88, %c0_i32_89 : i32
    %c1_i32_90 = arith.constant 1 : i32
    %214 = arith.select %213, %c1_i32_90, %c16_i32_88 : i32
    %215 = vector.broadcast %214 : i32 to vector<32x1xi32>
    %216 = arith.remsi %212, %215 : vector<32x1xi32>
    %c0_i32_91 = arith.constant 0 : i32
    %217 = vector.broadcast %c0_i32_91 : i32 to vector<32x1xi32>
    %218 = arith.cmpi ne, %216, %217 : vector<32x1xi32>
    %c0_i32_92 = arith.constant 0 : i32
    %219 = vector.broadcast %c0_i32_92 : i32 to vector<32x1xi32>
    %220 = arith.cmpi slt, %216, %219 : vector<32x1xi32>
    %c0_i32_93 = arith.constant 0 : i32
    %221 = arith.cmpi slt, %214, %c0_i32_93 : i32
    %222 = vector.broadcast %221 : i1 to vector<32x1xi1>
    %223 = vector.broadcast %222 : vector<32x1xi1> to vector<32x1xi1>
    %224 = arith.xori %220, %223 : vector<32x1xi1>
    %225 = arith.andi %224, %218 : vector<32x1xi1>
    %226 = vector.broadcast %214 : i32 to vector<32x1xi32>
    %227 = arith.addi %216, %226 : vector<32x1xi32>
    %228 = arith.select %225, %227, %216 : vector<32x1xi1>, vector<32x1xi32>
    %c4_i32_94 = arith.constant 4 : i32
    %229 = vector.broadcast %c4_i32_94 : i32 to vector<32x1xi32>
    %230 = arith.cmpi sge, %228, %229 : vector<32x1xi32>
    %cst_95 = arith.constant 0.000000e+00 : f32
    %231 = vector.shape_cast %230 : vector<32x1xi1> to vector<32x1xi1>
    %232 = vector.broadcast %231 : vector<32x1xi1> to vector<32x32xi1>
    %233 = vector.broadcast %cst_95 : f32 to vector<32x32xf32>
    %234 = arith.select %232, %211, %233 : vector<32x32xi1>, vector<32x32xf32>
    %c2_96 = arith.constant 2 : index
    %c0_97 = arith.constant 0 : index
    %c0_98 = arith.constant 0 : index
    %235 = vector.load %arg5[%c2_96, %c0_97, %c0_98] : memref<5x32x64xf32, #tpu.memory_space<vmem>>, vector<1x32x64xf32>
    %236 = vector.shape_cast %235 : vector<1x32x64xf32> to vector<32x64xf32>
    %cst_99 = arith.constant dense<0.000000e+00> : vector<32x64xf32>
    %237 = tpu.matmul %234, %236, %cst_99 {dimension_numbers = #tpu.dot_dimension_numbers<[1], [0], [0], [1], [0, 0, 1, 1], [], []>} : vector<32x32xf32>, vector<32x64xf32>, vector<32x64xf32> -> vector<32x64xf32>
    %238 = arith.addf %210, %237 : vector<32x64xf32>
    %c2_i32_100 = arith.constant 2 : i32
    %239 = tpu.dynamic_rotate %150 by %c2_i32_100 dim 0 : vector<32x32xf32>, i32 -> vector<32x32xf32>
    %240 = tpu.iota {dimensions = array<i32: 0>} : vector<32x1xi32>
    %c16_i32_101 = arith.constant 16 : i32
    %c0_i32_102 = arith.constant 0 : i32
    %241 = arith.cmpi eq, %c16_i32_101, %c0_i32_102 : i32
    %c1_i32_103 = arith.constant 1 : i32
    %242 = arith.select %241, %c1_i32_103, %c16_i32_101 : i32
    %243 = vector.broadcast %242 : i32 to vector<32x1xi32>
    %244 = arith.remsi %240, %243 : vector<32x1xi32>
    %c0_i32_104 = arith.constant 0 : i32
    %245 = vector.broadcast %c0_i32_104 : i32 to vector<32x1xi32>
    %246 = arith.cmpi ne, %244, %245 : vector<32x1xi32>
    %c0_i32_105 = arith.constant 0 : i32
    %247 = vector.broadcast %c0_i32_105 : i32 to vector<32x1xi32>
    %248 = arith.cmpi slt, %244, %247 : vector<32x1xi32>
    %c0_i32_106 = arith.constant 0 : i32
    %249 = arith.cmpi slt, %242, %c0_i32_106 : i32
    %250 = vector.broadcast %249 : i1 to vector<32x1xi1>
    %251 = vector.broadcast %250 : vector<32x1xi1> to vector<32x1xi1>
    %252 = arith.xori %248, %251 : vector<32x1xi1>
    %253 = arith.andi %252, %246 : vector<32x1xi1>
    %254 = vector.broadcast %242 : i32 to vector<32x1xi32>
    %255 = arith.addi %244, %254 : vector<32x1xi32>
    %256 = arith.select %253, %255, %244 : vector<32x1xi1>, vector<32x1xi32>
    %c2_i32_107 = arith.constant 2 : i32
    %257 = vector.broadcast %c2_i32_107 : i32 to vector<32x1xi32>
    %258 = arith.cmpi sge, %256, %257 : vector<32x1xi32>
    %cst_108 = arith.constant 0.000000e+00 : f32
    %259 = vector.shape_cast %258 : vector<32x1xi1> to vector<32x1xi1>
    %260 = vector.broadcast %259 : vector<32x1xi1> to vector<32x32xi1>
    %261 = vector.broadcast %cst_108 : f32 to vector<32x32xf32>
    %262 = arith.select %260, %239, %261 : vector<32x32xi1>, vector<32x32xf32>
    %c3_109 = arith.constant 3 : index
    %c0_110 = arith.constant 0 : index
    %c0_111 = arith.constant 0 : index
    %263 = vector.load %arg5[%c3_109, %c0_110, %c0_111] : memref<5x32x64xf32, #tpu.memory_space<vmem>>, vector<1x32x64xf32>
    %264 = vector.shape_cast %263 : vector<1x32x64xf32> to vector<32x64xf32>
    %cst_112 = arith.constant dense<0.000000e+00> : vector<32x64xf32>
    %265 = tpu.matmul %262, %264, %cst_112 {dimension_numbers = #tpu.dot_dimension_numbers<[1], [0], [0], [1], [0, 0, 1, 1], [], []>} : vector<32x32xf32>, vector<32x64xf32>, vector<32x64xf32> -> vector<32x64xf32>
    %266 = arith.addf %238, %265 : vector<32x64xf32>
    %c4_113 = arith.constant 4 : index
    %c0_114 = arith.constant 0 : index
    %c0_115 = arith.constant 0 : index
    %267 = vector.load %arg5[%c4_113, %c0_114, %c0_115] : memref<5x32x64xf32, #tpu.memory_space<vmem>>, vector<1x32x64xf32>
    %268 = vector.shape_cast %267 : vector<1x32x64xf32> to vector<32x64xf32>
    %cst_116 = arith.constant dense<0.000000e+00> : vector<32x64xf32>
    %269 = tpu.matmul %150, %268, %cst_116 {dimension_numbers = #tpu.dot_dimension_numbers<[1], [0], [0], [1], [0, 0, 1, 1], [], []>} : vector<32x32xf32>, vector<32x64xf32>, vector<32x64xf32> -> vector<32x64xf32>
    %270 = arith.addf %266, %269 : vector<32x64xf32>
    %271 = vector.extract_strided_slice %270 {offsets = [0, 0], sizes = [32, 32], strides = [1, 1]} : vector<32x64xf32> to vector<32x32xf32>
    %272 = arith.negf %271 : vector<32x32xf32>
    %273 = math.exp %272 : vector<32x32xf32>
    %cst_117 = arith.constant 1.000000e+00 : f32
    %274 = vector.broadcast %cst_117 : f32 to vector<32x32xf32>
    %275 = arith.addf %274, %273 : vector<32x32xf32>
    %276 = arith.divf %274, %275 : vector<32x32xf32>
    %277 = vector.extract_strided_slice %270 {offsets = [0, 32], sizes = [32, 32], strides = [1, 1]} : vector<32x64xf32> to vector<32x32xf32>
    %278 = math.tanh %277 : vector<32x32xf32>
    %279 = arith.mulf %276, %278 : vector<32x32xf32>
    %cst_118 = arith.constant dense<0.000000e+00> : vector<32xf32>
    %280 = vector.multi_reduction <add>, %279, %cst_118 [0] : vector<32x32xf32> to vector<32xf32>
    %281 = vector.shape_cast %280 : vector<32xf32> to vector<1x32xf32>
    %cst_119 = arith.constant 3.125000e-02 : f32
    %282 = vector.broadcast %cst_119 : f32 to vector<1x32xf32>
    %283 = arith.mulf %281, %282 : vector<1x32xf32>
    %284 = vector.broadcast %283 : vector<1x32xf32> to vector<32x32xf32>
    %285 = arith.subf %279, %284 : vector<32x32xf32>
    %286 = arith.mulf %285, %285 : vector<32x32xf32>
    %cst_120 = arith.constant dense<0.000000e+00> : vector<32xf32>
    %287 = vector.multi_reduction <add>, %286, %cst_120 [0] : vector<32x32xf32> to vector<32xf32>
    %288 = vector.shape_cast %287 : vector<32xf32> to vector<1x32xf32>
    %cst_121 = arith.constant 3.125000e-02 : f32
    %289 = vector.broadcast %cst_121 : f32 to vector<1x32xf32>
    %290 = arith.mulf %288, %289 : vector<1x32xf32>
    %cst_122 = arith.constant 9.99999974E-6 : f32
    %291 = vector.broadcast %cst_122 : f32 to vector<1x32xf32>
    %292 = arith.addf %290, %291 : vector<1x32xf32>
    %293 = math.rsqrt %292 : vector<1x32xf32>
    %294 = vector.broadcast %293 : vector<1x32xf32> to vector<32x32xf32>
    %295 = arith.mulf %285, %294 : vector<32x32xf32>
    %296 = arith.addf %295, %5 : vector<32x32xf32>
    %c0_123 = arith.constant 0 : index
    %c0_124 = arith.constant 0 : index
    %297 = vector.load %arg7[%c0_123, %c0_124] : memref<32x32xf32, #tpu.memory_space<vmem>>, vector<32x32xf32>
    %cst_125 = arith.constant dense<0.000000e+00> : vector<32x32xf32>
    %298 = tpu.matmul %296, %297, %cst_125 {dimension_numbers = #tpu.dot_dimension_numbers<[1], [0], [0], [1], [0, 0, 1, 1], [], []>} : vector<32x32xf32>, vector<32x32xf32>, vector<32x32xf32> -> vector<32x32xf32>
    %c0_126 = arith.constant 0 : index
    %c0_127 = arith.constant 0 : index
    %299 = vector.load %arg8[%c0_126, %c0_127] : memref<1x32xf32, #tpu.memory_space<vmem>>, vector<1x32xf32>
    %300 = vector.broadcast %299 : vector<1x32xf32> to vector<32x32xf32>
    %301 = arith.addf %298, %300 : vector<32x32xf32>
    %cst_128 = arith.constant 0.000000e+00 : f32
    %302 = vector.broadcast %cst_128 : f32 to vector<32x64xf32>
    %c0_129 = arith.constant 0 : index
    %c0_130 = arith.constant 0 : index
    %303 = vector.load %arg10[%c0_129, %c0_130] : memref<1x64xf32, #tpu.memory_space<vmem>>, vector<1x64xf32>
    %304 = vector.broadcast %303 : vector<1x64xf32> to vector<32x64xf32>
    %305 = arith.addf %302, %304 : vector<32x64xf32>
    %c12_i32 = arith.constant 12 : i32
    %306 = tpu.dynamic_rotate %296 by %c12_i32 dim 0 : vector<32x32xf32>, i32 -> vector<32x32xf32>
    %307 = tpu.iota {dimensions = array<i32: 0>} : vector<32x1xi32>
    %c16_i32_131 = arith.constant 16 : i32
    %c0_i32_132 = arith.constant 0 : i32
    %308 = arith.cmpi eq, %c16_i32_131, %c0_i32_132 : i32
    %c1_i32_133 = arith.constant 1 : i32
    %309 = arith.select %308, %c1_i32_133, %c16_i32_131 : i32
    %310 = vector.broadcast %309 : i32 to vector<32x1xi32>
    %311 = arith.remsi %307, %310 : vector<32x1xi32>
    %c0_i32_134 = arith.constant 0 : i32
    %312 = vector.broadcast %c0_i32_134 : i32 to vector<32x1xi32>
    %313 = arith.cmpi ne, %311, %312 : vector<32x1xi32>
    %c0_i32_135 = arith.constant 0 : i32
    %314 = vector.broadcast %c0_i32_135 : i32 to vector<32x1xi32>
    %315 = arith.cmpi slt, %311, %314 : vector<32x1xi32>
    %c0_i32_136 = arith.constant 0 : i32
    %316 = arith.cmpi slt, %309, %c0_i32_136 : i32
    %317 = vector.broadcast %316 : i1 to vector<32x1xi1>
    %318 = vector.broadcast %317 : vector<32x1xi1> to vector<32x1xi1>
    %319 = arith.xori %315, %318 : vector<32x1xi1>
    %320 = arith.andi %319, %313 : vector<32x1xi1>
    %321 = vector.broadcast %309 : i32 to vector<32x1xi32>
    %322 = arith.addi %311, %321 : vector<32x1xi32>
    %323 = arith.select %320, %322, %311 : vector<32x1xi1>, vector<32x1xi32>
    %c12_i32_137 = arith.constant 12 : i32
    %324 = vector.broadcast %c12_i32_137 : i32 to vector<32x1xi32>
    %325 = arith.cmpi sge, %323, %324 : vector<32x1xi32>
    %cst_138 = arith.constant 0.000000e+00 : f32
    %326 = vector.shape_cast %325 : vector<32x1xi1> to vector<32x1xi1>
    %327 = vector.broadcast %326 : vector<32x1xi1> to vector<32x32xi1>
    %328 = vector.broadcast %cst_138 : f32 to vector<32x32xf32>
    %329 = arith.select %327, %306, %328 : vector<32x32xi1>, vector<32x32xf32>
    %c1_139 = arith.constant 1 : index
    %c0_140 = arith.constant 0 : index
    %c0_141 = arith.constant 0 : index
    %330 = vector.load %arg9[%c1_139, %c0_140, %c0_141] : memref<5x32x64xf32, #tpu.memory_space<vmem>>, vector<1x32x64xf32>
    %331 = vector.shape_cast %330 : vector<1x32x64xf32> to vector<32x64xf32>
    %cst_142 = arith.constant dense<0.000000e+00> : vector<32x64xf32>
    %332 = tpu.matmul %329, %331, %cst_142 {dimension_numbers = #tpu.dot_dimension_numbers<[1], [0], [0], [1], [0, 0, 1, 1], [], []>} : vector<32x32xf32>, vector<32x64xf32>, vector<32x64xf32> -> vector<32x64xf32>
    %333 = arith.addf %305, %332 : vector<32x64xf32>
    %c8_i32_143 = arith.constant 8 : i32
    %334 = tpu.dynamic_rotate %296 by %c8_i32_143 dim 0 : vector<32x32xf32>, i32 -> vector<32x32xf32>
    %335 = tpu.iota {dimensions = array<i32: 0>} : vector<32x1xi32>
    %c16_i32_144 = arith.constant 16 : i32
    %c0_i32_145 = arith.constant 0 : i32
    %336 = arith.cmpi eq, %c16_i32_144, %c0_i32_145 : i32
    %c1_i32_146 = arith.constant 1 : i32
    %337 = arith.select %336, %c1_i32_146, %c16_i32_144 : i32
    %338 = vector.broadcast %337 : i32 to vector<32x1xi32>
    %339 = arith.remsi %335, %338 : vector<32x1xi32>
    %c0_i32_147 = arith.constant 0 : i32
    %340 = vector.broadcast %c0_i32_147 : i32 to vector<32x1xi32>
    %341 = arith.cmpi ne, %339, %340 : vector<32x1xi32>
    %c0_i32_148 = arith.constant 0 : i32
    %342 = vector.broadcast %c0_i32_148 : i32 to vector<32x1xi32>
    %343 = arith.cmpi slt, %339, %342 : vector<32x1xi32>
    %c0_i32_149 = arith.constant 0 : i32
    %344 = arith.cmpi slt, %337, %c0_i32_149 : i32
    %345 = vector.broadcast %344 : i1 to vector<32x1xi1>
    %346 = vector.broadcast %345 : vector<32x1xi1> to vector<32x1xi1>
    %347 = arith.xori %343, %346 : vector<32x1xi1>
    %348 = arith.andi %347, %341 : vector<32x1xi1>
    %349 = vector.broadcast %337 : i32 to vector<32x1xi32>
    %350 = arith.addi %339, %349 : vector<32x1xi32>
    %351 = arith.select %348, %350, %339 : vector<32x1xi1>, vector<32x1xi32>
    %c8_i32_150 = arith.constant 8 : i32
    %352 = vector.broadcast %c8_i32_150 : i32 to vector<32x1xi32>
    %353 = arith.cmpi sge, %351, %352 : vector<32x1xi32>
    %cst_151 = arith.constant 0.000000e+00 : f32
    %354 = vector.shape_cast %353 : vector<32x1xi1> to vector<32x1xi1>
    %355 = vector.broadcast %354 : vector<32x1xi1> to vector<32x32xi1>
    %356 = vector.broadcast %cst_151 : f32 to vector<32x32xf32>
    %357 = arith.select %355, %334, %356 : vector<32x32xi1>, vector<32x32xf32>
    %c2_152 = arith.constant 2 : index
    %c0_153 = arith.constant 0 : index
    %c0_154 = arith.constant 0 : index
    %358 = vector.load %arg9[%c2_152, %c0_153, %c0_154] : memref<5x32x64xf32, #tpu.memory_space<vmem>>, vector<1x32x64xf32>
    %359 = vector.shape_cast %358 : vector<1x32x64xf32> to vector<32x64xf32>
    %cst_155 = arith.constant dense<0.000000e+00> : vector<32x64xf32>
    %360 = tpu.matmul %357, %359, %cst_155 {dimension_numbers = #tpu.dot_dimension_numbers<[1], [0], [0], [1], [0, 0, 1, 1], [], []>} : vector<32x32xf32>, vector<32x64xf32>, vector<32x64xf32> -> vector<32x64xf32>
    %361 = arith.addf %333, %360 : vector<32x64xf32>
    %c4_i32_156 = arith.constant 4 : i32
    %362 = tpu.dynamic_rotate %296 by %c4_i32_156 dim 0 : vector<32x32xf32>, i32 -> vector<32x32xf32>
    %363 = tpu.iota {dimensions = array<i32: 0>} : vector<32x1xi32>
    %c16_i32_157 = arith.constant 16 : i32
    %c0_i32_158 = arith.constant 0 : i32
    %364 = arith.cmpi eq, %c16_i32_157, %c0_i32_158 : i32
    %c1_i32_159 = arith.constant 1 : i32
    %365 = arith.select %364, %c1_i32_159, %c16_i32_157 : i32
    %366 = vector.broadcast %365 : i32 to vector<32x1xi32>
    %367 = arith.remsi %363, %366 : vector<32x1xi32>
    %c0_i32_160 = arith.constant 0 : i32
    %368 = vector.broadcast %c0_i32_160 : i32 to vector<32x1xi32>
    %369 = arith.cmpi ne, %367, %368 : vector<32x1xi32>
    %c0_i32_161 = arith.constant 0 : i32
    %370 = vector.broadcast %c0_i32_161 : i32 to vector<32x1xi32>
    %371 = arith.cmpi slt, %367, %370 : vector<32x1xi32>
    %c0_i32_162 = arith.constant 0 : i32
    %372 = arith.cmpi slt, %365, %c0_i32_162 : i32
    %373 = vector.broadcast %372 : i1 to vector<32x1xi1>
    %374 = vector.broadcast %373 : vector<32x1xi1> to vector<32x1xi1>
    %375 = arith.xori %371, %374 : vector<32x1xi1>
    %376 = arith.andi %375, %369 : vector<32x1xi1>
    %377 = vector.broadcast %365 : i32 to vector<32x1xi32>
    %378 = arith.addi %367, %377 : vector<32x1xi32>
    %379 = arith.select %376, %378, %367 : vector<32x1xi1>, vector<32x1xi32>
    %c4_i32_163 = arith.constant 4 : i32
    %380 = vector.broadcast %c4_i32_163 : i32 to vector<32x1xi32>
    %381 = arith.cmpi sge, %379, %380 : vector<32x1xi32>
    %cst_164 = arith.constant 0.000000e+00 : f32
    %382 = vector.shape_cast %381 : vector<32x1xi1> to vector<32x1xi1>
    %383 = vector.broadcast %382 : vector<32x1xi1> to vector<32x32xi1>
    %384 = vector.broadcast %cst_164 : f32 to vector<32x32xf32>
    %385 = arith.select %383, %362, %384 : vector<32x32xi1>, vector<32x32xf32>
    %c3_165 = arith.constant 3 : index
    %c0_166 = arith.constant 0 : index
    %c0_167 = arith.constant 0 : index
    %386 = vector.load %arg9[%c3_165, %c0_166, %c0_167] : memref<5x32x64xf32, #tpu.memory_space<vmem>>, vector<1x32x64xf32>
    %387 = vector.shape_cast %386 : vector<1x32x64xf32> to vector<32x64xf32>
    %cst_168 = arith.constant dense<0.000000e+00> : vector<32x64xf32>
    %388 = tpu.matmul %385, %387, %cst_168 {dimension_numbers = #tpu.dot_dimension_numbers<[1], [0], [0], [1], [0, 0, 1, 1], [], []>} : vector<32x32xf32>, vector<32x64xf32>, vector<32x64xf32> -> vector<32x64xf32>
    %389 = arith.addf %361, %388 : vector<32x64xf32>
    %c4_169 = arith.constant 4 : index
    %c0_170 = arith.constant 0 : index
    %c0_171 = arith.constant 0 : index
    %390 = vector.load %arg9[%c4_169, %c0_170, %c0_171] : memref<5x32x64xf32, #tpu.memory_space<vmem>>, vector<1x32x64xf32>
    %391 = vector.shape_cast %390 : vector<1x32x64xf32> to vector<32x64xf32>
    %cst_172 = arith.constant dense<0.000000e+00> : vector<32x64xf32>
    %392 = tpu.matmul %296, %391, %cst_172 {dimension_numbers = #tpu.dot_dimension_numbers<[1], [0], [0], [1], [0, 0, 1, 1], [], []>} : vector<32x32xf32>, vector<32x64xf32>, vector<32x64xf32> -> vector<32x64xf32>
    %393 = arith.addf %389, %392 : vector<32x64xf32>
    %394 = vector.extract_strided_slice %393 {offsets = [0, 0], sizes = [32, 32], strides = [1, 1]} : vector<32x64xf32> to vector<32x32xf32>
    %395 = arith.negf %394 : vector<32x32xf32>
    %396 = math.exp %395 : vector<32x32xf32>
    %cst_173 = arith.constant 1.000000e+00 : f32
    %397 = vector.broadcast %cst_173 : f32 to vector<32x32xf32>
    %398 = arith.addf %397, %396 : vector<32x32xf32>
    %399 = arith.divf %397, %398 : vector<32x32xf32>
    %400 = vector.extract_strided_slice %393 {offsets = [0, 32], sizes = [32, 32], strides = [1, 1]} : vector<32x64xf32> to vector<32x32xf32>
    %401 = math.tanh %400 : vector<32x32xf32>
    %402 = arith.mulf %399, %401 : vector<32x32xf32>
    %cst_174 = arith.constant dense<0.000000e+00> : vector<32xf32>
    %403 = vector.multi_reduction <add>, %402, %cst_174 [0] : vector<32x32xf32> to vector<32xf32>
    %404 = vector.shape_cast %403 : vector<32xf32> to vector<1x32xf32>
    %cst_175 = arith.constant 3.125000e-02 : f32
    %405 = vector.broadcast %cst_175 : f32 to vector<1x32xf32>
    %406 = arith.mulf %404, %405 : vector<1x32xf32>
    %407 = vector.broadcast %406 : vector<1x32xf32> to vector<32x32xf32>
    %408 = arith.subf %402, %407 : vector<32x32xf32>
    %409 = arith.mulf %408, %408 : vector<32x32xf32>
    %cst_176 = arith.constant dense<0.000000e+00> : vector<32xf32>
    %410 = vector.multi_reduction <add>, %409, %cst_176 [0] : vector<32x32xf32> to vector<32xf32>
    %411 = vector.shape_cast %410 : vector<32xf32> to vector<1x32xf32>
    %cst_177 = arith.constant 3.125000e-02 : f32
    %412 = vector.broadcast %cst_177 : f32 to vector<1x32xf32>
    %413 = arith.mulf %411, %412 : vector<1x32xf32>
    %cst_178 = arith.constant 9.99999974E-6 : f32
    %414 = vector.broadcast %cst_178 : f32 to vector<1x32xf32>
    %415 = arith.addf %413, %414 : vector<1x32xf32>
    %416 = math.rsqrt %415 : vector<1x32xf32>
    %417 = vector.broadcast %416 : vector<1x32xf32> to vector<32x32xf32>
    %418 = arith.mulf %408, %417 : vector<32x32xf32>
    %cst_179 = arith.constant 0.000000e+00 : f32
    %419 = vector.broadcast %cst_179 : f32 to vector<32x64xf32>
    %c0_180 = arith.constant 0 : index
    %c0_181 = arith.constant 0 : index
    %420 = vector.load %arg12[%c0_180, %c0_181] : memref<1x64xf32, #tpu.memory_space<vmem>>, vector<1x64xf32>
    %421 = vector.broadcast %420 : vector<1x64xf32> to vector<32x64xf32>
    %422 = arith.addf %419, %421 : vector<32x64xf32>
    %c8_i32_182 = arith.constant 8 : i32
    %423 = tpu.dynamic_rotate %418 by %c8_i32_182 dim 0 : vector<32x32xf32>, i32 -> vector<32x32xf32>
    %424 = tpu.iota {dimensions = array<i32: 0>} : vector<32x1xi32>
    %c16_i32_183 = arith.constant 16 : i32
    %c0_i32_184 = arith.constant 0 : i32
    %425 = arith.cmpi eq, %c16_i32_183, %c0_i32_184 : i32
    %c1_i32_185 = arith.constant 1 : i32
    %426 = arith.select %425, %c1_i32_185, %c16_i32_183 : i32
    %427 = vector.broadcast %426 : i32 to vector<32x1xi32>
    %428 = arith.remsi %424, %427 : vector<32x1xi32>
    %c0_i32_186 = arith.constant 0 : i32
    %429 = vector.broadcast %c0_i32_186 : i32 to vector<32x1xi32>
    %430 = arith.cmpi ne, %428, %429 : vector<32x1xi32>
    %c0_i32_187 = arith.constant 0 : i32
    %431 = vector.broadcast %c0_i32_187 : i32 to vector<32x1xi32>
    %432 = arith.cmpi slt, %428, %431 : vector<32x1xi32>
    %c0_i32_188 = arith.constant 0 : i32
    %433 = arith.cmpi slt, %426, %c0_i32_188 : i32
    %434 = vector.broadcast %433 : i1 to vector<32x1xi1>
    %435 = vector.broadcast %434 : vector<32x1xi1> to vector<32x1xi1>
    %436 = arith.xori %432, %435 : vector<32x1xi1>
    %437 = arith.andi %436, %430 : vector<32x1xi1>
    %438 = vector.broadcast %426 : i32 to vector<32x1xi32>
    %439 = arith.addi %428, %438 : vector<32x1xi32>
    %440 = arith.select %437, %439, %428 : vector<32x1xi1>, vector<32x1xi32>
    %c8_i32_189 = arith.constant 8 : i32
    %441 = vector.broadcast %c8_i32_189 : i32 to vector<32x1xi32>
    %442 = arith.cmpi sge, %440, %441 : vector<32x1xi32>
    %cst_190 = arith.constant 0.000000e+00 : f32
    %443 = vector.shape_cast %442 : vector<32x1xi1> to vector<32x1xi1>
    %444 = vector.broadcast %443 : vector<32x1xi1> to vector<32x32xi1>
    %445 = vector.broadcast %cst_190 : f32 to vector<32x32xf32>
    %446 = arith.select %444, %423, %445 : vector<32x32xi1>, vector<32x32xf32>
    %c3_191 = arith.constant 3 : index
    %c0_192 = arith.constant 0 : index
    %c0_193 = arith.constant 0 : index
    %447 = vector.load %arg11[%c3_191, %c0_192, %c0_193] : memref<5x32x64xf32, #tpu.memory_space<vmem>>, vector<1x32x64xf32>
    %448 = vector.shape_cast %447 : vector<1x32x64xf32> to vector<32x64xf32>
    %cst_194 = arith.constant dense<0.000000e+00> : vector<32x64xf32>
    %449 = tpu.matmul %446, %448, %cst_194 {dimension_numbers = #tpu.dot_dimension_numbers<[1], [0], [0], [1], [0, 0, 1, 1], [], []>} : vector<32x32xf32>, vector<32x64xf32>, vector<32x64xf32> -> vector<32x64xf32>
    %450 = arith.addf %422, %449 : vector<32x64xf32>
    %c4_195 = arith.constant 4 : index
    %c0_196 = arith.constant 0 : index
    %c0_197 = arith.constant 0 : index
    %451 = vector.load %arg11[%c4_195, %c0_196, %c0_197] : memref<5x32x64xf32, #tpu.memory_space<vmem>>, vector<1x32x64xf32>
    %452 = vector.shape_cast %451 : vector<1x32x64xf32> to vector<32x64xf32>
    %cst_198 = arith.constant dense<0.000000e+00> : vector<32x64xf32>
    %453 = tpu.matmul %418, %452, %cst_198 {dimension_numbers = #tpu.dot_dimension_numbers<[1], [0], [0], [1], [0, 0, 1, 1], [], []>} : vector<32x32xf32>, vector<32x64xf32>, vector<32x64xf32> -> vector<32x64xf32>
    %454 = arith.addf %450, %453 : vector<32x64xf32>
    %455 = vector.extract_strided_slice %454 {offsets = [0, 0], sizes = [32, 32], strides = [1, 1]} : vector<32x64xf32> to vector<32x32xf32>
    %456 = arith.negf %455 : vector<32x32xf32>
    %457 = math.exp %456 : vector<32x32xf32>
    %cst_199 = arith.constant 1.000000e+00 : f32
    %458 = vector.broadcast %cst_199 : f32 to vector<32x32xf32>
    %459 = arith.addf %458, %457 : vector<32x32xf32>
    %460 = arith.divf %458, %459 : vector<32x32xf32>
    %461 = vector.extract_strided_slice %454 {offsets = [0, 32], sizes = [32, 32], strides = [1, 1]} : vector<32x64xf32> to vector<32x32xf32>
    %462 = math.tanh %461 : vector<32x32xf32>
    %463 = arith.mulf %460, %462 : vector<32x32xf32>
    %cst_200 = arith.constant dense<0.000000e+00> : vector<32xf32>
    %464 = vector.multi_reduction <add>, %463, %cst_200 [0] : vector<32x32xf32> to vector<32xf32>
    %465 = vector.shape_cast %464 : vector<32xf32> to vector<1x32xf32>
    %cst_201 = arith.constant 3.125000e-02 : f32
    %466 = vector.broadcast %cst_201 : f32 to vector<1x32xf32>
    %467 = arith.mulf %465, %466 : vector<1x32xf32>
    %468 = vector.broadcast %467 : vector<1x32xf32> to vector<32x32xf32>
    %469 = arith.subf %463, %468 : vector<32x32xf32>
    %470 = arith.mulf %469, %469 : vector<32x32xf32>
    %cst_202 = arith.constant dense<0.000000e+00> : vector<32xf32>
    %471 = vector.multi_reduction <add>, %470, %cst_202 [0] : vector<32x32xf32> to vector<32xf32>
    %472 = vector.shape_cast %471 : vector<32xf32> to vector<1x32xf32>
    %cst_203 = arith.constant 3.125000e-02 : f32
    %473 = vector.broadcast %cst_203 : f32 to vector<1x32xf32>
    %474 = arith.mulf %472, %473 : vector<1x32xf32>
    %cst_204 = arith.constant 9.99999974E-6 : f32
    %475 = vector.broadcast %cst_204 : f32 to vector<1x32xf32>
    %476 = arith.addf %474, %475 : vector<1x32xf32>
    %477 = math.rsqrt %476 : vector<1x32xf32>
    %478 = vector.broadcast %477 : vector<1x32xf32> to vector<32x32xf32>
    %479 = arith.mulf %469, %478 : vector<32x32xf32>
    %480 = arith.addf %479, %301 : vector<32x32xf32>
    %c31_i32 = arith.constant 31 : i32
    %481 = tpu.dynamic_rotate %480 by %c31_i32 dim 0 : vector<32x32xf32>, i32 -> vector<32x32xf32>
    %482 = arith.maximumf %480, %481 : vector<32x32xf32>
    %c0_205 = arith.constant 0 : index
    %c0_206 = arith.constant 0 : index
    %483 = vector.load %arg13[%c0_205, %c0_206] : memref<32x9xf32, #tpu.memory_space<vmem>>, vector<32x9xf32>
    %cst_207 = arith.constant dense<0.000000e+00> : vector<32x9xf32>
    %484 = tpu.matmul %482, %483, %cst_207 {dimension_numbers = #tpu.dot_dimension_numbers<[1], [0], [0], [1], [0, 0, 1, 1], [], []>} : vector<32x32xf32>, vector<32x9xf32>, vector<32x9xf32> -> vector<32x9xf32>
    %c0_208 = arith.constant 0 : index
    %c0_209 = arith.constant 0 : index
    %485 = vector.load %arg14[%c0_208, %c0_209] : memref<1x9xf32, #tpu.memory_space<vmem>>, vector<1x9xf32>
    %486 = vector.broadcast %485 : vector<1x9xf32> to vector<32x9xf32>
    %487 = arith.addf %484, %486 : vector<32x9xf32>
    %488 = vector.shape_cast %487 : vector<32x9xf32> to vector<2x16x9xf32>
    %489 = vector.extract_strided_slice %488 {offsets = [0, 0, 0], sizes = [2, 16, 8], strides = [1, 1, 1]} : vector<2x16x9xf32> to vector<2x16x8xf32>
    %490 = vector.extract_strided_slice %488 {offsets = [0, 0, 8], sizes = [2, 16, 1], strides = [1, 1, 1]} : vector<2x16x9xf32> to vector<2x16x1xf32>
    %491 = tpu.iota {dimensions = array<i32: 1>} : vector<2x16x1xi32>
    %c2_i32_210 = arith.constant 2 : i32
    %c0_i32_211 = arith.constant 0 : i32
    %492 = arith.cmpi eq, %c2_i32_210, %c0_i32_211 : i32
    %c1_i32_212 = arith.constant 1 : i32
    %493 = arith.select %492, %c1_i32_212, %c2_i32_210 : i32
    %494 = vector.broadcast %493 : i32 to vector<2x16x1xi32>
    %495 = arith.remsi %491, %494 : vector<2x16x1xi32>
    %c0_i32_213 = arith.constant 0 : i32
    %496 = vector.broadcast %c0_i32_213 : i32 to vector<2x16x1xi32>
    %497 = arith.cmpi ne, %495, %496 : vector<2x16x1xi32>
    %c0_i32_214 = arith.constant 0 : i32
    %498 = vector.broadcast %c0_i32_214 : i32 to vector<2x16x1xi32>
    %499 = arith.cmpi slt, %495, %498 : vector<2x16x1xi32>
    %c0_i32_215 = arith.constant 0 : i32
    %500 = arith.cmpi slt, %493, %c0_i32_215 : i32
    %501 = vector.broadcast %500 : i1 to vector<2x16x1xi1>
    %502 = vector.broadcast %501 : vector<2x16x1xi1> to vector<2x16x1xi1>
    %503 = arith.xori %499, %502 : vector<2x16x1xi1>
    %504 = arith.andi %503, %497 : vector<2x16x1xi1>
    %505 = vector.broadcast %493 : i32 to vector<2x16x1xi32>
    %506 = arith.addi %495, %505 : vector<2x16x1xi32>
    %507 = arith.select %504, %506, %495 : vector<2x16x1xi1>, vector<2x16x1xi32>
    %c0_i32_216 = arith.constant 0 : i32
    %508 = vector.broadcast %c0_i32_216 : i32 to vector<2x16x1xi32>
    %509 = arith.cmpi eq, %507, %508 : vector<2x16x1xi32>
    %cst_217 = arith.constant -1.000000e+30 : f32
    %510 = vector.broadcast %cst_217 : f32 to vector<2x16x1xf32>
    %511 = arith.select %509, %490, %510 : vector<2x16x1xi1>, vector<2x16x1xf32>
    %cst_218 = arith.constant dense<0xFF800000> : vector<2x1xf32>
    %512 = vector.multi_reduction <maximumf>, %511, %cst_218 [1] : vector<2x16x1xf32> to vector<2x1xf32>
    %513 = vector.shape_cast %512 : vector<2x1xf32> to vector<2x1x1xf32>
    %514 = vector.broadcast %513 : vector<2x1x1xf32> to vector<2x16x1xf32>
    %515 = arith.subf %511, %514 : vector<2x16x1xf32>
    %516 = math.exp %515 : vector<2x16x1xf32>
    %cst_219 = arith.constant dense<0.000000e+00> : vector<2x1xf32>
    %517 = vector.multi_reduction <add>, %516, %cst_219 [1] : vector<2x16x1xf32> to vector<2x1xf32>
    %518 = vector.shape_cast %517 : vector<2x1xf32> to vector<2x1x1xf32>
    %519 = vector.broadcast %518 : vector<2x1x1xf32> to vector<2x16x1xf32>
    %520 = arith.divf %516, %519 : vector<2x16x1xf32>
    %521 = vector.broadcast %520 : vector<2x16x1xf32> to vector<2x16x8xf32>
    %522 = arith.mulf %489, %521 : vector<2x16x8xf32>
    %cst_220 = arith.constant dense<0.000000e+00> : vector<2x8xf32>
    %523 = vector.multi_reduction <add>, %522, %cst_220 [1] : vector<2x16x8xf32> to vector<2x8xf32>
    %cst_221 = arith.constant 1.250000e-01 : f32
    %524 = vector.broadcast %cst_221 : f32 to vector<2x8xf32>
    %525 = arith.mulf %523, %524 : vector<2x8xf32>
    %c0_222 = arith.constant 0 : index
    %c0_223 = arith.constant 0 : index
    %526 = vector.load %arg15[%c0_222, %c0_223] : memref<2x8xf32, #tpu.memory_space<vmem>>, vector<2x8xf32>
    tpu.vector_store %arg15[%c0_222, %c0_223], %525 {strides = array<i32>} : memref<2x8xf32, #tpu.memory_space<vmem>>, vector<2x8xf32>,
    return
  }
}

</mosaic_0001>

<llo_original>
// kernel: tpu_custom_call.1
$region0: #{tpu_custom_call.1}
  #allocation0 [shape = 'u32[]', space=smem, size = 0x4, offset = 0x4, fixed_abs, tag = 'smem constant byte address 0x4 - core index']
  #allocation1 [shape = 'u32[144,128]{1,0:T(1,128)}', space=vmem, size = 0x12000, scoped, tag = 'internal scratch']
  %s0 = inlined_call_operand.vmem [shape: f32[32,4], index: 0, kind: input, shape index: {}]
  %s1 = inlined_call_operand.vmem [shape: f32[4,32], index: 1, kind: input, shape index: {}]
  %s2 = inlined_call_operand.vmem [shape: f32[1,32], index: 2, kind: input, shape index: {}]
  %s3 = inlined_call_operand.vmem [shape: f32[5,4,64], index: 3, kind: input, shape index: {}]
  %s4 = inlined_call_operand.vmem [shape: f32[1,64], index: 4, kind: input, shape index: {}]
  %s5 = inlined_call_operand.hbm [shape: f32[5,32,64], index: 5, kind: input, shape index: {}]
  %s6 = inlined_call_operand.vmem [shape: f32[1,64], index: 6, kind: input, shape index: {}]
  %s7 = inlined_call_operand.vmem [shape: f32[32,32], index: 7, kind: input, shape index: {}]
  %s8 = inlined_call_operand.vmem [shape: f32[1,32], index: 8, kind: input, shape index: {}]
  %s9 = inlined_call_operand.hbm [shape: f32[5,32,64], index: 9, kind: input, shape index: {}]
  %s10 = inlined_call_operand.vmem [shape: f32[1,64], index: 10, kind: input, shape index: {}]
  %s11 = inlined_call_operand.hbm [shape: f32[5,32,64], index: 11, kind: input, shape index: {}]
  %s12 = inlined_call_operand.vmem [shape: f32[1,64], index: 12, kind: input, shape index: {}]
  %s13 = inlined_call_operand.vmem [shape: f32[32,9], index: 13, kind: input, shape index: {}]
  %s14 = inlined_call_operand.vmem [shape: f32[1,9], index: 14, kind: input, shape index: {}]
  %s15 = inlined_call_operand.hbm [shape: f32[2,8], index: 15, kind: output, shape index: {}]
  %s16 = sld [smem:[#allocation0]]
  $region82: #{tpu_custom_call.1} parent=0
    _
  %s18 = ssub.s32 1, %s16
  %s19 = scalar_select 0, %s18, %s16
  $region1: #{tpu_custom_call.1} parent=0
    #allocation2 [shape = 'u8[81920]{0}', space=vmem, size = 0x14000, scoped, tag = 'input window, operand 5, single buffered']
    #allocation3 [shape = 's32[1]{0}', space=sflag, size = 0x4, scoped, tag = 'scoped memory for tpu_custom_call.1']
    #allocation4 [shape = 's32[1]{0}', space=sflag, size = 0x4, scoped, tag = 'scoped memory for tpu_custom_call.1']
    #allocation5 [shape = 'u8[81920]{0}', space=vmem, size = 0x14000, scoped, tag = 'input window, operand 9, single buffered']
    #allocation6 [shape = 's32[1]{0}', space=sflag, size = 0x4, scoped, tag = 'scoped memory for tpu_custom_call.1']
    #allocation7 [shape = 'u8[81920]{0}', space=vmem, size = 0x14000, scoped, tag = 'input window, operand 11, single buffered']
    #allocation8 [shape = 'u8[1024]{0}', space=vmem, size = 0x400, scoped, tag = 'output window, operand 0, single buffered']
    %20 = vsyncpa [#allocation3], 0
    %21 = vsyncpa [#allocation6], 0
    %22 = vsyncpa [#allocation4], 0
    // Predicated region
    $region2: #{tpu_custom_call.1} parent=1 // pred_check
      _
    $region3: #{tpu_custom_call.1} parent=1 // pred_check_branch
      %24 = sbr.rel (0) target = $region5
    $region4: #{tpu_custom_call.1} parent=1 // pred_region
      _
    $region5: #{tpu_custom_call.1} parent=1 // pred_fallthru
      _
    // Predicated region
    $region6: #{tpu_custom_call.1} parent=1 // pred_check
      _
    $region7: #{tpu_custom_call.1} parent=1 // pred_check_branch
      %26 = sbr.rel (0) target = $region9
    $region8: #{tpu_custom_call.1} parent=1 // pred_region
      _
    $region9: #{tpu_custom_call.1} parent=1 // pred_fallthru
      _
    // Predicated region
    $region10: #{tpu_custom_call.1} parent=1 // pred_check
      _
    $region11: #{tpu_custom_call.1} parent=1 // pred_check_branch
      %28 = sbr.rel (0) target = $region13
    $region12: #{tpu_custom_call.1} parent=1 // pred_region
      _
    $region13: #{tpu_custom_call.1} parent=1 // pred_fallthru
      _
    // Predicated region
    $region14: #{tpu_custom_call.1} parent=1 // pred_check
      _
    $region15: #{tpu_custom_call.1} parent=1 // pred_check_branch
      %30 = sbr.rel (0) target = $region17
    $region16: #{tpu_custom_call.1} parent=1 // pred_region
      _
    $region17: #{tpu_custom_call.1} parent=1 // pred_fallthru
      _
    // Predicated region
    $region18: #{tpu_custom_call.1} parent=1 // pred_check
      _
    $region19: #{tpu_custom_call.1} parent=1 // pred_check_branch
      %32 = sbr.rel (0) target = $region21
    $region20: #{tpu_custom_call.1} parent=1 // pred_region
      _
    $region21: #{tpu_custom_call.1} parent=1 // pred_fallthru
      _
    // Predicated region
    $region22: #{tpu_custom_call.1} parent=1 // pred_check
      _
    $region23: #{tpu_custom_call.1} parent=1 // pred_check_branch
      %34 = sbr.rel (0) target = $region25
    $region24: #{tpu_custom_call.1} parent=1 // pred_region
      %s36 = ssub.s32 2560, 2560
      %37 = vsyncadd [#allocation3], %s36
      %s38 = sshll.u32 [#allocation2], 4
      %s39 = int_to_ptr.vmem [resolvable:$true] %s38
      %44 = dma.hbm_to_vmem [thread:$0]  %s5, 2560, %s39, [#allocation3], 128, 128, 8
    $region25: #{tpu_custom_call.1} parent=1 // pred_fallthru
      _
    // Predicated region
    $region26: #{tpu_custom_call.1} parent=1 // pred_check
      _
    $region27: #{tpu_custom_call.1} parent=1 // pred_check_branch
      %46 = sbr.rel (0) target = $region29
    $region28: #{tpu_custom_call.1} parent=1 // pred_region
      _
    $region29: #{tpu_custom_call.1} parent=1 // pred_fallthru
      _
    // Predicated region
    $region30: #{tpu_custom_call.1} parent=1 // pred_check
      _
    $region31: #{tpu_custom_call.1} parent=1 // pred_check_branch
      %48 = sbr.rel (0) target = $region33
    $region32: #{tpu_custom_call.1} parent=1 // pred_region
      _
    $region33: #{tpu_custom_call.1} parent=1 // pred_fallthru
      _
    // Predicated region
    $region34: #{tpu_custom_call.1} parent=1 // pred_check
      _
    $region35: #{tpu_custom_call.1} parent=1 // pred_check_branch
      %50 = sbr.rel (0) target = $region37
    $region36: #{tpu_custom_call.1} parent=1 // pred_region
      _
    $region37: #{tpu_custom_call.1} parent=1 // pred_fallthru
      _
    // Predicated region
    $region38: #{tpu_custom_call.1} parent=1 // pred_check
      _
    $region39: #{tpu_custom_call.1} parent=1 // pred_check_branch
      %52 = sbr.rel (0) target = $region41
    $region40: #{tpu_custom_call.1} parent=1 // pred_region
      %s54 = ssub.s32 2560, 2560
      %55 = vsyncadd [#allocation6], %s54
      %s56 = sshll.u32 [#allocation5], 4
      %s57 = int_to_ptr.vmem [resolvable:$true] %s56
      %62 = dma.hbm_to_vmem [thread:$0]  %s9, 2560, %s57, [#allocation6], 128, 128, 8
    $region41: #{tpu_custom_call.1} parent=1 // pred_fallthru
      _
    // Predicated region
    $region42: #{tpu_custom_call.1} parent=1 // pred_check
      _
    $region43: #{tpu_custom_call.1} parent=1 // pred_check_branch
      %64 = sbr.rel (0) target = $region45
    $region44: #{tpu_custom_call.1} parent=1 // pred_region
      _
    $region45: #{tpu_custom_call.1} parent=1 // pred_fallthru
      _
    // Predicated region
    $region46: #{tpu_custom_call.1} parent=1 // pred_check
      _
    $region47: #{tpu_custom_call.1} parent=1 // pred_check_branch
      %66 = sbr.rel (0) target = $region49
    $region48: #{tpu_custom_call.1} parent=1 // pred_region
      %s68 = ssub.s32 2560, 2560
      %69 = vsyncadd [#allocation6], %s68
      %s70 = sshll.u32 [#allocation7], 4
      %s71 = int_to_ptr.vmem [resolvable:$true] %s70
      %76 = dma.hbm_to_vmem [thread:$0]  %s11, 2560, %s71, [#allocation6], 128, 128, 8
    $region49: #{tpu_custom_call.1} parent=1 // pred_fallthru
      _
    // Predicated region
    $region50: #{tpu_custom_call.1} parent=1 // pred_check
      _
    $region51: #{tpu_custom_call.1} parent=1 // pred_check_branch
      %78 = sbr.rel (0) target = $region53
    $region52: #{tpu_custom_call.1} parent=1 // pred_region
      _
    $region53: #{tpu_custom_call.1} parent=1 // pred_fallthru
      _
    // Predicated region
    $region54: #{tpu_custom_call.1} parent=1 // pred_check
      _
    $region55: #{tpu_custom_call.1} parent=1 // pred_check_branch
      %80 = sbr.rel (0) target = $region57
    $region56: #{tpu_custom_call.1} parent=1 // pred_region
      _
    $region57: #{tpu_custom_call.1} parent=1 // pred_fallthru
      _
    // Predicated region
    $region58: #{tpu_custom_call.1} parent=1 // pred_check
      _
    $region59: #{tpu_custom_call.1} parent=1 // pred_check_branch
      %82 = sbr.rel (0) target = $region61
    $region60: #{tpu_custom_call.1} parent=1 // pred_region
      _
    $region61: #{tpu_custom_call.1} parent=1 // pred_fallthru
      _
    // Predicated region
    $region62: #{tpu_custom_call.1} parent=1 // pred_check
      _
    $region63: #{tpu_custom_call.1} parent=1 // pred_check_branch
      %84 = sbr.rel (0) target = $region65
    $region64: #{tpu_custom_call.1} parent=1 // pred_region
      %85 = dma.done [#allocation3], 2560
    $region65: #{tpu_custom_call.1} parent=1 // pred_fallthru
      _
    // Predicated region
    $region66: #{tpu_custom_call.1} parent=1 // pred_check
      _
    $region67: #{tpu_custom_call.1} parent=1 // pred_check_branch
      %87 = sbr.rel (0) target = $region69
    $region68: #{tpu_custom_call.1} parent=1 // pred_region
      %88 = dma.done [#allocation6], 2560
    $region69: #{tpu_custom_call.1} parent=1 // pred_fallthru
      _
    // Predicated region
    $region70: #{tpu_custom_call.1} parent=1 // pred_check
      _
    $region71: #{tpu_custom_call.1} parent=1 // pred_check_branch
      %90 = sbr.rel (0) target = $region73
    $region72: #{tpu_custom_call.1} parent=1 // pred_region
      %91 = dma.done [#allocation6], 2560
    $region73: #{tpu_custom_call.1} parent=1 // pred_fallthru
      _
    %v92 = vld [vmem:[%s0] sm:$0xff]
    %v93 = vld [vmem:[%s0 + $0x8] sm:$0xff]
    %v94 = vld [vmem:[%s0 + $0x10] sm:$0xff]
    %v95 = vld [vmem:[%s0 + $0x18] sm:$0xff]
    %v96 = vld [vmem:[%s1] sm:$0xf]
    %v97 = vld [vmem:[%s2] sm:$0x1]
    %v99 = vlaneseq
    %v100 = vshrl.u32 %v99, 7
    %v101 = vsub.s32 0, %v100
    %v102 = vrot.slane %v97, %v101
    %vm104 = vcmask 31744
    %v106 = vsel %vm104, %v92, 0
    %v109 = vsel %vm104, %v93, 0
    %v112 = vsel %vm104, %v94, 0
    %v115 = vsel %vm104, %v95, 0
    %vm117 = vcmask 1043456
    %v119 = vsel %vm117, %v96, 0
    %121 = vmatprep.subr.mxu0 0.0
    %122 = vmatpush1.msra.mxu0 %v119
    %123 = vmatprep.subr.mxu0 0.0
    %124 = vmatpush1.msra.mxu0 0.0
    %125 = vmatprep.subr.mxu0 0.0
    %126 = vmatpush1.msra.mxu0 0.0
    %127 = vmatprep.subr.mxu0 0.0
    %128 = vmatpush1.msra.mxu0 0.0
    %129 = vmatprep.subr.mxu0 0.0
    %130 = vmatpush1.msra.mxu0 0.0
    %131 = vmatprep.subr.mxu0 0.0
    %132 = vmatpush1.msra.mxu0 0.0
    %133 = vmatprep.subr.mxu0 0.0
    %134 = vmatpush1.msra.mxu0 0.0
    %135 = vmatprep.subr.mxu0 0.0
    %136 = vmatpush1.msra.mxu0 0.0
    %137 = vmatprep.subr.mxu0 0.0
    %138 = vmatpush1.msra.mxu0 0.0
    %139 = vmatprep.subr.mxu0 0.0
    %140 = vmatpush1.msra.mxu0 0.0
    %141 = vmatprep.subr.mxu0 0.0
    %142 = vmatpush1.msra.mxu0 0.0
    %143 = vmatprep.subr.mxu0 0.0
    %144 = vmatpush1.msra.mxu0 0.0
    %145 = vmatprep.subr.mxu0 0.0
    %146 = vmatpush1.msra.mxu0 0.0
    %147 = vmatprep.subr.mxu0 0.0
    %148 = vmatpush1.msra.mxu0 0.0
    %149 = vmatprep.subr.mxu0 0.0
    %150 = vmatpush1.msra.mxu0 0.0
    %151 = vmatprep.subr.mxu0 0.0
    %152 = vmatpush1.msra.mxu0 0.0
    %153 = vmatprep.subr.mxu0 0.0
    %154 = vmatpush1.msra.mxu0 0.0
    %155 = vmatprep.subr.mxu0 0.0
    %156 = vmatpush1.msra.mxu0 0.0
    %157 = vmatprep.subr.mxu0 0.0
    %158 = vmatpush1.msra.mxu0 0.0
    %159 = vmatprep.subr.mxu0 0.0
    %160 = vmatpush1.msra.mxu0 0.0
    %161 = vmatprep.subr.mxu0 0.0
    %162 = vmatpush1.msra.mxu0 0.0
    %163 = vmatprep.subr.mxu0 0.0
    %164 = vmatpush1.msra.mxu0 0.0
    %165 = vmatprep.subr.mxu0 0.0
    %166 = vmatpush1.msra.mxu0 0.0
    %167 = vmatprep.subr.mxu0 0.0
    %168 = vmatpush1.msra.mxu0 0.0
    %169 = vmatprep.subr.mxu0 0.0
    %170 = vmatpush1.msra.mxu0 0.0
    %171 = vmatprep.subr.mxu0 0.0
    %172 = vmatpush1.msra.mxu0 0.0
    %173 = vmatprep.subr.mxu0 0.0
    %174 = vmatpush1.msra.mxu0 0.0
    %175 = vmatprep.subr.mxu0 0.0
    %176 = vmatpush1.msra.mxu0 0.0
    %177 = vmatprep.subr.mxu0 0.0
    %178 = vmatpush1.msra.mxu0 0.0
    %179 = vmatprep.subr.mxu0 0.0
    %180 = vmatpush1.msra.mxu0 0.0
    %181 = vmatprep.subr.mxu0 0.0
    %182 = vmatpush1.msra.mxu0 0.0
    %183 = vmatprep.subr.mxu0 0.0
    %184 = vmatpush1.msra.mxu0 0.0
    %185 = vmatprep.mubr.f32.mxu0 0.0
    %186 = vmatmul.mubr.f32.gmra.mrb[0].mxu0 %v106
    %v187 = vpop.f32.mrb[0].mxu0
    %v188 = vadd.f32 %v102, %v187
    %v189 = vpop.f32.mrb[0].mxu0
    %190 = vmatprep.mubr.f32.mxu0 0.0
    %191 = vmatmul.mubr.f32.gmra.mrb[0].mxu0 %v109
    %v192 = vpop.f32.mrb[0].mxu0
    %v193 = vadd.f32 %v102, %v192
    %v194 = vpop.f32.mrb[0].mxu0
    %195 = vmatprep.mubr.f32.mxu0 0.0
    %196 = vmatmul.mubr.f32.gmra.mrb[0].mxu0 %v112
    %v197 = vpop.f32.mrb[0].mxu0
    %v198 = vadd.f32 %v102, %v197
    %v199 = vpop.f32.mrb[0].mxu0
    %200 = vmatprep.mubr.f32.mxu0 0.0
    %201 = vmatmul.mubr.f32.gmra.mrb[0].mxu0 %v115
    %v202 = vpop.f32.mrb[0].mxu0
    %v203 = vadd.f32 %v102, %v202
    %v204 = vpop.f32.mrb[0].mxu0
    %205 = vdwg.mxu0
    %v206 = vld [vmem:[%s4] sm:$0x1]
    %v208 = vlaneseq
    %v209 = vshrl.u32 %v208, 7
    %v210 = vsub.s32 0, %v209
    %v211 = vrot.slane %v206, %v210
    %v213 = vadd.f32 %v211, 0.0
    %v214 = vrot.slane %v92, 4
    %v215 = vrot.slane %v93, 4
    %v216 = vrot.slane %v94, 4
    %v217 = vrot.slane %v95, 4
    %v218 = vlaneseq
    %v219 = vshrl.u32 %v218, 7
    %vm220 = vcmp.lt.s32.totalorder %v219, 4
    %v221 = vsel %vm220, %v216, %v217
    %v222 = vsel %vm220, %v215, %v216
    %v223 = vsel %vm220, %v214, %v215
    %v224 = vsel %vm220, %v217, %v214
    %v225 = vadd.s32 %v219, 8
    %v226 = vadd.s32 %v219, 16
    %v227 = vadd.s32 %v219, 24
    %vm228 = vcmp.lt.s32.totalorder %v219, 0
    %v229 = vsub.s32 0, %v219
    %v230 = vsel %vm228, %v229, %v219
    %v231 = vshrl.u32 %v230, 4
    %v232 = vand.u32 %v230, 15
    %v233 = vsub.s32 0, %v232
    %v234 = vsel %vm228, %v233, %v232
    %vm235 = vcmp.lt.s32.totalorder %v225, 0
    %v236 = vsub.s32 0, %v225
    %v237 = vsel %vm235, %v236, %v225
    %v238 = vshrl.u32 %v237, 4
    %v239 = vand.u32 %v237, 15
    %v240 = vsub.s32 0, %v239
    %v241 = vsel %vm235, %v240, %v239
    %vm242 = vcmp.lt.s32.totalorder %v226, 0
    %v243 = vsub.s32 0, %v226
    %v244 = vsel %vm242, %v243, %v226
    %v245 = vshrl.u32 %v244, 4
    %v246 = vand.u32 %v244, 15
    %v247 = vsub.s32 0, %v246
    %v248 = vsel %vm242, %v247, %v246
    %vm249 = vcmp.lt.s32.totalorder %v227, 0
    %v250 = vsub.s32 0, %v227
    %v251 = vsel %vm249, %v250, %v227
    %v252 = vshrl.u32 %v251, 4
    %v253 = vand.u32 %v251, 15
    %v254 = vsub.s32 0, %v253
    %v255 = vsel %vm249, %v254, %v253
    %vm256 = vcmp.ne.s32.totalorder %v234, 0
    %vm257 = vcmp.ne.s32.totalorder %v241, 0
    %vm258 = vcmp.ne.s32.totalorder %v248, 0
    %vm259 = vcmp.ne.s32.totalorder %v255, 0
    %vm260 = vcmp.lt.s32.totalorder %v234, 0
    %vm261 = vcmp.lt.s32.totalorder %v241, 0
    %vm262 = vcmp.lt.s32.totalorder %v248, 0
    %vm263 = vcmp.lt.s32.totalorder %v255, 0
    %vm264 = vmand %vm260, %vm256
    %vm265 = vmand %vm261, %vm257
    %vm266 = vmand %vm262, %vm258
    %vm267 = vmand %vm263, %vm259
    %v268 = vadd.s32 %v234, 16
    %v269 = vadd.s32 %v241, 16
    %v270 = vadd.s32 %v248, 16
    %v271 = vadd.s32 %v255, 16
    %v272 = vsel %vm264, %v268, %v234
    %v273 = vsel %vm265, %v269, %v241
    %v274 = vsel %vm266, %v270, %v248
    %v275 = vsel %vm267, %v271, %v255
    %vm276 = vcmp.ge.s32.totalorder %v272, 4
    %vm277 = vcmp.ge.s32.totalorder %v273, 4
    %vm278 = vcmp.ge.s32.totalorder %v274, 4
    %vm279 = vcmp.ge.s32.totalorder %v275, 4
    %v280 = vsel %vm276, 1, 0
    %v281 = vsel %vm277, 1, 0
    %v282 = vsel %vm278, 1, 0
    %v283 = vsel %vm279, 1, 0
    %vm284 = vcmp.eq.s32.totalorder %v280, 1
    %vm285 = vcmp.eq.s32.totalorder %v281, 1
    %vm286 = vcmp.eq.s32.totalorder %v282, 1
    %vm287 = vcmp.eq.s32.totalorder %v283, 1
    %v288 = vsel %vm284, %v224, 0.0
    %v289 = vsel %vm285, %v223, 0.0
    %v290 = vsel %vm286, %v222, 0.0
    %v291 = vsel %vm287, %v221, 0.0
    %v292 = vld [vmem:[%s3] sm:$0xf]
    %v294 = vsel %vm104, %v288, 0
    %v297 = vsel %vm104, %v289, 0
    %v300 = vsel %vm104, %v290, 0
    %v303 = vsel %vm104, %v291, 0
    %v306 = vsel %vm117, %v292, 0
    %308 = vmatprep.subr.mxu0 0.0
    %309 = vmatpush1.msra.mxu0 %v306
    %310 = vmatprep.subr.mxu0 0.0
    %311 = vmatpush1.msra.mxu0 0.0
    %312 = vmatprep.subr.mxu0 0.0
    %313 = vmatpush1.msra.mxu0 0.0
    %314 = vmatprep.subr.mxu0 0.0
    %315 = vmatpush1.msra.mxu0 0.0
    %316 = vmatprep.subr.mxu0 0.0
    %317 = vmatpush1.msra.mxu0 0.0
    %318 = vmatprep.subr.mxu0 0.0
    %319 = vmatpush1.msra.mxu0 0.0
    %320 = vmatprep.subr.mxu0 0.0
    %321 = vmatpush1.msra.mxu0 0.0
    %322 = vmatprep.subr.mxu0 0.0
    %323 = vmatpush1.msra.mxu0 0.0
    %324 = vmatprep.subr.mxu0 0.0
    %325 = vmatpush1.msra.mxu0 0.0
    %326 = vmatprep.subr.mxu0 0.0
    %327 = vmatpush1.msra.mxu0 0.0
    %328 = vmatprep.subr.mxu0 0.0
    %329 = vmatpush1.msra.mxu0 0.0
    %330 = vmatprep.subr.mxu0 0.0
    %331 = vmatpush1.msra.mxu0 0.0
    %332 = vmatprep.subr.mxu0 0.0
    %333 = vmatpush1.msra.mxu0 0.0
    %334 = vmatprep.subr.mxu0 0.0
    %335 = vmatpush1.msra.mxu0 0.0
    %336 = vmatprep.subr.mxu0 0.0
    %337 = vmatpush1.msra.mxu0 0.0
    %338 = vmatprep.subr.mxu0 0.0
    %339 = vmatpush1.msra.mxu0 0.0
    %340 = vmatprep.subr.mxu0 0.0
    %341 = vmatpush1.msra.mxu0 0.0
    %342 = vmatprep.subr.mxu0 0.0
    %343 = vmatpush1.msra.mxu0 0.0
    %344 = vmatprep.subr.mxu0 0.0
    %345 = vmatpush1.msra.mxu0 0.0
    %346 = vmatprep.subr.mxu0 0.0
    %347 = vmatpush1.msra.mxu0 0.0
    %348 = vmatprep.subr.mxu0 0.0
    %349 = vmatpush1.msra.mxu0 0.0
    %350 = vmatprep.subr.mxu0 0.0
    %351 = vmatpush1.msra.mxu0 0.0
    %352 = vmatprep.subr.mxu0 0.0
    %353 = vmatpush1.msra.mxu0 0.0
    %354 = vmatprep.subr.mxu0 0.0
    %355 = vmatpush1.msra.mxu0 0.0
    %356 = vmatprep.subr.mxu0 0.0
    %357 = vmatpush1.msra.mxu0 0.0
    %358 = vmatprep.subr.mxu0 0.0
    %359 = vmatpush1.msra.mxu0 0.0
    %360 = vmatprep.subr.mxu0 0.0
    %361 = vmatpush1.msra.mxu0 0.0
    %362 = vmatprep.subr.mxu0 0.0
    %363 = vmatpush1.msra.mxu0 0.0
    %364 = vmatprep.subr.mxu0 0.0
    %365 = vmatpush1.msra.mxu0 0.0
    %366 = vmatprep.subr.mxu0 0.0
    %367 = vmatpush1.msra.mxu0 0.0
    %368 = vmatprep.subr.mxu0 0.0
    %369 = vmatpush1.msra.mxu0 0.0
    %370 = vmatprep.subr.mxu0 0.0
    %371 = vmatpush1.msra.mxu0 0.0
    %372 = vmatprep.mubr.f32.mxu0 0.0
    %373 = vmatmul.mubr.f32.gmra.mrb[0].mxu0 %v294
    %v374 = vpop.f32.mrb[0].mxu0
    %v375 = vadd.f32 0.0, %v374
    %v376 = vpop.f32.mrb[0].mxu0
    %377 = vmatprep.mubr.f32.mxu0 0.0
    %378 = vmatmul.mubr.f32.gmra.mrb[0].mxu0 %v297
    %v379 = vpop.f32.mrb[0].mxu0
    %v380 = vadd.f32 0.0, %v379
    %v381 = vpop.f32.mrb[0].mxu0
    %382 = vmatprep.mubr.f32.mxu0 0.0
    %383 = vmatmul.mubr.f32.gmra.mrb[0].mxu0 %v300
    %v384 = vpop.f32.mrb[0].mxu0
    %v385 = vadd.f32 0.0, %v384
    %v386 = vpop.f32.mrb[0].mxu0
    %387 = vmatprep.mubr.f32.mxu0 0.0
    %388 = vmatmul.mubr.f32.gmra.mrb[0].mxu0 %v303
    %v389 = vpop.f32.mrb[0].mxu0
    %v390 = vadd.f32 0.0, %v389
    %v391 = vpop.f32.mrb[0].mxu0
    %392 = vdwg.mxu0
    %v393 = vadd.f32 %v213, %v375
    %v394 = vadd.f32 %v213, %v380
    %v395 = vadd.f32 %v213, %v385
    %v396 = vadd.f32 %v213, %v390
    %v397 = vrot.slane %v92, 5
    %v398 = vrot.slane %v93, 5
    %v399 = vrot.slane %v94, 5
    %v400 = vrot.slane %v95, 5
    %vm401 = vcmp.lt.s32.totalorder %v219, 3
    %v402 = vsel %vm401, %v399, %v400
    %v403 = vsel %vm401, %v398, %v399
    %v404 = vsel %vm401, %v397, %v398
    %v405 = vsel %vm401, %v400, %v397
    %vm406 = vcmp.ge.s32.totalorder %v272, 3
    %vm407 = vcmp.ge.s32.totalorder %v273, 3
    %vm408 = vcmp.ge.s32.totalorder %v274, 3
    %vm409 = vcmp.ge.s32.totalorder %v275, 3
    %v410 = vsel %vm406, 1, 0
    %v411 = vsel %vm407, 1, 0
    %v412 = vsel %vm408, 1, 0
    %v413 = vsel %vm409, 1, 0
    %vm414 = vcmp.eq.s32.totalorder %v410, 1
    %vm415 = vcmp.eq.s32.totalorder %v411, 1
    %vm416 = vcmp.eq.s32.totalorder %v412, 1
    %vm417 = vcmp.eq.s32.totalorder %v413, 1
    %v418 = vsel %vm414, %v405, 0.0
    %v419 = vsel %vm415, %v404, 0.0
    %v420 = vsel %vm416, %v403, 0.0
    %v421 = vsel %vm417, %v402, 0.0
    %s422 = scalar_lea.vmem %s3, 4
    %v423 = vld [vmem:[%s422] sm:$0xf]
    %v425 = vsel %vm104, %v418, 0
    %v428 = vsel %vm104, %v419, 0
    %v431 = vsel %vm104, %v420, 0
    %v434 = vsel %vm104, %v421, 0
    %v437 = vsel %vm117, %v423, 0
    %439 = vmatprep.subr.mxu0 0.0
    %440 = vmatpush1.msra.mxu0 %v437
    %441 = vmatprep.subr.mxu0 0.0
    %442 = vmatpush1.msra.mxu0 0.0
    %443 = vmatprep.subr.mxu0 0.0
    %444 = vmatpush1.msra.mxu0 0.0
    %445 = vmatprep.subr.mxu0 0.0
    %446 = vmatpush1.msra.mxu0 0.0
    %447 = vmatprep.subr.mxu0 0.0
    %448 = vmatpush1.msra.mxu0 0.0
    %449 = vmatprep.subr.mxu0 0.0
    %450 = vmatpush1.msra.mxu0 0.0
    %451 = vmatprep.subr.mxu0 0.0
    %452 = vmatpush1.msra.mxu0 0.0
    %453 = vmatprep.subr.mxu0 0.0
    %454 = vmatpush1.msra.mxu0 0.0
    %455 = vmatprep.subr.mxu0 0.0
    %456 = vmatpush1.msra.mxu0 0.0
    %457 = vmatprep.subr.mxu0 0.0
    %458 = vmatpush1.msra.mxu0 0.0
    %459 = vmatprep.subr.mxu0 0.0
    %460 = vmatpush1.msra.mxu0 0.0
    %461 = vmatprep.subr.mxu0 0.0
    %462 = vmatpush1.msra.mxu0 0.0
    %463 = vmatprep.subr.mxu0 0.0
    %464 = vmatpush1.msra.mxu0 0.0
    %465 = vmatprep.subr.mxu0 0.0
    %466 = vmatpush1.msra.mxu0 0.0
    %467 = vmatprep.subr.mxu0 0.0
    %468 = vmatpush1.msra.mxu0 0.0
    %469 = vmatprep.subr.mxu0 0.0
    %470 = vmatpush1.msra.mxu0 0.0
    %471 = vmatprep.subr.mxu0 0.0
    %472 = vmatpush1.msra.mxu0 0.0
    %473 = vmatprep.subr.mxu0 0.0
    %474 = vmatpush1.msra.mxu0 0.0
    %475 = vmatprep.subr.mxu0 0.0
    %476 = vmatpush1.msra.mxu0 0.0
    %477 = vmatprep.subr.mxu0 0.0
    %478 = vmatpush1.msra.mxu0 0.0
    %479 = vmatprep.subr.mxu0 0.0
    %480 = vmatpush1.msra.mxu0 0.0
    %481 = vmatprep.subr.mxu0 0.0
    %482 = vmatpush1.msra.mxu0 0.0
    %483 = vmatprep.subr.mxu0 0.0
    %484 = vmatpush1.msra.mxu0 0.0
    %485 = vmatprep.subr.mxu0 0.0
    %486 = vmatpush1.msra.mxu0 0.0
    %487 = vmatprep.subr.mxu0 0.0
    %488 = vmatpush1.msra.mxu0 0.0
    %489 = vmatprep.subr.mxu0 0.0
    %490 = vmatpush1.msra.mxu0 0.0
    %491 = vmatprep.subr.mxu0 0.0
    %492 = vmatpush1.msra.mxu0 0.0
    %493 = vmatprep.subr.mxu0 0.0
    %494 = vmatpush1.msra.mxu0 0.0
    %495 = vmatprep.subr.mxu0 0.0
    %496 = vmatpush1.msra.mxu0 0.0
    %497 = vmatprep.subr.mxu0 0.0
    %498 = vmatpush1.msra.mxu0 0.0
    %499 = vmatprep.subr.mxu0 0.0
    %500 = vmatpush1.msra.mxu0 0.0
    %501 = vmatprep.subr.mxu0 0.0
    %502 = vmatpush1.msra.mxu0 0.0
    %503 = vmatprep.mubr.f32.mxu0 0.0
    %504 = vmatmul.mubr.f32.gmra.mrb[0].mxu0 %v425
    %v505 = vpop.f32.mrb[0].mxu0
    %v506 = vadd.f32 0.0, %v505
    %v507 = vpop.f32.mrb[0].mxu0
    %508 = vmatprep.mubr.f32.mxu0 0.0
    %509 = vmatmul.mubr.f32.gmra.mrb[0].mxu0 %v428
    %v510 = vpop.f32.mrb[0].mxu0
    %v511 = vadd.f32 0.0, %v510
    %v512 = vpop.f32.mrb[0].mxu0
    %513 = vmatprep.mubr.f32.mxu0 0.0
    %514 = vmatmul.mubr.f32.gmra.mrb[0].mxu0 %v431
    %v515 = vpop.f32.mrb[0].mxu0
    %v516 = vadd.f32 0.0, %v515
    %v517 = vpop.f32.mrb[0].mxu0
    %518 = vmatprep.mubr.f32.mxu0 0.0
    %519 = vmatmul.mubr.f32.gmra.mrb[0].mxu0 %v434
    %v520 = vpop.f32.mrb[0].mxu0
    %v521 = vadd.f32 0.0, %v520
    %v522 = vpop.f32.mrb[0].mxu0
    %523 = vdwg.mxu0
    %v524 = vadd.f32 %v393, %v506
    %v525 = vadd.f32 %v394, %v511
    %v526 = vadd.f32 %v395, %v516
    %v527 = vadd.f32 %v396, %v521
    %v528 = vrot.slane %v92, 6
    %v529 = vrot.slane %v93, 6
    %v530 = vrot.slane %v94, 6
    %v531 = vrot.slane %v95, 6
    %vm532 = vcmp.lt.s32.totalorder %v219, 2
    %v533 = vsel %vm532, %v530, %v531
    %v534 = vsel %vm532, %v529, %v530
    %v535 = vsel %vm532, %v528, %v529
    %v536 = vsel %vm532, %v531, %v528
    %vm537 = vcmp.ge.s32.totalorder %v272, 2
    %vm538 = vcmp.ge.s32.totalorder %v273, 2
    %vm539 = vcmp.ge.s32.totalorder %v274, 2
    %vm540 = vcmp.ge.s32.totalorder %v275, 2
    %v541 = vsel %vm537, 1, 0
    %v542 = vsel %vm538, 1, 0
    %v543 = vsel %vm539, 1, 0
    %v544 = vsel %vm540, 1, 0
    %vm545 = vcmp.eq.s32.totalorder %v541, 1
    %vm546 = vcmp.eq.s32.totalorder %v542, 1
    %vm547 = vcmp.eq.s32.totalorder %v543, 1
    %vm548 = vcmp.eq.s32.totalorder %v544, 1
    %v549 = vsel %vm545, %v536, 0.0
    %v550 = vsel %vm546, %v535, 0.0
    %v551 = vsel %vm547, %v534, 0.0
    %v552 = vsel %vm548, %v533, 0.0
    %s553 = scalar_lea.vmem %s3, 8
    %v554 = vld [vmem:[%s553] sm:$0xf]
    %v556 = vsel %vm104, %v549, 0
    %v559 = vsel %vm104, %v550, 0
    %v562 = vsel %vm104, %v551, 0
    %v565 = vsel %vm104, %v552, 0
    %v568 = vsel %vm117, %v554, 0
    %570 = vmatprep.subr.mxu0 0.0
    %571 = vmatpush1.msra.mxu0 %v568
    %572 = vmatprep.subr.mxu0 0.0
    %573 = vmatpush1.msra.mxu0 0.0
    %574 = vmatprep.subr.mxu0 0.0
    %575 = vmatpush1.msra.mxu0 0.0
    %576 = vmatprep.subr.mxu0 0.0
    %577 = vmatpush1.msra.mxu0 0.0
    %578 = vmatprep.subr.mxu0 0.0
    %579 = vmatpush1.msra.mxu0 0.0
    %580 = vmatprep.subr.mxu0 0.0
    %581 = vmatpush1.msra.mxu0 0.0
    %582 = vmatprep.subr.mxu0 0.0
    %583 = vmatpush1.msra.mxu0 0.0
    %584 = vmatprep.subr.mxu0 0.0
    %585 = vmatpush1.msra.mxu0 0.0
    %586 = vmatprep.subr.mxu0 0.0
    %587 = vmatpush1.msra.mxu0 0.0
    %588 = vmatprep.subr.mxu0 0.0
    %589 = vmatpush1.msra.mxu0 0.0
    %590 = vmatprep.subr.mxu0 0.0
    %591 = vmatpush1.msra.mxu0 0.0
    %592 = vmatprep.subr.mxu0 0.0
    %593 = vmatpush1.msra.mxu0 0.0
    %594 = vmatprep.subr.mxu0 0.0
    %595 = vmatpush1.msra.mxu0 0.0
    %596 = vmatprep.subr.mxu0 0.0
    %597 = vmatpush1.msra.mxu0 0.0
    %598 = vmatprep.subr.mxu0 0.0
    %599 = vmatpush1.msra.mxu0 0.0
    %600 = vmatprep.subr.mxu0 0.0
    %601 = vmatpush1.msra.mxu0 0.0
    %602 = vmatprep.subr.mxu0 0.0
    %603 = vmatpush1.msra.mxu0 0.0
    %604 = vmatprep.subr.mxu0 0.0
    %605 = vmatpush1.msra.mxu0 0.0
    %606 = vmatprep.subr.mxu0 0.0
    %607 = vmatpush1.msra.mxu0 0.0
    %608 = vmatprep.subr.mxu0 0.0
    %609 = vmatpush1.msra.mxu0 0.0
    %610 = vmatprep.subr.mxu0 0.0
    %611 = vmatpush1.msra.mxu0 0.0
    %612 = vmatprep.subr.mxu0 0.0
    %613 = vmatpush1.msra.mxu0 0.0
    %614 = vmatprep.subr.mxu0 0.0
    %615 = vmatpush1.msra.mxu0 0.0
    %616 = vmatprep.subr.mxu0 0.0
    %617 = vmatpush1.msra.mxu0 0.0
    %618 = vmatprep.subr.mxu0 0.0
    %619 = vmatpush1.msra.mxu0 0.0
    %620 = vmatprep.subr.mxu0 0.0
    %621 = vmatpush1.msra.mxu0 0.0
    %622 = vmatprep.subr.mxu0 0.0
    %623 = vmatpush1.msra.mxu0 0.0
    %624 = vmatprep.subr.mxu0 0.0
    %625 = vmatpush1.msra.mxu0 0.0
    %626 = vmatprep.subr.mxu0 0.0
    %627 = vmatpush1.msra.mxu0 0.0
    %628 = vmatprep.subr.mxu0 0.0
    %629 = vmatpush1.msra.mxu0 0.0
    %630 = vmatprep.subr.mxu0 0.0
    %631 = vmatpush1.msra.mxu0 0.0
    %632 = vmatprep.subr.mxu0 0.0
    %633 = vmatpush1.msra.mxu0 0.0
    %634 = vmatprep.mubr.f32.mxu0 0.0
    %635 = vmatmul.mubr.f32.gmra.mrb[0].mxu0 %v556
    %v636 = vpop.f32.mrb[0].mxu0
    %v637 = vadd.f32 0.0, %v636
    %v638 = vpop.f32.mrb[0].mxu0
    %639 = vmatprep.mubr.f32.mxu0 0.0
    %640 = vmatmul.mubr.f32.gmra.mrb[0].mxu0 %v559
    %v641 = vpop.f32.mrb[0].mxu0
    %v642 = vadd.f32 0.0, %v641
    %v643 = vpop.f32.mrb[0].mxu0
    %644 = vmatprep.mubr.f32.mxu0 0.0
    %645 = vmatmul.mubr.f32.gmra.mrb[0].mxu0 %v562
    %v646 = vpop.f32.mrb[0].mxu0
    %v647 = vadd.f32 0.0, %v646
    %v648 = vpop.f32.mrb[0].mxu0
    %649 = vmatprep.mubr.f32.mxu0 0.0
    %650 = vmatmul.mubr.f32.gmra.mrb[0].mxu0 %v565
    %v651 = vpop.f32.mrb[0].mxu0
    %v652 = vadd.f32 0.0, %v651
    %v653 = vpop.f32.mrb[0].mxu0
    %654 = vdwg.mxu0
    %v655 = vadd.f32 %v524, %v637
    %v656 = vadd.f32 %v525, %v642
    %v657 = vadd.f32 %v526, %v647
    %v658 = vadd.f32 %v527, %v652
    %v659 = vrot.slane %v92, 7
    %v660 = vrot.slane %v93, 7
    %v661 = vrot.slane %v94, 7
    %v662 = vrot.slane %v95, 7
    %vm663 = vcmp.lt.s32.totalorder %v219, 1
    %v664 = vsel %vm663, %v661, %v662
    %v665 = vsel %vm663, %v660, %v661
    %v666 = vsel %vm663, %v659, %v660
    %v667 = vsel %vm663, %v662, %v659
    %vm668 = vcmp.ge.s32.totalorder %v272, 1
    %vm669 = vcmp.ge.s32.totalorder %v273, 1
    %vm670 = vcmp.ge.s32.totalorder %v274, 1
    %vm671 = vcmp.ge.s32.totalorder %v275, 1
    %v672 = vsel %vm668, 1, 0
    %v673 = vsel %vm669, 1, 0
    %v674 = vsel %vm670, 1, 0
    %v675 = vsel %vm671, 1, 0
    %vm676 = vcmp.eq.s32.totalorder %v672, 1
    %vm677 = vcmp.eq.s32.totalorder %v673, 1
    %vm678 = vcmp.eq.s32.totalorder %v674, 1
    %vm679 = vcmp.eq.s32.totalorder %v675, 1
    %v680 = vsel %vm676, %v667, 0.0
    %v681 = vsel %vm677, %v666, 0.0
    %v682 = vsel %vm678, %v665, 0.0
    %v683 = vsel %vm679, %v664, 0.0
    %s684 = scalar_lea.vmem %s3, 12
    %v685 = vld [vmem:[%s684] sm:$0xf]
    %v687 = vsel %vm104, %v680, 0
    %v690 = vsel %vm104, %v681, 0
    %v693 = vsel %vm104, %v682, 0
    %v696 = vsel %vm104, %v683, 0
    %v699 = vsel %vm117, %v685, 0
    %701 = vmatprep.subr.mxu0 0.0
    %702 = vmatpush1.msra.mxu0 %v699
    %703 = vmatprep.subr.mxu0 0.0
    %704 = vmatpush1.msra.mxu0 0.0
    %705 = vmatprep.subr.mxu0 0.0
    %706 = vmatpush1.msra.mxu0 0.0
    %707 = vmatprep.subr.mxu0 0.0
    %708 = vmatpush1.msra.mxu0 0.0
    %709 = vmatprep.subr.mxu0 0.0
    %710 = vmatpush1.msra.mxu0 0.0
    %711 = vmatprep.subr.mxu0 0.0
    %712 = vmatpush1.msra.mxu0 0.0
    %713 = vmatprep.subr.mxu0 0.0
    %714 = vmatpush1.msra.mxu0 0.0
    %715 = vmatprep.subr.mxu0 0.0
    %716 = vmatpush1.msra.mxu0 0.0
    %717 = vmatprep.subr.mxu0 0.0
    %718 = vmatpush1.msra.mxu0 0.0
    %719 = vmatprep.subr.mxu0 0.0
    %720 = vmatpush1.msra.mxu0 0.0
    %721 = vmatprep.subr.mxu0 0.0
    %722 = vmatpush1.msra.mxu0 0.0
    %723 = vmatprep.subr.mxu0 0.0
    %724 = vmatpush1.msra.mxu0 0.0
    %725 = vmatprep.subr.mxu0 0.0
    %726 = vmatpush1.msra.mxu0 0.0
    %727 = vmatprep.subr.mxu0 0.0
    %728 = vmatpush1.msra.mxu0 0.0
    %729 = vmatprep.subr.mxu0 0.0
    %730 = vmatpush1.msra.mxu0 0.0
    %731 = vmatprep.subr.mxu0 0.0
    %732 = vmatpush1.msra.mxu0 0.0
    %733 = vmatprep.subr.mxu0 0.0
    %734 = vmatpush1.msra.mxu0 0.0
    %735 = vmatprep.subr.mxu0 0.0
    %736 = vmatpush1.msra.mxu0 0.0
    %737 = vmatprep.subr.mxu0 0.0
    %738 = vmatpush1.msra.mxu0 0.0
    %739 = vmatprep.subr.mxu0 0.0
    %740 = vmatpush1.msra.mxu0 0.0
    %741 = vmatprep.subr.mxu0 0.0
    %742 = vmatpush1.msra.mxu0 0.0
    %743 = vmatprep.subr.mxu0 0.0
    %744 = vmatpush1.msra.mxu0 0.0
    %745 = vmatprep.subr.mxu0 0.0
    %746 = vmatpush1.msra.mxu0 0.0
    %747 = vmatprep.subr.mxu0 0.0
    %748 = vmatpush1.msra.mxu0 0.0
    %749 = vmatprep.subr.mxu0 0.0
    %750 = vmatpush1.msra.mxu0 0.0
    %751 = vmatprep.subr.mxu0 0.0
    %752 = vmatpush1.msra.mxu0 0.0
    %753 = vmatprep.subr.mxu0 0.0
    %754 = vmatpush1.msra.mxu0 0.0
    %755 = vmatprep.subr.mxu0 0.0
    %756 = vmatpush1.msra.mxu0 0.0
    %757 = vmatprep.subr.mxu0 0.0
    %758 = vmatpush1.msra.mxu0 0.0
    %759 = vmatprep.subr.mxu0 0.0
    %760 = vmatpush1.msra.mxu0 0.0
    %761 = vmatprep.subr.mxu0 0.0
    %762 = vmatpush1.msra.mxu0 0.0
    %763 = vmatprep.subr.mxu0 0.0
    %764 = vmatpush1.msra.mxu0 0.0
    %765 = vmatprep.mubr.f32.mxu0 0.0
    %766 = vmatmul.mubr.f32.gmra.mrb[0].mxu0 %v687
    %v767 = vpop.f32.mrb[0].mxu0
    %v768 = vadd.f32 0.0, %v767
    %v769 = vpop.f32.mrb[0].mxu0
    %770 = vmatprep.mubr.f32.mxu0 0.0
    %771 = vmatmul.mubr.f32.gmra.mrb[0].mxu0 %v690
    %v772 = vpop.f32.mrb[0].mxu0
    %v773 = vadd.f32 0.0, %v772
    %v774 = vpop.f32.mrb[0].mxu0
    %775 = vmatprep.mubr.f32.mxu0 0.0
    %776 = vmatmul.mubr.f32.gmra.mrb[0].mxu0 %v693
    %v777 = vpop.f32.mrb[0].mxu0
    %v778 = vadd.f32 0.0, %v777
    %v779 = vpop.f32.mrb[0].mxu0
    %780 = vmatprep.mubr.f32.mxu0 0.0
    %781 = vmatmul.mubr.f32.gmra.mrb[0].mxu0 %v696
    %v782 = vpop.f32.mrb[0].mxu0
    %v783 = vadd.f32 0.0, %v782
    %v784 = vpop.f32.mrb[0].mxu0
    %785 = vdwg.mxu0
    %v786 = vadd.f32 %v655, %v768
    %v787 = vadd.f32 %v656, %v773
    %v788 = vadd.f32 %v657, %v778
    %v789 = vadd.f32 %v658, %v783
    %s790 = scalar_lea.vmem %s3, 16
    %v791 = vld [vmem:[%s790] sm:$0xf]
    %v793 = vsel %vm117, %v791, 0
    %795 = vmatprep.subr.mxu0 0.0
    %796 = vmatpush1.msra.mxu0 %v793
    %797 = vmatprep.subr.mxu0 0.0
    %798 = vmatpush1.msra.mxu0 0.0
    %799 = vmatprep.subr.mxu0 0.0
    %800 = vmatpush1.msra.mxu0 0.0
    %801 = vmatprep.subr.mxu0 0.0
    %802 = vmatpush1.msra.mxu0 0.0
    %803 = vmatprep.subr.mxu0 0.0
    %804 = vmatpush1.msra.mxu0 0.0
    %805 = vmatprep.subr.mxu0 0.0
    %806 = vmatpush1.msra.mxu0 0.0
    %807 = vmatprep.subr.mxu0 0.0
    %808 = vmatpush1.msra.mxu0 0.0
    %809 = vmatprep.subr.mxu0 0.0
    %810 = vmatpush1.msra.mxu0 0.0
    %811 = vmatprep.subr.mxu0 0.0
    %812 = vmatpush1.msra.mxu0 0.0
    %813 = vmatprep.subr.mxu0 0.0
    %814 = vmatpush1.msra.mxu0 0.0
    %815 = vmatprep.subr.mxu0 0.0
    %816 = vmatpush1.msra.mxu0 0.0
    %817 = vmatprep.subr.mxu0 0.0
    %818 = vmatpush1.msra.mxu0 0.0
    %819 = vmatprep.subr.mxu0 0.0
    %820 = vmatpush1.msra.mxu0 0.0
    %821 = vmatprep.subr.mxu0 0.0
    %822 = vmatpush1.msra.mxu0 0.0
    %823 = vmatprep.subr.mxu0 0.0
    %824 = vmatpush1.msra.mxu0 0.0
    %825 = vmatprep.subr.mxu0 0.0
    %826 = vmatpush1.msra.mxu0 0.0
    %827 = vmatprep.subr.mxu0 0.0
    %828 = vmatpush1.msra.mxu0 0.0
    %829 = vmatprep.subr.mxu0 0.0
    %830 = vmatpush1.msra.mxu0 0.0
    %831 = vmatprep.subr.mxu0 0.0
    %832 = vmatpush1.msra.mxu0 0.0
    %833 = vmatprep.subr.mxu0 0.0
    %834 = vmatpush1.msra.mxu0 0.0
    %835 = vmatprep.subr.mxu0 0.0
    %836 = vmatpush1.msra.mxu0 0.0
    %837 = vmatprep.subr.mxu0 0.0
    %838 = vmatpush1.msra.mxu0 0.0
    %839 = vmatprep.subr.mxu0 0.0
    %840 = vmatpush1.msra.mxu0 0.0
    %841 = vmatprep.subr.mxu0 0.0
    %842 = vmatpush1.msra.mxu0 0.0
    %843 = vmatprep.subr.mxu0 0.0
    %844 = vmatpush1.msra.mxu0 0.0
    %845 = vmatprep.subr.mxu0 0.0
    %846 = vmatpush1.msra.mxu0 0.0
    %847 = vmatprep.subr.mxu0 0.0
    %848 = vmatpush1.msra.mxu0 0.0
    %849 = vmatprep.subr.mxu0 0.0
    %850 = vmatpush1.msra.mxu0 0.0
    %851 = vmatprep.subr.mxu0 0.0
    %852 = vmatpush1.msra.mxu0 0.0
    %853 = vmatprep.subr.mxu0 0.0
    %854 = vmatpush1.msra.mxu0 0.0
    %855 = vmatprep.subr.mxu0 0.0
    %856 = vmatpush1.msra.mxu0 0.0
    %857 = vmatprep.subr.mxu0 0.0
    %858 = vmatpush1.msra.mxu0 0.0
    %859 = vmatprep.mubr.f32.mxu0 0.0
    %860 = vmatmul.mubr.f32.gmra.mrb[0].mxu0 %v106
    %v861 = vpop.f32.mrb[0].mxu0
    %v862 = vadd.f32 0.0, %v861
    %v863 = vpop.f32.mrb[0].mxu0
    %864 = vmatprep.mubr.f32.mxu0 0.0
    %865 = vmatmul.mubr.f32.gmra.mrb[0].mxu0 %v109
    %v866 = vpop.f32.mrb[0].mxu0
    %v867 = vadd.f32 0.0, %v866
    %v868 = vpop.f32.mrb[0].mxu0
    %869 = vmatprep.mubr.f32.mxu0 0.0
    %870 = vmatmul.mubr.f32.gmra.mrb[0].mxu0 %v112
    %v871 = vpop.f32.mrb[0].mxu0
    %v872 = vadd.f32 0.0, %v871
    %v873 = vpop.f32.mrb[0].mxu0
    %874 = vmatprep.mubr.f32.mxu0 0.0
    %875 = vmatmul.mubr.f32.gmra.mrb[0].mxu0 %v115
    %v876 = vpop.f32.mrb[0].mxu0
    %v877 = vadd.f32 0.0, %v876
    %v878 = vpop.f32.mrb[0].mxu0
    %879 = vdwg.mxu0
    %v880 = vadd.f32 %v786, %v862
    %v881 = vadd.f32 %v787, %v867
    %v882 = vadd.f32 %v788, %v872
    %v883 = vadd.f32 %v789, %v877
    %v884 = vxor.u32 %v880, 2147483648
    %v885 = vxor.u32 %v881, 2147483648
    %v886 = vxor.u32 %v882, 2147483648
    %v887 = vxor.u32 %v883, 2147483648
    %v888 = vmul.f32 %v884, 1.442695
    %v889 = vpow.pop %v888
    %v890 = vmul.f32 %v885, 1.442695
    %v891 = vpow.pop %v890
    %v892 = vmul.f32 %v886, 1.442695
    %v893 = vpow.pop %v892
    %v894 = vmul.f32 %v887, 1.442695
    %v895 = vpow.pop %v894
    %v896 = vadd.f32 %v889, 1.0
    %v897 = vadd.f32 %v891, 1.0
    %v898 = vadd.f32 %v893, 1.0
    %v899 = vadd.f32 %v895, 1.0
    %v900 = vrcp.pop %v896
    %v901 = vmul.f32 1.0, %v900
    %v902 = vrcp.pop %v897
    %v903 = vmul.f32 1.0, %v902
    %v904 = vrcp.pop %v898
    %v905 = vmul.f32 1.0, %v904
    %v906 = vrcp.pop %v899
    %v907 = vmul.f32 1.0, %v906
    %v908 = vtanh.pop %v880
    %v909 = vtanh.pop %v881
    %v910 = vtanh.pop %v882
    %v911 = vtanh.pop %v883
    %916 = vrot.lane.b32.xlu0 %v908, 96
    %v917 = vpop.permute.xlu0 %916
    %918 = vrot.lane.b32.xlu0 %v909, 96
    %v919 = vpop.permute.xlu0 %918
    %920 = vrot.lane.b32.xlu0 %v910, 96
    %v921 = vpop.permute.xlu0 %920
    %922 = vrot.lane.b32.xlu0 %v911, 96
    %v923 = vpop.permute.xlu0 %922
    %v928 = vmul.f32 %v901, %v917
    %v929 = vmul.f32 %v903, %v919
    %v930 = vmul.f32 %v905, %v921
    %v931 = vmul.f32 %v907, %v923
    %vm932 = vcmask 261120
    %v933 = vsel %vm932, %v928, 0.0
    %v934 = vsel %vm932, %v929, 0.0
    %v935 = vadd.f32 %v933, %v934
    %v936 = vsel %vm932, %v930, 0.0
    %v937 = vadd.f32 %v935, %v936
    %v938 = vsel %vm932, %v931, 0.0
    %v939 = vadd.f32 %v937, %v938
    %v940 = vrot.slane %v939, 4
    %v941 = vadd.f32 %v939, %v940
    %v942 = vrot.slane %v941, 2
    %v943 = vadd.f32 %v941, %v942
    %v944 = vrot.slane %v943, 1
    %v945 = vadd.f32 %v943, %v944
    %v946 = vmul.f32 %v945, 0.03125
    %v947 = vsub.f32 %v928, %v946
    %v948 = vsub.f32 %v929, %v946
    %v949 = vsub.f32 %v930, %v946
    %v950 = vsub.f32 %v931, %v946
    %v951 = vmul.f32 %v947, %v947
    %v952 = vmul.f32 %v948, %v948
    %v953 = vmul.f32 %v949, %v949
    %v954 = vmul.f32 %v950, %v950
    %v955 = vsel %vm932, %v951, 0.0
    %v956 = vsel %vm932, %v952, 0.0
    %v957 = vadd.f32 %v955, %v956
    %v958 = vsel %vm932, %v953, 0.0
    %v959 = vadd.f32 %v957, %v958
    %v960 = vsel %vm932, %v954, 0.0
    %v961 = vadd.f32 %v959, %v960
    %v962 = vrot.slane %v961, 4
    %v963 = vadd.f32 %v961, %v962
    %v964 = vrot.slane %v963, 2
    %v965 = vadd.f32 %v963, %v964
    %v966 = vrot.slane %v965, 1
    %v967 = vadd.f32 %v965, %v966
    %v968 = vmul.f32 %v967, 0.03125
    %v969 = vadd.f32 %v968, 1e-05
    %v970 = vrsqrt.pop %v969
    %v971 = vmul.f32 %v947, %v970
    %v972 = vmul.f32 %v948, %v970
    %v973 = vmul.f32 %v949, %v970
    %v974 = vmul.f32 %v950, %v970
    %v975 = vld [vmem:[%s6] sm:$0x1]
    %v977 = vlaneseq
    %v978 = vshrl.u32 %v977, 7
    %v979 = vsub.s32 0, %v978
    %v980 = vrot.slane %v975, %v979
    %v982 = vadd.f32 %v980, 0.0
    %vm983 = vcmp.ge.s32.totalorder %v272, 8
    %vm984 = vcmp.ge.s32.totalorder %v273, 8
    %vm985 = vcmp.ge.s32.totalorder %v274, 8
    %vm986 = vcmp.ge.s32.totalorder %v275, 8
    %v987 = vsel %vm983, 1, 0
    %v988 = vsel %vm984, 1, 0
    %v989 = vsel %vm985, 1, 0
    %v990 = vsel %vm986, 1, 0
    %vm991 = vcmp.eq.s32.totalorder %v987, 1
    %vm992 = vcmp.eq.s32.totalorder %v988, 1
    %vm993 = vcmp.eq.s32.totalorder %v989, 1
    %vm994 = vcmp.eq.s32.totalorder %v990, 1
    %v995 = vsel %vm991, %v974, 0.0
    %v996 = vsel %vm992, %v971, 0.0
    %v997 = vsel %vm993, %v972, 0.0
    %v998 = vsel %vm994, %v973, 0.0
    %v999 = vld [vmem:[#allocation2] sm:$0xff]
    %v1000 = vld [vmem:[#allocation2 + $0x8] sm:$0xff]
    %v1001 = vld [vmem:[#allocation2 + $0x10] sm:$0xff]
    %v1002 = vld [vmem:[#allocation2 + $0x18] sm:$0xff]
    %v1004 = vsel %vm932, %v995, 0
    %v1007 = vsel %vm932, %v996, 0
    %v1010 = vsel %vm932, %v997, 0
    %v1013 = vsel %vm932, %v998, 0
    %1015 = vmatprep.subr.mxu0 0.0
    %1016 = vmatpush1.msra.mxu0 %v999
    %1017 = vmatprep.subr.mxu0 0.0
    %1018 = vmatpush1.msra.mxu0 %v1000
    %1019 = vmatprep.subr.mxu0 0.0
    %1020 = vmatpush1.msra.mxu0 %v1001
    %1021 = vmatprep.subr.mxu0 0.0
    %1022 = vmatpush1.msra.mxu0 %v1002
    %1023 = vmatprep.subr.mxu0 0.0
    %1024 = vmatpush1.msra.mxu0 0.0
    %1025 = vmatprep.subr.mxu0 0.0
    %1026 = vmatpush1.msra.mxu0 0.0
    %1027 = vmatprep.subr.mxu0 0.0
    %1028 = vmatpush1.msra.mxu0 0.0
    %1029 = vmatprep.subr.mxu0 0.0
    %1030 = vmatpush1.msra.mxu0 0.0
    %1031 = vmatprep.subr.mxu0 0.0
    %1032 = vmatpush1.msra.mxu0 0.0
    %1033 = vmatprep.subr.mxu0 0.0
    %1034 = vmatpush1.msra.mxu0 0.0
    %1035 = vmatprep.subr.mxu0 0.0
    %1036 = vmatpush1.msra.mxu0 0.0
    %1037 = vmatprep.subr.mxu0 0.0
    %1038 = vmatpush1.msra.mxu0 0.0
    %1039 = vmatprep.subr.mxu0 0.0
    %1040 = vmatpush1.msra.mxu0 0.0
    %1041 = vmatprep.subr.mxu0 0.0
    %1042 = vmatpush1.msra.mxu0 0.0
    %1043 = vmatprep.subr.mxu0 0.0
    %1044 = vmatpush1.msra.mxu0 0.0
    %1045 = vmatprep.subr.mxu0 0.0
    %1046 = vmatpush1.msra.mxu0 0.0
    %1047 = vmatprep.subr.mxu0 0.0
    %1048 = vmatpush1.msra.mxu0 0.0
    %1049 = vmatprep.subr.mxu0 0.0
    %1050 = vmatpush1.msra.mxu0 0.0
    %1051 = vmatprep.subr.mxu0 0.0
    %1052 = vmatpush1.msra.mxu0 0.0
    %1053 = vmatprep.subr.mxu0 0.0
    %1054 = vmatpush1.msra.mxu0 0.0
    %1055 = vmatprep.subr.mxu0 0.0
    %1056 = vmatpush1.msra.mxu0 0.0
    %1057 = vmatprep.subr.mxu0 0.0
    %1058 = vmatpush1.msra.mxu0 0.0
    %1059 = vmatprep.subr.mxu0 0.0
    %1060 = vmatpush1.msra.mxu0 0.0
    %1061 = vmatprep.subr.mxu0 0.0
    %1062 = vmatpush1.msra.mxu0 0.0
    %1063 = vmatprep.subr.mxu0 0.0
    %1064 = vmatpush1.msra.mxu0 0.0
    %1065 = vmatprep.subr.mxu0 0.0
    %1066 = vmatpush1.msra.mxu0 0.0
    %1067 = vmatprep.subr.mxu0 0.0
    %1068 = vmatpush1.msra.mxu0 0.0
    %1069 = vmatprep.subr.mxu0 0.0
    %1070 = vmatpush1.msra.mxu0 0.0
    %1071 = vmatprep.subr.mxu0 0.0
    %1072 = vmatpush1.msra.mxu0 0.0
    %1073 = vmatprep.subr.mxu0 0.0
    %1074 = vmatpush1.msra.mxu0 0.0
    %1075 = vmatprep.subr.mxu0 0.0
    %1076 = vmatpush1.msra.mxu0 0.0
    %1077 = vmatprep.subr.mxu0 0.0
    %1078 = vmatpush1.msra.mxu0 0.0
    %1079 = vmatprep.mubr.f32.mxu0 0.0
    %1080 = vmatmul.mubr.f32.gmra.mrb[0].mxu0 %v1004
    %v1081 = vpop.f32.mrb[0].mxu0
    %v1082 = vadd.f32 0.0, %v1081
    %v1083 = vpop.f32.mrb[0].mxu0
    %1084 = vmatprep.mubr.f32.mxu0 0.0
    %1085 = vmatmul.mubr.f32.gmra.mrb[0].mxu0 %v1007
    %v1086 = vpop.f32.mrb[0].mxu0
    %v1087 = vadd.f32 0.0, %v1086
    %v1088 = vpop.f32.mrb[0].mxu0
    %1089 = vmatprep.mubr.f32.mxu0 0.0
    %1090 = vmatmul.mubr.f32.gmra.mrb[0].mxu0 %v1010
    %v1091 = vpop.f32.mrb[0].mxu0
    %v1092 = vadd.f32 0.0, %v1091
    %v1093 = vpop.f32.mrb[0].mxu0
    %1094 = vmatprep.mubr.f32.mxu0 0.0
    %1095 = vmatmul.mubr.f32.gmra.mrb[0].mxu0 %v1013
    %v1096 = vpop.f32.mrb[0].mxu0
    %v1097 = vadd.f32 0.0, %v1096
    %v1098 = vpop.f32.mrb[0].mxu0
    %1099 = vdwg.mxu0
    %v1100 = vadd.f32 %v982, %v1082
    %v1101 = vadd.f32 %v982, %v1087
    %v1102 = vadd.f32 %v982, %v1092
    %v1103 = vadd.f32 %v982, %v1097
    %v1104 = vrot.slane %v971, 2
    %v1105 = vrot.slane %v972, 2
    %v1106 = vrot.slane %v973, 2
    %v1107 = vrot.slane %v974, 2
    %vm1108 = vcmp.lt.s32.totalorder %v219, 6
    %v1109 = vsel %vm1108, %v1106, %v1107
    %v1110 = vsel %vm1108, %v1105, %v1106
    %v1111 = vsel %vm1108, %v1104, %v1105
    %v1112 = vsel %vm1108, %v1107, %v1104
    %vm1113 = vcmp.ge.s32.totalorder %v272, 6
    %vm1114 = vcmp.ge.s32.totalorder %v273, 6
    %vm1115 = vcmp.ge.s32.totalorder %v274, 6
    %vm1116 = vcmp.ge.s32.totalorder %v275, 6
    %v1117 = vsel %vm1113, 1, 0
    %v1118 = vsel %vm1114, 1, 0
    %v1119 = vsel %vm1115, 1, 0
    %v1120 = vsel %vm1116, 1, 0
    %vm1121 = vcmp.eq.s32.totalorder %v1117, 1
    %vm1122 = vcmp.eq.s32.totalorder %v1118, 1
    %vm1123 = vcmp.eq.s32.totalorder %v1119, 1
    %vm1124 = vcmp.eq.s32.totalorder %v1120, 1
    %v1125 = vsel %vm1121, %v1112, 0.0
    %v1126 = vsel %vm1122, %v1111, 0.0
    %v1127 = vsel %vm1123, %v1110, 0.0
    %v1128 = vsel %vm1124, %v1109, 0.0
    %s1129 = scalar_lea.vmem [#allocation2], 32
    %v1130 = vld [vmem:[%s1129] sm:$0xff]
    %v1131 = vld [vmem:[%s1129 + $0x8] sm:$0xff]
    %v1132 = vld [vmem:[%s1129 + $0x10] sm:$0xff]
    %v1133 = vld [vmem:[%s1129 + $0x18] sm:$0xff]
    %v1135 = vsel %vm932, %v1125, 0
    %v1138 = vsel %vm932, %v1126, 0
    %v1141 = vsel %vm932, %v1127, 0
    %v1144 = vsel %vm932, %v1128, 0
    %1146 = vmatprep.subr.mxu0 0.0
    %1147 = vmatpush1.msra.mxu0 %v1130
    %1148 = vmatprep.subr.mxu0 0.0
    %1149 = vmatpush1.msra.mxu0 %v1131
    %1150 = vmatprep.subr.mxu0 0.0
    %1151 = vmatpush1.msra.mxu0 %v1132
    %1152 = vmatprep.subr.mxu0 0.0
    %1153 = vmatpush1.msra.mxu0 %v1133
    %1154 = vmatprep.subr.mxu0 0.0
    %1155 = vmatpush1.msra.mxu0 0.0
    %1156 = vmatprep.subr.mxu0 0.0
    %1157 = vmatpush1.msra.mxu0 0.0
    %1158 = vmatprep.subr.mxu0 0.0
    %1159 = vmatpush1.msra.mxu0 0.0
    %1160 = vmatprep.subr.mxu0 0.0
    %1161 = vmatpush1.msra.mxu0 0.0
    %1162 = vmatprep.subr.mxu0 0.0
    %1163 = vmatpush1.msra.mxu0 0.0
    %1164 = vmatprep.subr.mxu0 0.0
    %1165 = vmatpush1.msra.mxu0 0.0
    %1166 = vmatprep.subr.mxu0 0.0
    %1167 = vmatpush1.msra.mxu0 0.0
    %1168 = vmatprep.subr.mxu0 0.0
    %1169 = vmatpush1.msra.mxu0 0.0
    %1170 = vmatprep.subr.mxu0 0.0
    %1171 = vmatpush1.msra.mxu0 0.0
    %1172 = vmatprep.subr.mxu0 0.0
    %1173 = vmatpush1.msra.mxu0 0.0
    %1174 = vmatprep.subr.mxu0 0.0
    %1175 = vmatpush1.msra.mxu0 0.0
    %1176 = vmatprep.subr.mxu0 0.0
    %1177 = vmatpush1.msra.mxu0 0.0
    %1178 = vmatprep.subr.mxu0 0.0
    %1179 = vmatpush1.msra.mxu0 0.0
    %1180 = vmatprep.subr.mxu0 0.0
    %1181 = vmatpush1.msra.mxu0 0.0
    %1182 = vmatprep.subr.mxu0 0.0
    %1183 = vmatpush1.msra.mxu0 0.0
    %1184 = vmatprep.subr.mxu0 0.0
    %1185 = vmatpush1.msra.mxu0 0.0
    %1186 = vmatprep.subr.mxu0 0.0
    %1187 = vmatpush1.msra.mxu0 0.0
    %1188 = vmatprep.subr.mxu0 0.0
    %1189 = vmatpush1.msra.mxu0 0.0
    %1190 = vmatprep.subr.mxu0 0.0
    %1191 = vmatpush1.msra.mxu0 0.0
    %1192 = vmatprep.subr.mxu0 0.0
    %1193 = vmatpush1.msra.mxu0 0.0
    %1194 = vmatprep.subr.mxu0 0.0
    %1195 = vmatpush1.msra.mxu0 0.0
    %1196 = vmatprep.subr.mxu0 0.0
    %1197 = vmatpush1.msra.mxu0 0.0
    %1198 = vmatprep.subr.mxu0 0.0
    %1199 = vmatpush1.msra.mxu0 0.0
    %1200 = vmatprep.subr.mxu0 0.0
    %1201 = vmatpush1.msra.mxu0 0.0
    %1202 = vmatprep.subr.mxu0 0.0
    %1203 = vmatpush1.msra.mxu0 0.0
    %1204 = vmatprep.subr.mxu0 0.0
    %1205 = vmatpush1.msra.mxu0 0.0
    %1206 = vmatprep.subr.mxu0 0.0
    %1207 = vmatpush1.msra.mxu0 0.0
    %1208 = vmatprep.subr.mxu0 0.0
    %1209 = vmatpush1.msra.mxu0 0.0
    %1210 = vmatprep.mubr.f32.mxu0 0.0
    %1211 = vmatmul.mubr.f32.gmra.mrb[0].mxu0 %v1135
    %v1212 = vpop.f32.mrb[0].mxu0
    %v1213 = vadd.f32 0.0, %v1212
    %v1214 = vpop.f32.mrb[0].mxu0
    %1215 = vmatprep.mubr.f32.mxu0 0.0
    %1216 = vmatmul.mubr.f32.gmra.mrb[0].mxu0 %v1138
    %v1217 = vpop.f32.mrb[0].mxu0
    %v1218 = vadd.f32 0.0, %v1217
    %v1219 = vpop.f32.mrb[0].mxu0
    %1220 = vmatprep.mubr.f32.mxu0 0.0
    %1221 = vmatmul.mubr.f32.gmra.mrb[0].mxu0 %v1141
    %v1222 = vpop.f32.mrb[0].mxu0
    %v1223 = vadd.f32 0.0, %v1222
    %v1224 = vpop.f32.mrb[0].mxu0
    %1225 = vmatprep.mubr.f32.mxu0 0.0
    %1226 = vmatmul.mubr.f32.gmra.mrb[0].mxu0 %v1144
    %v1227 = vpop.f32.mrb[0].mxu0
    %v1228 = vadd.f32 0.0, %v1227
    %v1229 = vpop.f32.mrb[0].mxu0
    %1230 = vdwg.mxu0
    %v1231 = vadd.f32 %v1100, %v1213
    %v1232 = vadd.f32 %v1101, %v1218
    %v1233 = vadd.f32 %v1102, %v1223
    %v1234 = vadd.f32 %v1103, %v1228
    %v1235 = vrot.slane %v971, 4
    %v1236 = vrot.slane %v972, 4
    %v1237 = vrot.slane %v973, 4
    %v1238 = vrot.slane %v974, 4
    %v1239 = vsel %vm220, %v1237, %v1238
    %v1240 = vsel %vm220, %v1236, %v1237
    %v1241 = vsel %vm220, %v1235, %v1236
    %v1242 = vsel %vm220, %v1238, %v1235
    %v1243 = vsel %vm284, %v1242, 0.0
    %v1244 = vsel %vm285, %v1241, 0.0
    %v1245 = vsel %vm286, %v1240, 0.0
    %v1246 = vsel %vm287, %v1239, 0.0
    %s1247 = scalar_lea.vmem [#allocation2], 64
    %v1248 = vld [vmem:[%s1247] sm:$0xff]
    %v1249 = vld [vmem:[%s1247 + $0x8] sm:$0xff]
    %v1250 = vld [vmem:[%s1247 + $0x10] sm:$0xff]
    %v1251 = vld [vmem:[%s1247 + $0x18] sm:$0xff]
    %v1253 = vsel %vm932, %v1243, 0
    %v1256 = vsel %vm932, %v1244, 0
    %v1259 = vsel %vm932, %v1245, 0
    %v1262 = vsel %vm932, %v1246, 0
    %1264 = vmatprep.subr.mxu0 0.0
    %1265 = vmatpush1.msra.mxu0 %v1248
    %1266 = vmatprep.subr.mxu0 0.0
    %1267 = vmatpush1.msra.mxu0 %v1249
    %1268 = vmatprep.subr.mxu0 0.0
    %1269 = vmatpush1.msra.mxu0 %v1250
    %1270 = vmatprep.subr.mxu0 0.0
    %1271 = vmatpush1.msra.mxu0 %v1251
    %1272 = vmatprep.subr.mxu0 0.0
    %1273 = vmatpush1.msra.mxu0 0.0
    %1274 = vmatprep.subr.mxu0 0.0
    %1275 = vmatpush1.msra.mxu0 0.0
    %1276 = vmatprep.subr.mxu0 0.0
    %1277 = vmatpush1.msra.mxu0 0.0
    %1278 = vmatprep.subr.mxu0 0.0
    %1279 = vmatpush1.msra.mxu0 0.0
    %1280 = vmatprep.subr.mxu0 0.0
    %1281 = vmatpush1.msra.mxu0 0.0
    %1282 = vmatprep.subr.mxu0 0.0
    %1283 = vmatpush1.msra.mxu0 0.0
    %1284 = vmatprep.subr.mxu0 0.0
    %1285 = vmatpush1.msra.mxu0 0.0
    %1286 = vmatprep.subr.mxu0 0.0
    %1287 = vmatpush1.msra.mxu0 0.0
    %1288 = vmatprep.subr.mxu0 0.0
    %1289 = vmatpush1.msra.mxu0 0.0
    %1290 = vmatprep.subr.mxu0 0.0
    %1291 = vmatpush1.msra.mxu0 0.0
    %1292 = vmatprep.subr.mxu0 0.0
    %1293 = vmatpush1.msra.mxu0 0.0
    %1294 = vmatprep.subr.mxu0 0.0
    %1295 = vmatpush1.msra.mxu0 0.0
    %1296 = vmatprep.subr.mxu0 0.0
    %1297 = vmatpush1.msra.mxu0 0.0
    %1298 = vmatprep.subr.mxu0 0.0
    %1299 = vmatpush1.msra.mxu0 0.0
    %1300 = vmatprep.subr.mxu0 0.0
    %1301 = vmatpush1.msra.mxu0 0.0
    %1302 = vmatprep.subr.mxu0 0.0
    %1303 = vmatpush1.msra.mxu0 0.0
    %1304 = vmatprep.subr.mxu0 0.0
    %1305 = vmatpush1.msra.mxu0 0.0
    %1306 = vmatprep.subr.mxu0 0.0
    %1307 = vmatpush1.msra.mxu0 0.0
    %1308 = vmatprep.subr.mxu0 0.0
    %1309 = vmatpush1.msra.mxu0 0.0
    %1310 = vmatprep.subr.mxu0 0.0
    %1311 = vmatpush1.msra.mxu0 0.0
    %1312 = vmatprep.subr.mxu0 0.0
    %1313 = vmatpush1.msra.mxu0 0.0
    %1314 = vmatprep.subr.mxu0 0.0
    %1315 = vmatpush1.msra.mxu0 0.0
    %1316 = vmatprep.subr.mxu0 0.0
    %1317 = vmatpush1.msra.mxu0 0.0
    %1318 = vmatprep.subr.mxu0 0.0
    %1319 = vmatpush1.msra.mxu0 0.0
    %1320 = vmatprep.subr.mxu0 0.0
    %1321 = vmatpush1.msra.mxu0 0.0
    %1322 = vmatprep.subr.mxu0 0.0
    %1323 = vmatpush1.msra.mxu0 0.0
    %1324 = vmatprep.subr.mxu0 0.0
    %1325 = vmatpush1.msra.mxu0 0.0
    %1326 = vmatprep.subr.mxu0 0.0
    %1327 = vmatpush1.msra.mxu0 0.0
    %1328 = vmatprep.mubr.f32.mxu0 0.0
    %1329 = vmatmul.mubr.f32.gmra.mrb[0].mxu0 %v1253
    %v1330 = vpop.f32.mrb[0].mxu0
    %v1331 = vadd.f32 0.0, %v1330
    %v1332 = vpop.f32.mrb[0].mxu0
    %1333 = vmatprep.mubr.f32.mxu0 0.0
    %1334 = vmatmul.mubr.f32.gmra.mrb[0].mxu0 %v1256
    %v1335 = vpop.f32.mrb[0].mxu0
    %v1336 = vadd.f32 0.0, %v1335
    %v1337 = vpop.f32.mrb[0].mxu0
    %1338 = vmatprep.mubr.f32.mxu0 0.0
    %1339 = vmatmul.mubr.f32.gmra.mrb[0].mxu0 %v1259
    %v1340 = vpop.f32.mrb[0].mxu0
    %v1341 = vadd.f32 0.0, %v1340
    %v1342 = vpop.f32.mrb[0].mxu0
    %1343 = vmatprep.mubr.f32.mxu0 0.0
    %1344 = vmatmul.mubr.f32.gmra.mrb[0].mxu0 %v1262
    %v1345 = vpop.f32.mrb[0].mxu0
    %v1346 = vadd.f32 0.0, %v1345
    %v1347 = vpop.f32.mrb[0].mxu0
    %1348 = vdwg.mxu0
    %v1349 = vadd.f32 %v1231, %v1331
    %v1350 = vadd.f32 %v1232, %v1336
    %v1351 = vadd.f32 %v1233, %v1341
    %v1352 = vadd.f32 %v1234, %v1346
    %v1353 = vrot.slane %v971, 6
    %v1354 = vrot.slane %v972, 6
    %v1355 = vrot.slane %v973, 6
    %v1356 = vrot.slane %v974, 6
    %v1357 = vsel %vm532, %v1355, %v1356
    %v1358 = vsel %vm532, %v1354, %v1355
    %v1359 = vsel %vm532, %v1353, %v1354
    %v1360 = vsel %vm532, %v1356, %v1353
    %v1361 = vsel %vm545, %v1360, 0.0
    %v1362 = vsel %vm546, %v1359, 0.0
    %v1363 = vsel %vm547, %v1358, 0.0
    %v1364 = vsel %vm548, %v1357, 0.0
    %s1365 = scalar_lea.vmem [#allocation2], 96
    %v1366 = vld [vmem:[%s1365] sm:$0xff]
    %v1367 = vld [vmem:[%s1365 + $0x8] sm:$0xff]
    %v1368 = vld [vmem:[%s1365 + $0x10] sm:$0xff]
    %v1369 = vld [vmem:[%s1365 + $0x18] sm:$0xff]
    %v1371 = vsel %vm932, %v1361, 0
    %v1374 = vsel %vm932, %v1362, 0
    %v1377 = vsel %vm932, %v1363, 0
    %v1380 = vsel %vm932, %v1364, 0
    %1382 = vmatprep.subr.mxu0 0.0
    %1383 = vmatpush1.msra.mxu0 %v1366
    %1384 = vmatprep.subr.mxu0 0.0
    %1385 = vmatpush1.msra.mxu0 %v1367
    %1386 = vmatprep.subr.mxu0 0.0
    %1387 = vmatpush1.msra.mxu0 %v1368
    %1388 = vmatprep.subr.mxu0 0.0
    %1389 = vmatpush1.msra.mxu0 %v1369
    %1390 = vmatprep.subr.mxu0 0.0
    %1391 = vmatpush1.msra.mxu0 0.0
    %1392 = vmatprep.subr.mxu0 0.0
    %1393 = vmatpush1.msra.mxu0 0.0
    %1394 = vmatprep.subr.mxu0 0.0
    %1395 = vmatpush1.msra.mxu0 0.0
    %1396 = vmatprep.subr.mxu0 0.0
    %1397 = vmatpush1.msra.mxu0 0.0
    %1398 = vmatprep.subr.mxu0 0.0
    %1399 = vmatpush1.msra.mxu0 0.0
    %1400 = vmatprep.subr.mxu0 0.0
    %1401 = vmatpush1.msra.mxu0 0.0
    %1402 = vmatprep.subr.mxu0 0.0
    %1403 = vmatpush1.msra.mxu0 0.0
    %1404 = vmatprep.subr.mxu0 0.0
    %1405 = vmatpush1.msra.mxu0 0.0
    %1406 = vmatprep.subr.mxu0 0.0
    %1407 = vmatpush1.msra.mxu0 0.0
    %1408 = vmatprep.subr.mxu0 0.0
    %1409 = vmatpush1.msra.mxu0 0.0
    %1410 = vmatprep.subr.mxu0 0.0
    %1411 = vmatpush1.msra.mxu0 0.0
    %1412 = vmatprep.subr.mxu0 0.0
    %1413 = vmatpush1.msra.mxu0 0.0
    %1414 = vmatprep.subr.mxu0 0.0
    %1415 = vmatpush1.msra.mxu0 0.0
    %1416 = vmatprep.subr.mxu0 0.0
    %1417 = vmatpush1.msra.mxu0 0.0
    %1418 = vmatprep.subr.mxu0 0.0
    %1419 = vmatpush1.msra.mxu0 0.0
    %1420 = vmatprep.subr.mxu0 0.0
    %1421 = vmatpush1.msra.mxu0 0.0
    %1422 = vmatprep.subr.mxu0 0.0
    %1423 = vmatpush1.msra.mxu0 0.0
    %1424 = vmatprep.subr.mxu0 0.0
    %1425 = vmatpush1.msra.mxu0 0.0
    %1426 = vmatprep.subr.mxu0 0.0
    %1427 = vmatpush1.msra.mxu0 0.0
    %1428 = vmatprep.subr.mxu0 0.0
    %1429 = vmatpush1.msra.mxu0 0.0
    %1430 = vmatprep.subr.mxu0 0.0
    %1431 = vmatpush1.msra.mxu0 0.0
    %1432 = vmatprep.subr.mxu0 0.0
    %1433 = vmatpush1.msra.mxu0 0.0
    %1434 = vmatprep.subr.mxu0 0.0
    %1435 = vmatpush1.msra.mxu0 0.0
    %1436 = vmatprep.subr.mxu0 0.0
    %1437 = vmatpush1.msra.mxu0 0.0
    %1438 = vmatprep.subr.mxu0 0.0
    %1439 = vmatpush1.msra.mxu0 0.0
    %1440 = vmatprep.subr.mxu0 0.0
    %1441 = vmatpush1.msra.mxu0 0.0
    %1442 = vmatprep.subr.mxu0 0.0
    %1443 = vmatpush1.msra.mxu0 0.0
    %1444 = vmatprep.subr.mxu0 0.0
    %1445 = vmatpush1.msra.mxu0 0.0
    %1446 = vmatprep.mubr.f32.mxu0 0.0
    %1447 = vmatmul.mubr.f32.gmra.mrb[0].mxu0 %v1371
    %v1448 = vpop.f32.mrb[0].mxu0
    %v1449 = vadd.f32 0.0, %v1448
    %v1450 = vpop.f32.mrb[0].mxu0
    %1451 = vmatprep.mubr.f32.mxu0 0.0
    %1452 = vmatmul.mubr.f32.gmra.mrb[0].mxu0 %v1374
    %v1453 = vpop.f32.mrb[0].mxu0
    %v1454 = vadd.f32 0.0, %v1453
    %v1455 = vpop.f32.mrb[0].mxu0
    %1456 = vmatprep.mubr.f32.mxu0 0.0
    %1457 = vmatmul.mubr.f32.gmra.mrb[0].mxu0 %v1377
    %v1458 = vpop.f32.mrb[0].mxu0
    %v1459 = vadd.f32 0.0, %v1458
    %v1460 = vpop.f32.mrb[0].mxu0
    %1461 = vmatprep.mubr.f32.mxu0 0.0
    %1462 = vmatmul.mubr.f32.gmra.mrb[0].mxu0 %v1380
    %v1463 = vpop.f32.mrb[0].mxu0
    %v1464 = vadd.f32 0.0, %v1463
    %v1465 = vpop.f32.mrb[0].mxu0
    %1466 = vdwg.mxu0
    %v1467 = vadd.f32 %v1349, %v1449
    %v1468 = vadd.f32 %v1350, %v1454
    %v1469 = vadd.f32 %v1351, %v1459
    %v1470 = vadd.f32 %v1352, %v1464
    %s1471 = scalar_lea.vmem [#allocation2], 128
    %v1472 = vld [vmem:[%s1471] sm:$0xff]
    %v1473 = vld [vmem:[%s1471 + $0x8] sm:$0xff]
    %v1474 = vld [vmem:[%s1471 + $0x10] sm:$0xff]
    %v1475 = vld [vmem:[%s1471 + $0x18] sm:$0xff]
    %v1477 = vsel %vm932, %v971, 0
    %v1480 = vsel %vm932, %v972, 0
    %v1483 = vsel %vm932, %v973, 0
    %v1486 = vsel %vm932, %v974, 0
    %1488 = vmatprep.subr.mxu0 0.0
    %1489 = vmatpush1.msra.mxu0 %v1472
    %1490 = vmatprep.subr.mxu0 0.0
    %1491 = vmatpush1.msra.mxu0 %v1473
    %1492 = vmatprep.subr.mxu0 0.0
    %1493 = vmatpush1.msra.mxu0 %v1474
    %1494 = vmatprep.subr.mxu0 0.0
    %1495 = vmatpush1.msra.mxu0 %v1475
    %1496 = vmatprep.subr.mxu0 0.0
    %1497 = vmatpush1.msra.mxu0 0.0
    %1498 = vmatprep.subr.mxu0 0.0
    %1499 = vmatpush1.msra.mxu0 0.0
    %1500 = vmatprep.subr.mxu0 0.0
    %1501 = vmatpush1.msra.mxu0 0.0
    %1502 = vmatprep.subr.mxu0 0.0
    %1503 = vmatpush1.msra.mxu0 0.0
    %1504 = vmatprep.subr.mxu0 0.0
    %1505 = vmatpush1.msra.mxu0 0.0
    %1506 = vmatprep.subr.mxu0 0.0
    %1507 = vmatpush1.msra.mxu0 0.0
    %1508 = vmatprep.subr.mxu0 0.0
    %1509 = vmatpush1.msra.mxu0 0.0
    %1510 = vmatprep.subr.mxu0 0.0
    %1511 = vmatpush1.msra.mxu0 0.0
    %1512 = vmatprep.subr.mxu0 0.0
    %1513 = vmatpush1.msra.mxu0 0.0
    %1514 = vmatprep.subr.mxu0 0.0
    %1515 = vmatpush1.msra.mxu0 0.0
    %1516 = vmatprep.subr.mxu0 0.0
    %1517 = vmatpush1.msra.mxu0 0.0
    %1518 = vmatprep.subr.mxu0 0.0
    %1519 = vmatpush1.msra.mxu0 0.0
    %1520 = vmatprep.subr.mxu0 0.0
    %1521 = vmatpush1.msra.mxu0 0.0
    %1522 = vmatprep.subr.mxu0 0.0
    %1523 = vmatpush1.msra.mxu0 0.0
    %1524 = vmatprep.subr.mxu0 0.0
    %1525 = vmatpush1.msra.mxu0 0.0
    %1526 = vmatprep.subr.mxu0 0.0
    %1527 = vmatpush1.msra.mxu0 0.0
    %1528 = vmatprep.subr.mxu0 0.0
    %1529 = vmatpush1.msra.mxu0 0.0
    %1530 = vmatprep.subr.mxu0 0.0
    %1531 = vmatpush1.msra.mxu0 0.0
    %1532 = vmatprep.subr.mxu0 0.0
    %1533 = vmatpush1.msra.mxu0 0.0
    %1534 = vmatprep.subr.mxu0 0.0
    %1535 = vmatpush1.msra.mxu0 0.0
    %1536 = vmatprep.subr.mxu0 0.0
    %1537 = vmatpush1.msra.mxu0 0.0
    %1538 = vmatprep.subr.mxu0 0.0
    %1539 = vmatpush1.msra.mxu0 0.0
    %1540 = vmatprep.subr.mxu0 0.0
    %1541 = vmatpush1.msra.mxu0 0.0
    %1542 = vmatprep.subr.mxu0 0.0
    %1543 = vmatpush1.msra.mxu0 0.0
    %1544 = vmatprep.subr.mxu0 0.0
    %1545 = vmatpush1.msra.mxu0 0.0
    %1546 = vmatprep.subr.mxu0 0.0
    %1547 = vmatpush1.msra.mxu0 0.0
    %1548 = vmatprep.subr.mxu0 0.0
    %1549 = vmatpush1.msra.mxu0 0.0
    %1550 = vmatprep.subr.mxu0 0.0
    %1551 = vmatpush1.msra.mxu0 0.0
    %1552 = vmatprep.mubr.f32.mxu0 0.0
    %1553 = vmatmul.mubr.f32.gmra.mrb[0].mxu0 %v1477
    %v1554 = vpop.f32.mrb[0].mxu0
    %v1555 = vadd.f32 0.0, %v1554
    %v1556 = vpop.f32.mrb[0].mxu0
    %1557 = vmatprep.mubr.f32.mxu0 0.0
    %1558 = vmatmul.mubr.f32.gmra.mrb[0].mxu0 %v1480
    %v1559 = vpop.f32.mrb[0].mxu0
    %v1560 = vadd.f32 0.0, %v1559
    %v1561 = vpop.f32.mrb[0].mxu0
    %1562 = vmatprep.mubr.f32.mxu0 0.0
    %1563 = vmatmul.mubr.f32.gmra.mrb[0].mxu0 %v1483
    %v1564 = vpop.f32.mrb[0].mxu0
    %v1565 = vadd.f32 0.0, %v1564
    %v1566 = vpop.f32.mrb[0].mxu0
    %1567 = vmatprep.mubr.f32.mxu0 0.0
    %1568 = vmatmul.mubr.f32.gmra.mrb[0].mxu0 %v1486
    %v1569 = vpop.f32.mrb[0].mxu0
    %v1570 = vadd.f32 0.0, %v1569
    %v1571 = vpop.f32.mrb[0].mxu0
    %1572 = vdwg.mxu0
    %v1573 = vadd.f32 %v1467, %v1555
    %v1574 = vadd.f32 %v1468, %v1560
    %v1575 = vadd.f32 %v1469, %v1565
    %v1576 = vadd.f32 %v1470, %v1570
    %v1577 = vxor.u32 %v1573, 2147483648
    %v1578 = vxor.u32 %v1574, 2147483648
    %v1579 = vxor.u32 %v1575, 2147483648
    %v1580 = vxor.u32 %v1576, 2147483648
    %v1581 = vmul.f32 %v1577, 1.442695
    %v1582 = vpow.pop %v1581
    %v1583 = vmul.f32 %v1578, 1.442695
    %v1584 = vpow.pop %v1583
    %v1585 = vmul.f32 %v1579, 1.442695
    %v1586 = vpow.pop %v1585
    %v1587 = vmul.f32 %v1580, 1.442695
    %v1588 = vpow.pop %v1587
    %v1589 = vadd.f32 %v1582, 1.0
    %v1590 = vadd.f32 %v1584, 1.0
    %v1591 = vadd.f32 %v1586, 1.0
    %v1592 = vadd.f32 %v1588, 1.0
    %v1593 = vrcp.pop %v1589
    %v1594 = vmul.f32 1.0, %v1593
    %v1595 = vrcp.pop %v1590
    %v1596 = vmul.f32 1.0, %v1595
    %v1597 = vrcp.pop %v1591
    %v1598 = vmul.f32 1.0, %v1597
    %v1599 = vrcp.pop %v1592
    %v1600 = vmul.f32 1.0, %v1599
    %v1601 = vtanh.pop %v1573
    %v1602 = vtanh.pop %v1574
    %v1603 = vtanh.pop %v1575
    %v1604 = vtanh.pop %v1576
    %1609 = vrot.lane.b32.xlu0 %v1601, 96
    %v1610 = vpop.permute.xlu0 %1609
    %1611 = vrot.lane.b32.xlu0 %v1602, 96
    %v1612 = vpop.permute.xlu0 %1611
    %1613 = vrot.lane.b32.xlu0 %v1603, 96
    %v1614 = vpop.permute.xlu0 %1613
    %1615 = vrot.lane.b32.xlu0 %v1604, 96
    %v1616 = vpop.permute.xlu0 %1615
    %v1621 = vmul.f32 %v1594, %v1610
    %v1622 = vmul.f32 %v1596, %v1612
    %v1623 = vmul.f32 %v1598, %v1614
    %v1624 = vmul.f32 %v1600, %v1616
    %v1625 = vsel %vm932, %v1621, 0.0
    %v1626 = vsel %vm932, %v1622, 0.0
    %v1627 = vadd.f32 %v1625, %v1626
    %v1628 = vsel %vm932, %v1623, 0.0
    %v1629 = vadd.f32 %v1627, %v1628
    %v1630 = vsel %vm932, %v1624, 0.0
    %v1631 = vadd.f32 %v1629, %v1630
    %v1632 = vrot.slane %v1631, 4
    %v1633 = vadd.f32 %v1631, %v1632
    %v1634 = vrot.slane %v1633, 2
    %v1635 = vadd.f32 %v1633, %v1634
    %v1636 = vrot.slane %v1635, 1
    %v1637 = vadd.f32 %v1635, %v1636
    %v1638 = vmul.f32 %v1637, 0.03125
    %v1639 = vsub.f32 %v1621, %v1638
    %v1640 = vsub.f32 %v1622, %v1638
    %v1641 = vsub.f32 %v1623, %v1638
    %v1642 = vsub.f32 %v1624, %v1638
    %v1643 = vmul.f32 %v1639, %v1639
    %v1644 = vmul.f32 %v1640, %v1640
    %v1645 = vmul.f32 %v1641, %v1641
    %v1646 = vmul.f32 %v1642, %v1642
    %v1647 = vsel %vm932, %v1643, 0.0
    %v1648 = vsel %vm932, %v1644, 0.0
    %v1649 = vadd.f32 %v1647, %v1648
    %v1650 = vsel %vm932, %v1645, 0.0
    %v1651 = vadd.f32 %v1649, %v1650
    %v1652 = vsel %vm932, %v1646, 0.0
    %v1653 = vadd.f32 %v1651, %v1652
    %v1654 = vrot.slane %v1653, 4
    %v1655 = vadd.f32 %v1653, %v1654
    %v1656 = vrot.slane %v1655, 2
    %v1657 = vadd.f32 %v1655, %v1656
    %v1658 = vrot.slane %v1657, 1
    %v1659 = vadd.f32 %v1657, %v1658
    %v1660 = vmul.f32 %v1659, 0.03125
    %v1661 = vadd.f32 %v1660, 1e-05
    %v1662 = vrsqrt.pop %v1661
    %v1663 = vmul.f32 %v1639, %v1662
    %v1664 = vmul.f32 %v1640, %v1662
    %v1665 = vmul.f32 %v1641, %v1662
    %v1666 = vmul.f32 %v1642, %v1662
    %v1667 = vadd.f32 %v1663, %v188
    %v1668 = vadd.f32 %v1664, %v193
    %v1669 = vadd.f32 %v1665, %v198
    %v1670 = vadd.f32 %v1666, %v203
    %v1671 = vld [vmem:[%s7] sm:$0xff]
    %v1672 = vld [vmem:[%s7 + $0x8] sm:$0xff]
    %v1673 = vld [vmem:[%s7 + $0x10] sm:$0xff]
    %v1674 = vld [vmem:[%s7 + $0x18] sm:$0xff]
    %v1675 = vld [vmem:[%s8] sm:$0x1]
    %v1677 = vlaneseq
    %v1678 = vshrl.u32 %v1677, 7
    %v1679 = vsub.s32 0, %v1678
    %v1680 = vrot.slane %v1675, %v1679
    %v1683 = vsel %vm932, %v1667, 0
    %v1686 = vsel %vm932, %v1668, 0
    %v1689 = vsel %vm932, %v1669, 0
    %v1692 = vsel %vm932, %v1670, 0
    %1694 = vmatprep.subr.mxu0 0.0
    %1695 = vmatpush1.msra.mxu0 %v1671
    %1696 = vmatprep.subr.mxu0 0.0
    %1697 = vmatpush1.msra.mxu0 %v1672
    %1698 = vmatprep.subr.mxu0 0.0
    %1699 = vmatpush1.msra.mxu0 %v1673
    %1700 = vmatprep.subr.mxu0 0.0
    %1701 = vmatpush1.msra.mxu0 %v1674
    %1702 = vmatprep.subr.mxu0 0.0
    %1703 = vmatpush1.msra.mxu0 0.0
    %1704 = vmatprep.subr.mxu0 0.0
    %1705 = vmatpush1.msra.mxu0 0.0
    %1706 = vmatprep.subr.mxu0 0.0
    %1707 = vmatpush1.msra.mxu0 0.0
    %1708 = vmatprep.subr.mxu0 0.0
    %1709 = vmatpush1.msra.mxu0 0.0
    %1710 = vmatprep.subr.mxu0 0.0
    %1711 = vmatpush1.msra.mxu0 0.0
    %1712 = vmatprep.subr.mxu0 0.0
    %1713 = vmatpush1.msra.mxu0 0.0
    %1714 = vmatprep.subr.mxu0 0.0
    %1715 = vmatpush1.msra.mxu0 0.0
    %1716 = vmatprep.subr.mxu0 0.0
    %1717 = vmatpush1.msra.mxu0 0.0
    %1718 = vmatprep.subr.mxu0 0.0
    %1719 = vmatpush1.msra.mxu0 0.0
    %1720 = vmatprep.subr.mxu0 0.0
    %1721 = vmatpush1.msra.mxu0 0.0
    %1722 = vmatprep.subr.mxu0 0.0
    %1723 = vmatpush1.msra.mxu0 0.0
    %1724 = vmatprep.subr.mxu0 0.0
    %1725 = vmatpush1.msra.mxu0 0.0
    %1726 = vmatprep.subr.mxu0 0.0
    %1727 = vmatpush1.msra.mxu0 0.0
    %1728 = vmatprep.subr.mxu0 0.0
    %1729 = vmatpush1.msra.mxu0 0.0
    %1730 = vmatprep.subr.mxu0 0.0
    %1731 = vmatpush1.msra.mxu0 0.0
    %1732 = vmatprep.subr.mxu0 0.0
    %1733 = vmatpush1.msra.mxu0 0.0
    %1734 = vmatprep.subr.mxu0 0.0
    %1735 = vmatpush1.msra.mxu0 0.0
    %1736 = vmatprep.subr.mxu0 0.0
    %1737 = vmatpush1.msra.mxu0 0.0
    %1738 = vmatprep.subr.mxu0 0.0
    %1739 = vmatpush1.msra.mxu0 0.0
    %1740 = vmatprep.subr.mxu0 0.0
    %1741 = vmatpush1.msra.mxu0 0.0
    %1742 = vmatprep.subr.mxu0 0.0
    %1743 = vmatpush1.msra.mxu0 0.0
    %1744 = vmatprep.subr.mxu0 0.0
    %1745 = vmatpush1.msra.mxu0 0.0
    %1746 = vmatprep.subr.mxu0 0.0
    %1747 = vmatpush1.msra.mxu0 0.0
    %1748 = vmatprep.subr.mxu0 0.0
    %1749 = vmatpush1.msra.mxu0 0.0
    %1750 = vmatprep.subr.mxu0 0.0
    %1751 = vmatpush1.msra.mxu0 0.0
    %1752 = vmatprep.subr.mxu0 0.0
    %1753 = vmatpush1.msra.mxu0 0.0
    %1754 = vmatprep.subr.mxu0 0.0
    %1755 = vmatpush1.msra.mxu0 0.0
    %1756 = vmatprep.subr.mxu0 0.0
    %1757 = vmatpush1.msra.mxu0 0.0
    %1758 = vmatprep.mubr.f32.mxu0 0.0
    %1759 = vmatmul.mubr.f32.gmra.mrb[0].mxu0 %v1683
    %v1760 = vpop.f32.mrb[0].mxu0
    %v1761 = vadd.f32 %v1680, %v1760
    %v1762 = vpop.f32.mrb[0].mxu0
    %1763 = vmatprep.mubr.f32.mxu0 0.0
    %1764 = vmatmul.mubr.f32.gmra.mrb[0].mxu0 %v1686
    %v1765 = vpop.f32.mrb[0].mxu0
    %v1766 = vadd.f32 %v1680, %v1765
    %v1767 = vpop.f32.mrb[0].mxu0
    %1768 = vmatprep.mubr.f32.mxu0 0.0
    %1769 = vmatmul.mubr.f32.gmra.mrb[0].mxu0 %v1689
    %v1770 = vpop.f32.mrb[0].mxu0
    %v1771 = vadd.f32 %v1680, %v1770
    %v1772 = vpop.f32.mrb[0].mxu0
    %1773 = vmatprep.mubr.f32.mxu0 0.0
    %1774 = vmatmul.mubr.f32.gmra.mrb[0].mxu0 %v1692
    %v1775 = vpop.f32.mrb[0].mxu0
    %v1776 = vadd.f32 %v1680, %v1775
    %v1777 = vpop.f32.mrb[0].mxu0
    %1778 = vdwg.mxu0
    %v1779 = vld [vmem:[%s10] sm:$0x1]
    %v1781 = vlaneseq
    %v1782 = vshrl.u32 %v1781, 7
    %v1783 = vsub.s32 0, %v1782
    %v1784 = vrot.slane %v1779, %v1783
    %v1786 = vadd.f32 %v1784, 0.0
    %v1787 = vrot.slane %v1667, 4
    %v1788 = vrot.slane %v1668, 4
    %v1789 = vrot.slane %v1669, 4
    %v1790 = vrot.slane %v1670, 4
    %v1791 = vsel %vm220, %v1789, %v1790
    %v1792 = vsel %vm220, %v1788, %v1789
    %v1793 = vsel %vm220, %v1787, %v1788
    %v1794 = vsel %vm220, %v1790, %v1787
    %vm1795 = vcmp.ge.s32.totalorder %v272, 12
    %vm1796 = vcmp.ge.s32.totalorder %v273, 12
    %vm1797 = vcmp.ge.s32.totalorder %v274, 12
    %vm1798 = vcmp.ge.s32.totalorder %v275, 12
    %v1799 = vsel %vm1795, 1, 0
    %v1800 = vsel %vm1796, 1, 0
    %v1801 = vsel %vm1797, 1, 0
    %v1802 = vsel %vm1798, 1, 0
    %vm1803 = vcmp.eq.s32.totalorder %v1799, 1
    %vm1804 = vcmp.eq.s32.totalorder %v1800, 1
    %vm1805 = vcmp.eq.s32.totalorder %v1801, 1
    %vm1806 = vcmp.eq.s32.totalorder %v1802, 1
    %v1807 = vsel %vm1803, %v1791, 0.0
    %v1808 = vsel %vm1804, %v1794, 0.0
    %v1809 = vsel %vm1805, %v1793, 0.0
    %v1810 = vsel %vm1806, %v1792, 0.0
    %s1811 = scalar_lea.vmem [#allocation5], 32
    %v1812 = vld [vmem:[%s1811] sm:$0xff]
    %v1813 = vld [vmem:[%s1811 + $0x8] sm:$0xff]
    %v1814 = vld [vmem:[%s1811 + $0x10] sm:$0xff]
    %v1815 = vld [vmem:[%s1811 + $0x18] sm:$0xff]
    %v1817 = vsel %vm932, %v1807, 0
    %v1820 = vsel %vm932, %v1808, 0
    %v1823 = vsel %vm932, %v1809, 0
    %v1826 = vsel %vm932, %v1810, 0
    %1828 = vmatprep.subr.mxu0 0.0
    %1829 = vmatpush1.msra.mxu0 %v1812
    %1830 = vmatprep.subr.mxu0 0.0
    %1831 = vmatpush1.msra.mxu0 %v1813
    %1832 = vmatprep.subr.mxu0 0.0
    %1833 = vmatpush1.msra.mxu0 %v1814
    %1834 = vmatprep.subr.mxu0 0.0
    %1835 = vmatpush1.msra.mxu0 %v1815
    %1836 = vmatprep.subr.mxu0 0.0
    %1837 = vmatpush1.msra.mxu0 0.0
    %1838 = vmatprep.subr.mxu0 0.0
    %1839 = vmatpush1.msra.mxu0 0.0
    %1840 = vmatprep.subr.mxu0 0.0
    %1841 = vmatpush1.msra.mxu0 0.0
    %1842 = vmatprep.subr.mxu0 0.0
    %1843 = vmatpush1.msra.mxu0 0.0
    %1844 = vmatprep.subr.mxu0 0.0
    %1845 = vmatpush1.msra.mxu0 0.0
    %1846 = vmatprep.subr.mxu0 0.0
    %1847 = vmatpush1.msra.mxu0 0.0
    %1848 = vmatprep.subr.mxu0 0.0
    %1849 = vmatpush1.msra.mxu0 0.0
    %1850 = vmatprep.subr.mxu0 0.0
    %1851 = vmatpush1.msra.mxu0 0.0
    %1852 = vmatprep.subr.mxu0 0.0
    %1853 = vmatpush1.msra.mxu0 0.0
    %1854 = vmatprep.subr.mxu0 0.0
    %1855 = vmatpush1.msra.mxu0 0.0
    %1856 = vmatprep.subr.mxu0 0.0
    %1857 = vmatpush1.msra.mxu0 0.0
    %1858 = vmatprep.subr.mxu0 0.0
    %1859 = vmatpush1.msra.mxu0 0.0
    %1860 = vmatprep.subr.mxu0 0.0
    %1861 = vmatpush1.msra.mxu0 0.0
    %1862 = vmatprep.subr.mxu0 0.0
    %1863 = vmatpush1.msra.mxu0 0.0
    %1864 = vmatprep.subr.mxu0 0.0
    %1865 = vmatpush1.msra.mxu0 0.0
    %1866 = vmatprep.subr.mxu0 0.0
    %1867 = vmatpush1.msra.mxu0 0.0
    %1868 = vmatprep.subr.mxu0 0.0
    %1869 = vmatpush1.msra.mxu0 0.0
    %1870 = vmatprep.subr.mxu0 0.0
    %1871 = vmatpush1.msra.mxu0 0.0
    %1872 = vmatprep.subr.mxu0 0.0
    %1873 = vmatpush1.msra.mxu0 0.0
    %1874 = vmatprep.subr.mxu0 0.0
    %1875 = vmatpush1.msra.mxu0 0.0
    %1876 = vmatprep.subr.mxu0 0.0
    %1877 = vmatpush1.msra.mxu0 0.0
    %1878 = vmatprep.subr.mxu0 0.0
    %1879 = vmatpush1.msra.mxu0 0.0
    %1880 = vmatprep.subr.mxu0 0.0
    %1881 = vmatpush1.msra.mxu0 0.0
    %1882 = vmatprep.subr.mxu0 0.0
    %1883 = vmatpush1.msra.mxu0 0.0
    %1884 = vmatprep.subr.mxu0 0.0
    %1885 = vmatpush1.msra.mxu0 0.0
    %1886 = vmatprep.subr.mxu0 0.0
    %1887 = vmatpush1.msra.mxu0 0.0
    %1888 = vmatprep.subr.mxu0 0.0
    %1889 = vmatpush1.msra.mxu0 0.0
    %1890 = vmatprep.subr.mxu0 0.0
    %1891 = vmatpush1.msra.mxu0 0.0
    %1892 = vmatprep.mubr.f32.mxu0 0.0
    %1893 = vmatmul.mubr.f32.gmra.mrb[0].mxu0 %v1817
    %v1894 = vpop.f32.mrb[0].mxu0
    %v1895 = vadd.f32 0.0, %v1894
    %v1896 = vpop.f32.mrb[0].mxu0
    %1897 = vmatprep.mubr.f32.mxu0 0.0
    %1898 = vmatmul.mubr.f32.gmra.mrb[0].mxu0 %v1820
    %v1899 = vpop.f32.mrb[0].mxu0
    %v1900 = vadd.f32 0.0, %v1899
    %v1901 = vpop.f32.mrb[0].mxu0
    %1902 = vmatprep.mubr.f32.mxu0 0.0
    %1903 = vmatmul.mubr.f32.gmra.mrb[0].mxu0 %v1823
    %v1904 = vpop.f32.mrb[0].mxu0
    %v1905 = vadd.f32 0.0, %v1904
    %v1906 = vpop.f32.mrb[0].mxu0
    %1907 = vmatprep.mubr.f32.mxu0 0.0
    %1908 = vmatmul.mubr.f32.gmra.mrb[0].mxu0 %v1826
    %v1909 = vpop.f32.mrb[0].mxu0
    %v1910 = vadd.f32 0.0, %v1909
    %v1911 = vpop.f32.mrb[0].mxu0
    %1912 = vdwg.mxu0
    %v1913 = vadd.f32 %v1786, %v1895
    %v1914 = vadd.f32 %v1786, %v1900
    %v1915 = vadd.f32 %v1786, %v1905
    %v1916 = vadd.f32 %v1786, %v1910
    %v1917 = vsel %vm991, %v1670, 0.0
    %v1918 = vsel %vm992, %v1667, 0.0
    %v1919 = vsel %vm993, %v1668, 0.0
    %v1920 = vsel %vm994, %v1669, 0.0
    %s1921 = scalar_lea.vmem [#allocation5], 64
    %v1922 = vld [vmem:[%s1921] sm:$0xff]
    %v1923 = vld [vmem:[%s1921 + $0x8] sm:$0xff]
    %v1924 = vld [vmem:[%s1921 + $0x10] sm:$0xff]
    %v1925 = vld [vmem:[%s1921 + $0x18] sm:$0xff]
    %v1927 = vsel %vm932, %v1917, 0
    %v1930 = vsel %vm932, %v1918, 0
    %v1933 = vsel %vm932, %v1919, 0
    %v1936 = vsel %vm932, %v1920, 0
    %1938 = vmatprep.subr.mxu0 0.0
    %1939 = vmatpush1.msra.mxu0 %v1922
    %1940 = vmatprep.subr.mxu0 0.0
    %1941 = vmatpush1.msra.mxu0 %v1923
    %1942 = vmatprep.subr.mxu0 0.0
    %1943 = vmatpush1.msra.mxu0 %v1924
    %1944 = vmatprep.subr.mxu0 0.0
    %1945 = vmatpush1.msra.mxu0 %v1925
    %1946 = vmatprep.subr.mxu0 0.0
    %1947 = vmatpush1.msra.mxu0 0.0
    %1948 = vmatprep.subr.mxu0 0.0
    %1949 = vmatpush1.msra.mxu0 0.0
    %1950 = vmatprep.subr.mxu0 0.0
    %1951 = vmatpush1.msra.mxu0 0.0
    %1952 = vmatprep.subr.mxu0 0.0
    %1953 = vmatpush1.msra.mxu0 0.0
    %1954 = vmatprep.subr.mxu0 0.0
    %1955 = vmatpush1.msra.mxu0 0.0
    %1956 = vmatprep.subr.mxu0 0.0
    %1957 = vmatpush1.msra.mxu0 0.0
    %1958 = vmatprep.subr.mxu0 0.0
    %1959 = vmatpush1.msra.mxu0 0.0
    %1960 = vmatprep.subr.mxu0 0.0
    %1961 = vmatpush1.msra.mxu0 0.0
    %1962 = vmatprep.subr.mxu0 0.0
    %1963 = vmatpush1.msra.mxu0 0.0
    %1964 = vmatprep.subr.mxu0 0.0
    %1965 = vmatpush1.msra.mxu0 0.0
    %1966 = vmatprep.subr.mxu0 0.0
    %1967 = vmatpush1.msra.mxu0 0.0
    %1968 = vmatprep.subr.mxu0 0.0
    %1969 = vmatpush1.msra.mxu0 0.0
    %1970 = vmatprep.subr.mxu0 0.0
    %1971 = vmatpush1.msra.mxu0 0.0
    %1972 = vmatprep.subr.mxu0 0.0
    %1973 = vmatpush1.msra.mxu0 0.0
    %1974 = vmatprep.subr.mxu0 0.0
    %1975 = vmatpush1.msra.mxu0 0.0
    %1976 = vmatprep.subr.mxu0 0.0
    %1977 = vmatpush1.msra.mxu0 0.0
    %1978 = vmatprep.subr.mxu0 0.0
    %1979 = vmatpush1.msra.mxu0 0.0
    %1980 = vmatprep.subr.mxu0 0.0
    %1981 = vmatpush1.msra.mxu0 0.0
    %1982 = vmatprep.subr.mxu0 0.0
    %1983 = vmatpush1.msra.mxu0 0.0
    %1984 = vmatprep.subr.mxu0 0.0
    %1985 = vmatpush1.msra.mxu0 0.0
    %1986 = vmatprep.subr.mxu0 0.0
    %1987 = vmatpush1.msra.mxu0 0.0
    %1988 = vmatprep.subr.mxu0 0.0
    %1989 = vmatpush1.msra.mxu0 0.0
    %1990 = vmatprep.subr.mxu0 0.0
    %1991 = vmatpush1.msra.mxu0 0.0
    %1992 = vmatprep.subr.mxu0 0.0
    %1993 = vmatpush1.msra.mxu0 0.0
    %1994 = vmatprep.subr.mxu0 0.0
    %1995 = vmatpush1.msra.mxu0 0.0
    %1996 = vmatprep.subr.mxu0 0.0
    %1997 = vmatpush1.msra.mxu0 0.0
    %1998 = vmatprep.subr.mxu0 0.0
    %1999 = vmatpush1.msra.mxu0 0.0
    %2000 = vmatprep.subr.mxu0 0.0
    %2001 = vmatpush1.msra.mxu0 0.0
    %2002 = vmatprep.mubr.f32.mxu0 0.0
    %2003 = vmatmul.mubr.f32.gmra.mrb[0].mxu0 %v1927
    %v2004 = vpop.f32.mrb[0].mxu0
    %v2005 = vadd.f32 0.0, %v2004
    %v2006 = vpop.f32.mrb[0].mxu0
    %2007 = vmatprep.mubr.f32.mxu0 0.0
    %2008 = vmatmul.mubr.f32.gmra.mrb[0].mxu0 %v1930
    %v2009 = vpop.f32.mrb[0].mxu0
    %v2010 = vadd.f32 0.0, %v2009
    %v2011 = vpop.f32.mrb[0].mxu0
    %2012 = vmatprep.mubr.f32.mxu0 0.0
    %2013 = vmatmul.mubr.f32.gmra.mrb[0].mxu0 %v1933
    %v2014 = vpop.f32.mrb[0].mxu0
    %v2015 = vadd.f32 0.0, %v2014
    %v2016 = vpop.f32.mrb[0].mxu0
    %2017 = vmatprep.mubr.f32.mxu0 0.0
    %2018 = vmatmul.mubr.f32.gmra.mrb[0].mxu0 %v1936
    %v2019 = vpop.f32.mrb[0].mxu0
    %v2020 = vadd.f32 0.0, %v2019
    %v2021 = vpop.f32.mrb[0].mxu0
    %2022 = vdwg.mxu0
    %v2023 = vadd.f32 %v1913, %v2005
    %v2024 = vadd.f32 %v1914, %v2010
    %v2025 = vadd.f32 %v1915, %v2015
    %v2026 = vadd.f32 %v1916, %v2020
    %v2027 = vsel %vm284, %v1794, 0.0
    %v2028 = vsel %vm285, %v1793, 0.0
    %v2029 = vsel %vm286, %v1792, 0.0
    %v2030 = vsel %vm287, %v1791, 0.0
    %s2031 = scalar_lea.vmem [#allocation5], 96
    %v2032 = vld [vmem:[%s2031] sm:$0xff]
    %v2033 = vld [vmem:[%s2031 + $0x8] sm:$0xff]
    %v2034 = vld [vmem:[%s2031 + $0x10] sm:$0xff]
    %v2035 = vld [vmem:[%s2031 + $0x18] sm:$0xff]
    %v2037 = vsel %vm932, %v2027, 0
    %v2040 = vsel %vm932, %v2028, 0
    %v2043 = vsel %vm932, %v2029, 0
    %v2046 = vsel %vm932, %v2030, 0
    %2048 = vmatprep.subr.mxu0 0.0
    %2049 = vmatpush1.msra.mxu0 %v2032
    %2050 = vmatprep.subr.mxu0 0.0
    %2051 = vmatpush1.msra.mxu0 %v2033
    %2052 = vmatprep.subr.mxu0 0.0
    %2053 = vmatpush1.msra.mxu0 %v2034
    %2054 = vmatprep.subr.mxu0 0.0
    %2055 = vmatpush1.msra.mxu0 %v2035
    %2056 = vmatprep.subr.mxu0 0.0
    %2057 = vmatpush1.msra.mxu0 0.0
    %2058 = vmatprep.subr.mxu0 0.0
    %2059 = vmatpush1.msra.mxu0 0.0
    %2060 = vmatprep.subr.mxu0 0.0
    %2061 = vmatpush1.msra.mxu0 0.0
    %2062 = vmatprep.subr.mxu0 0.0
    %2063 = vmatpush1.msra.mxu0 0.0
    %2064 = vmatprep.subr.mxu0 0.0
    %2065 = vmatpush1.msra.mxu0 0.0
    %2066 = vmatprep.subr.mxu0 0.0
    %2067 = vmatpush1.msra.mxu0 0.0
    %2068 = vmatprep.subr.mxu0 0.0
    %2069 = vmatpush1.msra.mxu0 0.0
    %2070 = vmatprep.subr.mxu0 0.0
    %2071 = vmatpush1.msra.mxu0 0.0
    %2072 = vmatprep.subr.mxu0 0.0
    %2073 = vmatpush1.msra.mxu0 0.0
    %2074 = vmatprep.subr.mxu0 0.0
    %2075 = vmatpush1.msra.mxu0 0.0
    %2076 = vmatprep.subr.mxu0 0.0
    %2077 = vmatpush1.msra.mxu0 0.0
    %2078 = vmatprep.subr.mxu0 0.0
    %2079 = vmatpush1.msra.mxu0 0.0
    %2080 = vmatprep.subr.mxu0 0.0
    %2081 = vmatpush1.msra.mxu0 0.0
    %2082 = vmatprep.subr.mxu0 0.0
    %2083 = vmatpush1.msra.mxu0 0.0
    %2084 = vmatprep.subr.mxu0 0.0
    %2085 = vmatpush1.msra.mxu0 0.0
    %2086 = vmatprep.subr.mxu0 0.0
    %2087 = vmatpush1.msra.mxu0 0.0
    %2088 = vmatprep.subr.mxu0 0.0
    %2089 = vmatpush1.msra.mxu0 0.0
    %2090 = vmatprep.subr.mxu0 0.0
    %2091 = vmatpush1.msra.mxu0 0.0
    %2092 = vmatprep.subr.mxu0 0.0
    %2093 = vmatpush1.msra.mxu0 0.0
    %2094 = vmatprep.subr.mxu0 0.0
    %2095 = vmatpush1.msra.mxu0 0.0
    %2096 = vmatprep.subr.mxu0 0.0
    %2097 = vmatpush1.msra.mxu0 0.0
    %2098 = vmatprep.subr.mxu0 0.0
    %2099 = vmatpush1.msra.mxu0 0.0
    %2100 = vmatprep.subr.mxu0 0.0
    %2101 = vmatpush1.msra.mxu0 0.0
    %2102 = vmatprep.subr.mxu0 0.0
    %2103 = vmatpush1.msra.mxu0 0.0
    %2104 = vmatprep.subr.mxu0 0.0
    %2105 = vmatpush1.msra.mxu0 0.0
    %2106 = vmatprep.subr.mxu0 0.0
    %2107 = vmatpush1.msra.mxu0 0.0
    %2108 = vmatprep.subr.mxu0 0.0
    %2109 = vmatpush1.msra.mxu0 0.0
    %2110 = vmatprep.subr.mxu0 0.0
    %2111 = vmatpush1.msra.mxu0 0.0
    %2112 = vmatprep.mubr.f32.mxu0 0.0
    %2113 = vmatmul.mubr.f32.gmra.mrb[0].mxu0 %v2037
    %v2114 = vpop.f32.mrb[0].mxu0
    %v2115 = vadd.f32 0.0, %v2114
    %v2116 = vpop.f32.mrb[0].mxu0
    %2117 = vmatprep.mubr.f32.mxu0 0.0
    %2118 = vmatmul.mubr.f32.gmra.mrb[0].mxu0 %v2040
    %v2119 = vpop.f32.mrb[0].mxu0
    %v2120 = vadd.f32 0.0, %v2119
    %v2121 = vpop.f32.mrb[0].mxu0
    %2122 = vmatprep.mubr.f32.mxu0 0.0
    %2123 = vmatmul.mubr.f32.gmra.mrb[0].mxu0 %v2043
    %v2124 = vpop.f32.mrb[0].mxu0
    %v2125 = vadd.f32 0.0, %v2124
    %v2126 = vpop.f32.mrb[0].mxu0
    %2127 = vmatprep.mubr.f32.mxu0 0.0
    %2128 = vmatmul.mubr.f32.gmra.mrb[0].mxu0 %v2046
    %v2129 = vpop.f32.mrb[0].mxu0
    %v2130 = vadd.f32 0.0, %v2129
    %v2131 = vpop.f32.mrb[0].mxu0
    %2132 = vdwg.mxu0
    %v2133 = vadd.f32 %v2023, %v2115
    %v2134 = vadd.f32 %v2024, %v2120
    %v2135 = vadd.f32 %v2025, %v2125
    %v2136 = vadd.f32 %v2026, %v2130
    %s2137 = scalar_lea.vmem [#allocation5], 128
    %v2138 = vld [vmem:[%s2137] sm:$0xff]
    %v2139 = vld [vmem:[%s2137 + $0x8] sm:$0xff]
    %v2140 = vld [vmem:[%s2137 + $0x10] sm:$0xff]
    %v2141 = vld [vmem:[%s2137 + $0x18] sm:$0xff]
    %2142 = vmatprep.subr.mxu0 0.0
    %2143 = vmatpush1.msra.mxu0 %v2138
    %2144 = vmatprep.subr.mxu0 0.0
    %2145 = vmatpush1.msra.mxu0 %v2139
    %2146 = vmatprep.subr.mxu0 0.0
    %2147 = vmatpush1.msra.mxu0 %v2140
    %2148 = vmatprep.subr.mxu0 0.0
    %2149 = vmatpush1.msra.mxu0 %v2141
    %2150 = vmatprep.subr.mxu0 0.0
    %2151 = vmatpush1.msra.mxu0 0.0
    %2152 = vmatprep.subr.mxu0 0.0
    %2153 = vmatpush1.msra.mxu0 0.0
    %2154 = vmatprep.subr.mxu0 0.0
    %2155 = vmatpush1.msra.mxu0 0.0
    %2156 = vmatprep.subr.mxu0 0.0
    %2157 = vmatpush1.msra.mxu0 0.0
    %2158 = vmatprep.subr.mxu0 0.0
    %2159 = vmatpush1.msra.mxu0 0.0
    %2160 = vmatprep.subr.mxu0 0.0
    %2161 = vmatpush1.msra.mxu0 0.0
    %2162 = vmatprep.subr.mxu0 0.0
    %2163 = vmatpush1.msra.mxu0 0.0
    %2164 = vmatprep.subr.mxu0 0.0
    %2165 = vmatpush1.msra.mxu0 0.0
    %2166 = vmatprep.subr.mxu0 0.0
    %2167 = vmatpush1.msra.mxu0 0.0
    %2168 = vmatprep.subr.mxu0 0.0
    %2169 = vmatpush1.msra.mxu0 0.0
    %2170 = vmatprep.subr.mxu0 0.0
    %2171 = vmatpush1.msra.mxu0 0.0
    %2172 = vmatprep.subr.mxu0 0.0
    %2173 = vmatpush1.msra.mxu0 0.0
    %2174 = vmatprep.subr.mxu0 0.0
    %2175 = vmatpush1.msra.mxu0 0.0
    %2176 = vmatprep.subr.mxu0 0.0
    %2177 = vmatpush1.msra.mxu0 0.0
    %2178 = vmatprep.subr.mxu0 0.0
    %2179 = vmatpush1.msra.mxu0 0.0
    %2180 = vmatprep.subr.mxu0 0.0
    %2181 = vmatpush1.msra.mxu0 0.0
    %2182 = vmatprep.subr.mxu0 0.0
    %2183 = vmatpush1.msra.mxu0 0.0
    %2184 = vmatprep.subr.mxu0 0.0
    %2185 = vmatpush1.msra.mxu0 0.0
    %2186 = vmatprep.subr.mxu0 0.0
    %2187 = vmatpush1.msra.mxu0 0.0
    %2188 = vmatprep.subr.mxu0 0.0
    %2189 = vmatpush1.msra.mxu0 0.0
    %2190 = vmatprep.subr.mxu0 0.0
    %2191 = vmatpush1.msra.mxu0 0.0
    %2192 = vmatprep.subr.mxu0 0.0
    %2193 = vmatpush1.msra.mxu0 0.0
    %2194 = vmatprep.subr.mxu0 0.0
    %2195 = vmatpush1.msra.mxu0 0.0
    %2196 = vmatprep.subr.mxu0 0.0
    %2197 = vmatpush1.msra.mxu0 0.0
    %2198 = vmatprep.subr.mxu0 0.0
    %2199 = vmatpush1.msra.mxu0 0.0
    %2200 = vmatprep.subr.mxu0 0.0
    %2201 = vmatpush1.msra.mxu0 0.0
    %2202 = vmatprep.subr.mxu0 0.0
    %2203 = vmatpush1.msra.mxu0 0.0
    %2204 = vmatprep.subr.mxu0 0.0
    %2205 = vmatpush1.msra.mxu0 0.0
    %2206 = vmatprep.mubr.f32.mxu0 0.0
    %2207 = vmatmul.mubr.f32.gmra.mrb[0].mxu0 %v1683
    %v2208 = vpop.f32.mrb[0].mxu0
    %v2209 = vadd.f32 0.0, %v2208
    %v2210 = vpop.f32.mrb[0].mxu0
    %2211 = vmatprep.mubr.f32.mxu0 0.0
    %2212 = vmatmul.mubr.f32.gmra.mrb[0].mxu0 %v1686
    %v2213 = vpop.f32.mrb[0].mxu0
    %v2214 = vadd.f32 0.0, %v2213
    %v2215 = vpop.f32.mrb[0].mxu0
    %2216 = vmatprep.mubr.f32.mxu0 0.0
    %2217 = vmatmul.mubr.f32.gmra.mrb[0].mxu0 %v1689
    %v2218 = vpop.f32.mrb[0].mxu0
    %v2219 = vadd.f32 0.0, %v2218
    %v2220 = vpop.f32.mrb[0].mxu0
    %2221 = vmatprep.mubr.f32.mxu0 0.0
    %2222 = vmatmul.mubr.f32.gmra.mrb[0].mxu0 %v1692
    %v2223 = vpop.f32.mrb[0].mxu0
    %v2224 = vadd.f32 0.0, %v2223
    %v2225 = vpop.f32.mrb[0].mxu0
    %2226 = vdwg.mxu0
    %v2227 = vadd.f32 %v2133, %v2209
    %v2228 = vadd.f32 %v2134, %v2214
    %v2229 = vadd.f32 %v2135, %v2219
    %v2230 = vadd.f32 %v2136, %v2224
    %v2231 = vxor.u32 %v2227, 2147483648
    %v2232 = vxor.u32 %v2228, 2147483648
    %v2233 = vxor.u32 %v2229, 2147483648
    %v2234 = vxor.u32 %v2230, 2147483648
    %v2235 = vmul.f32 %v2231, 1.442695
    %v2236 = vpow.pop %v2235
    %v2237 = vmul.f32 %v2232, 1.442695
    %v2238 = vpow.pop %v2237
    %v2239 = vmul.f32 %v2233, 1.442695
    %v2240 = vpow.pop %v2239
    %v2241 = vmul.f32 %v2234, 1.442695
    %v2242 = vpow.pop %v2241
    %v2243 = vadd.f32 %v2236, 1.0
    %v2244 = vadd.f32 %v2238, 1.0
    %v2245 = vadd.f32 %v2240, 1.0
    %v2246 = vadd.f32 %v2242, 1.0
    %v2247 = vrcp.pop %v2243
    %v2248 = vmul.f32 1.0, %v2247
    %v2249 = vrcp.pop %v2244
    %v2250 = vmul.f32 1.0, %v2249
    %v2251 = vrcp.pop %v2245
    %v2252 = vmul.f32 1.0, %v2251
    %v2253 = vrcp.pop %v2246
    %v2254 = vmul.f32 1.0, %v2253
    %v2255 = vtanh.pop %v2227
    %v2256 = vtanh.pop %v2228
    %v2257 = vtanh.pop %v2229
    %v2258 = vtanh.pop %v2230
    %2263 = vrot.lane.b32.xlu0 %v2255, 96
    %v2264 = vpop.permute.xlu0 %2263
    %2265 = vrot.lane.b32.xlu0 %v2256, 96
    %v2266 = vpop.permute.xlu0 %2265
    %2267 = vrot.lane.b32.xlu0 %v2257, 96
    %v2268 = vpop.permute.xlu0 %2267
    %2269 = vrot.lane.b32.xlu0 %v2258, 96
    %v2270 = vpop.permute.xlu0 %2269
    %v2275 = vmul.f32 %v2248, %v2264
    %v2276 = vmul.f32 %v2250, %v2266
    %v2277 = vmul.f32 %v2252, %v2268
    %v2278 = vmul.f32 %v2254, %v2270
    %v2279 = vsel %vm932, %v2275, 0.0
    %v2280 = vsel %vm932, %v2276, 0.0
    %v2281 = vadd.f32 %v2279, %v2280
    %v2282 = vsel %vm932, %v2277, 0.0
    %v2283 = vadd.f32 %v2281, %v2282
    %v2284 = vsel %vm932, %v2278, 0.0
    %v2285 = vadd.f32 %v2283, %v2284
    %v2286 = vrot.slane %v2285, 4
    %v2287 = vadd.f32 %v2285, %v2286
    %v2288 = vrot.slane %v2287, 2
    %v2289 = vadd.f32 %v2287, %v2288
    %v2290 = vrot.slane %v2289, 1
    %v2291 = vadd.f32 %v2289, %v2290
    %v2292 = vmul.f32 %v2291, 0.03125
    %v2293 = vsub.f32 %v2275, %v2292
    %v2294 = vsub.f32 %v2276, %v2292
    %v2295 = vsub.f32 %v2277, %v2292
    %v2296 = vsub.f32 %v2278, %v2292
    %v2297 = vmul.f32 %v2293, %v2293
    %v2298 = vmul.f32 %v2294, %v2294
    %v2299 = vmul.f32 %v2295, %v2295
    %v2300 = vmul.f32 %v2296, %v2296
    %v2301 = vsel %vm932, %v2297, 0.0
    %v2302 = vsel %vm932, %v2298, 0.0
    %v2303 = vadd.f32 %v2301, %v2302
    %v2304 = vsel %vm932, %v2299, 0.0
    %v2305 = vadd.f32 %v2303, %v2304
    %v2306 = vsel %vm932, %v2300, 0.0
    %v2307 = vadd.f32 %v2305, %v2306
    %v2308 = vrot.slane %v2307, 4
    %v2309 = vadd.f32 %v2307, %v2308
    %v2310 = vrot.slane %v2309, 2
    %v2311 = vadd.f32 %v2309, %v2310
    %v2312 = vrot.slane %v2311, 1
    %v2313 = vadd.f32 %v2311, %v2312
    %v2314 = vmul.f32 %v2313, 0.03125
    %v2315 = vadd.f32 %v2314, 1e-05
    %v2316 = vrsqrt.pop %v2315
    %v2317 = vmul.f32 %v2293, %v2316
    %v2318 = vmul.f32 %v2294, %v2316
    %v2319 = vmul.f32 %v2295, %v2316
    %v2320 = vmul.f32 %v2296, %v2316
    %v2321 = vld [vmem:[%s12] sm:$0x1]
    %v2323 = vlaneseq
    %v2324 = vshrl.u32 %v2323, 7
    %v2325 = vsub.s32 0, %v2324
    %v2326 = vrot.slane %v2321, %v2325
    %v2328 = vadd.f32 %v2326, 0.0
    %v2329 = vsel %vm991, %v2320, 0.0
    %v2330 = vsel %vm992, %v2317, 0.0
    %v2331 = vsel %vm993, %v2318, 0.0
    %v2332 = vsel %vm994, %v2319, 0.0
    %s2333 = scalar_lea.vmem [#allocation7], 96
    %v2334 = vld [vmem:[%s2333] sm:$0xff]
    %v2335 = vld [vmem:[%s2333 + $0x8] sm:$0xff]
    %v2336 = vld [vmem:[%s2333 + $0x10] sm:$0xff]
    %v2337 = vld [vmem:[%s2333 + $0x18] sm:$0xff]
    %v2339 = vsel %vm932, %v2329, 0
    %v2342 = vsel %vm932, %v2330, 0
    %v2345 = vsel %vm932, %v2331, 0
    %v2348 = vsel %vm932, %v2332, 0
    %2350 = vmatprep.subr.mxu0 0.0
    %2351 = vmatpush1.msra.mxu0 %v2334
    %2352 = vmatprep.subr.mxu0 0.0
    %2353 = vmatpush1.msra.mxu0 %v2335
    %2354 = vmatprep.subr.mxu0 0.0
    %2355 = vmatpush1.msra.mxu0 %v2336
    %2356 = vmatprep.subr.mxu0 0.0
    %2357 = vmatpush1.msra.mxu0 %v2337
    %2358 = vmatprep.subr.mxu0 0.0
    %2359 = vmatpush1.msra.mxu0 0.0
    %2360 = vmatprep.subr.mxu0 0.0
    %2361 = vmatpush1.msra.mxu0 0.0
    %2362 = vmatprep.subr.mxu0 0.0
    %2363 = vmatpush1.msra.mxu0 0.0
    %2364 = vmatprep.subr.mxu0 0.0
    %2365 = vmatpush1.msra.mxu0 0.0
    %2366 = vmatprep.subr.mxu0 0.0
    %2367 = vmatpush1.msra.mxu0 0.0
    %2368 = vmatprep.subr.mxu0 0.0
    %2369 = vmatpush1.msra.mxu0 0.0
    %2370 = vmatprep.subr.mxu0 0.0
    %2371 = vmatpush1.msra.mxu0 0.0
    %2372 = vmatprep.subr.mxu0 0.0
    %2373 = vmatpush1.msra.mxu0 0.0
    %2374 = vmatprep.subr.mxu0 0.0
    %2375 = vmatpush1.msra.mxu0 0.0
    %2376 = vmatprep.subr.mxu0 0.0
    %2377 = vmatpush1.msra.mxu0 0.0
    %2378 = vmatprep.subr.mxu0 0.0
    %2379 = vmatpush1.msra.mxu0 0.0
    %2380 = vmatprep.subr.mxu0 0.0
    %2381 = vmatpush1.msra.mxu0 0.0
    %2382 = vmatprep.subr.mxu0 0.0
    %2383 = vmatpush1.msra.mxu0 0.0
    %2384 = vmatprep.subr.mxu0 0.0
    %2385 = vmatpush1.msra.mxu0 0.0
    %2386 = vmatprep.subr.mxu0 0.0
    %2387 = vmatpush1.msra.mxu0 0.0
    %2388 = vmatprep.subr.mxu0 0.0
    %2389 = vmatpush1.msra.mxu0 0.0
    %2390 = vmatprep.subr.mxu0 0.0
    %2391 = vmatpush1.msra.mxu0 0.0
    %2392 = vmatprep.subr.mxu0 0.0
    %2393 = vmatpush1.msra.mxu0 0.0
    %2394 = vmatprep.subr.mxu0 0.0
    %2395 = vmatpush1.msra.mxu0 0.0
    %2396 = vmatprep.subr.mxu0 0.0
    %2397 = vmatpush1.msra.mxu0 0.0
    %2398 = vmatprep.subr.mxu0 0.0
    %2399 = vmatpush1.msra.mxu0 0.0
    %2400 = vmatprep.subr.mxu0 0.0
    %2401 = vmatpush1.msra.mxu0 0.0
    %2402 = vmatprep.subr.mxu0 0.0
    %2403 = vmatpush1.msra.mxu0 0.0
    %2404 = vmatprep.subr.mxu0 0.0
    %2405 = vmatpush1.msra.mxu0 0.0
    %2406 = vmatprep.subr.mxu0 0.0
    %2407 = vmatpush1.msra.mxu0 0.0
    %2408 = vmatprep.subr.mxu0 0.0
    %2409 = vmatpush1.msra.mxu0 0.0
    %2410 = vmatprep.subr.mxu0 0.0
    %2411 = vmatpush1.msra.mxu0 0.0
    %2412 = vmatprep.subr.mxu0 0.0
    %2413 = vmatpush1.msra.mxu0 0.0
    %2414 = vmatprep.mubr.f32.mxu0 0.0
    %2415 = vmatmul.mubr.f32.gmra.mrb[0].mxu0 %v2339
    %v2416 = vpop.f32.mrb[0].mxu0
    %v2417 = vadd.f32 0.0, %v2416
    %v2418 = vpop.f32.mrb[0].mxu0
    %2419 = vmatprep.mubr.f32.mxu0 0.0
    %2420 = vmatmul.mubr.f32.gmra.mrb[0].mxu0 %v2342
    %v2421 = vpop.f32.mrb[0].mxu0
    %v2422 = vadd.f32 0.0, %v2421
    %v2423 = vpop.f32.mrb[0].mxu0
    %2424 = vmatprep.mubr.f32.mxu0 0.0
    %2425 = vmatmul.mubr.f32.gmra.mrb[0].mxu0 %v2345
    %v2426 = vpop.f32.mrb[0].mxu0
    %v2427 = vadd.f32 0.0, %v2426
    %v2428 = vpop.f32.mrb[0].mxu0
    %2429 = vmatprep.mubr.f32.mxu0 0.0
    %2430 = vmatmul.mubr.f32.gmra.mrb[0].mxu0 %v2348
    %v2431 = vpop.f32.mrb[0].mxu0
    %v2432 = vadd.f32 0.0, %v2431
    %v2433 = vpop.f32.mrb[0].mxu0
    %2434 = vdwg.mxu0
    %v2435 = vadd.f32 %v2328, %v2417
    %v2436 = vadd.f32 %v2328, %v2422
    %v2437 = vadd.f32 %v2328, %v2427
    %v2438 = vadd.f32 %v2328, %v2432
    %s2439 = scalar_lea.vmem [#allocation7], 128
    %v2440 = vld [vmem:[%s2439] sm:$0xff]
    %v2441 = vld [vmem:[%s2439 + $0x8] sm:$0xff]
    %v2442 = vld [vmem:[%s2439 + $0x10] sm:$0xff]
    %v2443 = vld [vmem:[%s2439 + $0x18] sm:$0xff]
    %v2445 = vsel %vm932, %v2317, 0
    %v2448 = vsel %vm932, %v2318, 0
    %v2451 = vsel %vm932, %v2319, 0
    %v2454 = vsel %vm932, %v2320, 0
    %2456 = vmatprep.subr.mxu0 0.0
    %2457 = vmatpush1.msra.mxu0 %v2440
    %2458 = vmatprep.subr.mxu0 0.0
    %2459 = vmatpush1.msra.mxu0 %v2441
    %2460 = vmatprep.subr.mxu0 0.0
    %2461 = vmatpush1.msra.mxu0 %v2442
    %2462 = vmatprep.subr.mxu0 0.0
    %2463 = vmatpush1.msra.mxu0 %v2443
    %2464 = vmatprep.subr.mxu0 0.0
    %2465 = vmatpush1.msra.mxu0 0.0
    %2466 = vmatprep.subr.mxu0 0.0
    %2467 = vmatpush1.msra.mxu0 0.0
    %2468 = vmatprep.subr.mxu0 0.0
    %2469 = vmatpush1.msra.mxu0 0.0
    %2470 = vmatprep.subr.mxu0 0.0
    %2471 = vmatpush1.msra.mxu0 0.0
    %2472 = vmatprep.subr.mxu0 0.0
    %2473 = vmatpush1.msra.mxu0 0.0
    %2474 = vmatprep.subr.mxu0 0.0
    %2475 = vmatpush1.msra.mxu0 0.0
    %2476 = vmatprep.subr.mxu0 0.0
    %2477 = vmatpush1.msra.mxu0 0.0
    %2478 = vmatprep.subr.mxu0 0.0
    %2479 = vmatpush1.msra.mxu0 0.0
    %2480 = vmatprep.subr.mxu0 0.0
    %2481 = vmatpush1.msra.mxu0 0.0
    %2482 = vmatprep.subr.mxu0 0.0
    %2483 = vmatpush1.msra.mxu0 0.0
    %2484 = vmatprep.subr.mxu0 0.0
    %2485 = vmatpush1.msra.mxu0 0.0
    %2486 = vmatprep.subr.mxu0 0.0
    %2487 = vmatpush1.msra.mxu0 0.0
    %2488 = vmatprep.subr.mxu0 0.0
    %2489 = vmatpush1.msra.mxu0 0.0
    %2490 = vmatprep.subr.mxu0 0.0
    %2491 = vmatpush1.msra.mxu0 0.0
    %2492 = vmatprep.subr.mxu0 0.0
    %2493 = vmatpush1.msra.mxu0 0.0
    %2494 = vmatprep.subr.mxu0 0.0
    %2495 = vmatpush1.msra.mxu0 0.0
    %2496 = vmatprep.subr.mxu0 0.0
    %2497 = vmatpush1.msra.mxu0 0.0
    %2498 = vmatprep.subr.mxu0 0.0
    %2499 = vmatpush1.msra.mxu0 0.0
    %2500 = vmatprep.subr.mxu0 0.0
    %2501 = vmatpush1.msra.mxu0 0.0
    %2502 = vmatprep.subr.mxu0 0.0
    %2503 = vmatpush1.msra.mxu0 0.0
    %2504 = vmatprep.subr.mxu0 0.0
    %2505 = vmatpush1.msra.mxu0 0.0
    %2506 = vmatprep.subr.mxu0 0.0
    %2507 = vmatpush1.msra.mxu0 0.0
    %2508 = vmatprep.subr.mxu0 0.0
    %2509 = vmatpush1.msra.mxu0 0.0
    %2510 = vmatprep.subr.mxu0 0.0
    %2511 = vmatpush1.msra.mxu0 0.0
    %2512 = vmatprep.subr.mxu0 0.0
    %2513 = vmatpush1.msra.mxu0 0.0
    %2514 = vmatprep.subr.mxu0 0.0
    %2515 = vmatpush1.msra.mxu0 0.0
    %2516 = vmatprep.subr.mxu0 0.0
    %2517 = vmatpush1.msra.mxu0 0.0
    %2518 = vmatprep.subr.mxu0 0.0
    %2519 = vmatpush1.msra.mxu0 0.0
    %2520 = vmatprep.mubr.f32.mxu0 0.0
    %2521 = vmatmul.mubr.f32.gmra.mrb[0].mxu0 %v2445
    %v2522 = vpop.f32.mrb[0].mxu0
    %v2523 = vadd.f32 0.0, %v2522
    %v2524 = vpop.f32.mrb[0].mxu0
    %2525 = vmatprep.mubr.f32.mxu0 0.0
    %2526 = vmatmul.mubr.f32.gmra.mrb[0].mxu0 %v2448
    %v2527 = vpop.f32.mrb[0].mxu0
    %v2528 = vadd.f32 0.0, %v2527
    %v2529 = vpop.f32.mrb[0].mxu0
    %2530 = vmatprep.mubr.f32.mxu0 0.0
    %2531 = vmatmul.mubr.f32.gmra.mrb[0].mxu0 %v2451
    %v2532 = vpop.f32.mrb[0].mxu0
    %v2533 = vadd.f32 0.0, %v2532
    %v2534 = vpop.f32.mrb[0].mxu0
    %2535 = vmatprep.mubr.f32.mxu0 0.0
    %2536 = vmatmul.mubr.f32.gmra.mrb[0].mxu0 %v2454
    %v2537 = vpop.f32.mrb[0].mxu0
    %v2538 = vadd.f32 0.0, %v2537
    %v2539 = vpop.f32.mrb[0].mxu0
    %2540 = vdwg.mxu0
    %v2541 = vadd.f32 %v2435, %v2523
    %v2542 = vadd.f32 %v2436, %v2528
    %v2543 = vadd.f32 %v2437, %v2533
    %v2544 = vadd.f32 %v2438, %v2538
    %v2545 = vxor.u32 %v2541, 2147483648
    %v2546 = vxor.u32 %v2542, 2147483648
    %v2547 = vxor.u32 %v2543, 2147483648
    %v2548 = vxor.u32 %v2544, 2147483648
    %v2549 = vmul.f32 %v2545, 1.442695
    %v2550 = vpow.pop %v2549
    %v2551 = vmul.f32 %v2546, 1.442695
    %v2552 = vpow.pop %v2551
    %v2553 = vmul.f32 %v2547, 1.442695
    %v2554 = vpow.pop %v2553
    %v2555 = vmul.f32 %v2548, 1.442695
    %v2556 = vpow.pop %v2555
    %v2557 = vadd.f32 %v2550, 1.0
    %v2558 = vadd.f32 %v2552, 1.0
    %v2559 = vadd.f32 %v2554, 1.0
    %v2560 = vadd.f32 %v2556, 1.0
    %v2561 = vrcp.pop %v2557
    %v2562 = vmul.f32 1.0, %v2561
    %v2563 = vrcp.pop %v2558
    %v2564 = vmul.f32 1.0, %v2563
    %v2565 = vrcp.pop %v2559
    %v2566 = vmul.f32 1.0, %v2565
    %v2567 = vrcp.pop %v2560
    %v2568 = vmul.f32 1.0, %v2567
    %v2569 = vtanh.pop %v2541
    %v2570 = vtanh.pop %v2542
    %v2571 = vtanh.pop %v2543
    %v2572 = vtanh.pop %v2544
    %2577 = vrot.lane.b32.xlu0 %v2569, 96
    %v2578 = vpop.permute.xlu0 %2577
    %2579 = vrot.lane.b32.xlu0 %v2570, 96
    %v2580 = vpop.permute.xlu0 %2579
    %2581 = vrot.lane.b32.xlu0 %v2571, 96
    %v2582 = vpop.permute.xlu0 %2581
    %2583 = vrot.lane.b32.xlu0 %v2572, 96
    %v2584 = vpop.permute.xlu0 %2583
    %v2589 = vmul.f32 %v2562, %v2578
    %v2590 = vmul.f32 %v2564, %v2580
    %v2591 = vmul.f32 %v2566, %v2582
    %v2592 = vmul.f32 %v2568, %v2584
    %v2593 = vsel %vm932, %v2589, 0.0
    %v2594 = vsel %vm932, %v2590, 0.0
    %v2595 = vadd.f32 %v2593, %v2594
    %v2596 = vsel %vm932, %v2591, 0.0
    %v2597 = vadd.f32 %v2595, %v2596
    %v2598 = vsel %vm932, %v2592, 0.0
    %v2599 = vadd.f32 %v2597, %v2598
    %v2600 = vrot.slane %v2599, 4
    %v2601 = vadd.f32 %v2599, %v2600
    %v2602 = vrot.slane %v2601, 2
    %v2603 = vadd.f32 %v2601, %v2602
    %v2604 = vrot.slane %v2603, 1
    %v2605 = vadd.f32 %v2603, %v2604
    %v2606 = vmul.f32 %v2605, 0.03125
    %v2607 = vsub.f32 %v2589, %v2606
    %v2608 = vsub.f32 %v2590, %v2606
    %v2609 = vsub.f32 %v2591, %v2606
    %v2610 = vsub.f32 %v2592, %v2606
    %v2611 = vmul.f32 %v2607, %v2607
    %v2612 = vmul.f32 %v2608, %v2608
    %v2613 = vmul.f32 %v2609, %v2609
    %v2614 = vmul.f32 %v2610, %v2610
    %v2615 = vsel %vm932, %v2611, 0.0
    %v2616 = vsel %vm932, %v2612, 0.0
    %v2617 = vadd.f32 %v2615, %v2616
    %v2618 = vsel %vm932, %v2613, 0.0
    %v2619 = vadd.f32 %v2617, %v2618
    %v2620 = vsel %vm932, %v2614, 0.0
    %v2621 = vadd.f32 %v2619, %v2620
    %v2622 = vrot.slane %v2621, 4
    %v2623 = vadd.f32 %v2621, %v2622
    %v2624 = vrot.slane %v2623, 2
    %v2625 = vadd.f32 %v2623, %v2624
    %v2626 = vrot.slane %v2625, 1
    %v2627 = vadd.f32 %v2625, %v2626
    %v2628 = vmul.f32 %v2627, 0.03125
    %v2629 = vadd.f32 %v2628, 1e-05
    %v2630 = vrsqrt.pop %v2629
    %v2631 = vmul.f32 %v2607, %v2630
    %v2632 = vmul.f32 %v2608, %v2630
    %v2633 = vmul.f32 %v2609, %v2630
    %v2634 = vmul.f32 %v2610, %v2630
    %v2635 = vadd.f32 %v2631, %v1761
    %v2636 = vadd.f32 %v2632, %v1766
    %v2637 = vadd.f32 %v2633, %v1771
    %v2638 = vadd.f32 %v2634, %v1776
    %v2639 = vrot.slane %v2635, 1
    %v2640 = vrot.slane %v2636, 1
    %v2641 = vrot.slane %v2637, 1
    %v2642 = vrot.slane %v2638, 1
    %vm2643 = vcmp.lt.s32.totalorder %v219, 7
    %v2644 = vsel %vm2643, %v2641, %v2642
    %v2645 = vsel %vm2643, %v2640, %v2641
    %v2646 = vsel %vm2643, %v2639, %v2640
    %v2647 = vsel %vm2643, %v2642, %v2639
    %v2648 = vmax.f32 %v2635, %v2646
    %v2649 = vmax.f32 %v2636, %v2645
    %v2650 = vmax.f32 %v2637, %v2644
    %v2651 = vmax.f32 %v2638, %v2647
    %v2652 = vld [vmem:[%s13] sm:$0xff]
    %v2653 = vld [vmem:[%s13 + $0x8] sm:$0xff]
    %v2654 = vld [vmem:[%s13 + $0x10] sm:$0xff]
    %v2655 = vld [vmem:[%s13 + $0x18] sm:$0xff]
    %v2656 = vld [vmem:[%s14] sm:$0x1]
    %v2658 = vlaneseq
    %v2659 = vshrl.u32 %v2658, 7
    %v2660 = vsub.s32 0, %v2659
    %v2661 = vrot.slane %v2656, %v2660
    %v2664 = vsel %vm932, %v2648, 0
    %v2667 = vsel %vm932, %v2649, 0
    %v2670 = vsel %vm932, %v2650, 0
    %v2673 = vsel %vm932, %v2651, 0
    %2675 = vmatprep.subr.mxu0 0.0
    %2676 = vmatpush1.msra.mxu0 %v2652
    %2677 = vmatprep.subr.mxu0 0.0
    %2678 = vmatpush1.msra.mxu0 %v2653
    %2679 = vmatprep.subr.mxu0 0.0
    %2680 = vmatpush1.msra.mxu0 %v2654
    %2681 = vmatprep.subr.mxu0 0.0
    %2682 = vmatpush1.msra.mxu0 %v2655
    %2683 = vmatprep.subr.mxu0 0.0
    %2684 = vmatpush1.msra.mxu0 0.0
    %2685 = vmatprep.subr.mxu0 0.0
    %2686 = vmatpush1.msra.mxu0 0.0
    %2687 = vmatprep.subr.mxu0 0.0
    %2688 = vmatpush1.msra.mxu0 0.0
    %2689 = vmatprep.subr.mxu0 0.0
    %2690 = vmatpush1.msra.mxu0 0.0
    %2691 = vmatprep.subr.mxu0 0.0
    %2692 = vmatpush1.msra.mxu0 0.0
    %2693 = vmatprep.subr.mxu0 0.0
    %2694 = vmatpush1.msra.mxu0 0.0
    %2695 = vmatprep.subr.mxu0 0.0
    %2696 = vmatpush1.msra.mxu0 0.0
    %2697 = vmatprep.subr.mxu0 0.0
    %2698 = vmatpush1.msra.mxu0 0.0
    %2699 = vmatprep.subr.mxu0 0.0
    %2700 = vmatpush1.msra.mxu0 0.0
    %2701 = vmatprep.subr.mxu0 0.0
    %2702 = vmatpush1.msra.mxu0 0.0
    %2703 = vmatprep.subr.mxu0 0.0
    %2704 = vmatpush1.msra.mxu0 0.0
    %2705 = vmatprep.subr.mxu0 0.0
    %2706 = vmatpush1.msra.mxu0 0.0
    %2707 = vmatprep.subr.mxu0 0.0
    %2708 = vmatpush1.msra.mxu0 0.0
    %2709 = vmatprep.subr.mxu0 0.0
    %2710 = vmatpush1.msra.mxu0 0.0
    %2711 = vmatprep.subr.mxu0 0.0
    %2712 = vmatpush1.msra.mxu0 0.0
    %2713 = vmatprep.subr.mxu0 0.0
    %2714 = vmatpush1.msra.mxu0 0.0
    %2715 = vmatprep.subr.mxu0 0.0
    %2716 = vmatpush1.msra.mxu0 0.0
    %2717 = vmatprep.subr.mxu0 0.0
    %2718 = vmatpush1.msra.mxu0 0.0
    %2719 = vmatprep.subr.mxu0 0.0
    %2720 = vmatpush1.msra.mxu0 0.0
    %2721 = vmatprep.subr.mxu0 0.0
    %2722 = vmatpush1.msra.mxu0 0.0
    %2723 = vmatprep.subr.mxu0 0.0
    %2724 = vmatpush1.msra.mxu0 0.0
    %2725 = vmatprep.subr.mxu0 0.0
    %2726 = vmatpush1.msra.mxu0 0.0
    %2727 = vmatprep.subr.mxu0 0.0
    %2728 = vmatpush1.msra.mxu0 0.0
    %2729 = vmatprep.subr.mxu0 0.0
    %2730 = vmatpush1.msra.mxu0 0.0
    %2731 = vmatprep.subr.mxu0 0.0
    %2732 = vmatpush1.msra.mxu0 0.0
    %2733 = vmatprep.subr.mxu0 0.0
    %2734 = vmatpush1.msra.mxu0 0.0
    %2735 = vmatprep.subr.mxu0 0.0
    %2736 = vmatpush1.msra.mxu0 0.0
    %2737 = vmatprep.subr.mxu0 0.0
    %2738 = vmatpush1.msra.mxu0 0.0
    %2739 = vmatprep.mubr.f32.mxu0 0.0
    %2740 = vmatmul.mubr.f32.gmra.mrb[0].mxu0 %v2664
    %v2741 = vpop.f32.mrb[0].mxu0
    %v2742 = vadd.f32 %v2661, %v2741
    %v2743 = vpop.f32.mrb[0].mxu0
    %2744 = vmatprep.mubr.f32.mxu0 0.0
    %2745 = vmatmul.mubr.f32.gmra.mrb[0].mxu0 %v2667
    %v2746 = vpop.f32.mrb[0].mxu0
    %v2747 = vadd.f32 %v2661, %v2746
    %v2748 = vpop.f32.mrb[0].mxu0
    %2749 = vmatprep.mubr.f32.mxu0 0.0
    %2750 = vmatmul.mubr.f32.gmra.mrb[0].mxu0 %v2670
    %v2751 = vpop.f32.mrb[0].mxu0
    %v2752 = vadd.f32 %v2661, %v2751
    %v2753 = vpop.f32.mrb[0].mxu0
    %2754 = vmatprep.mubr.f32.mxu0 0.0
    %2755 = vmatmul.mubr.f32.gmra.mrb[0].mxu0 %v2673
    %v2756 = vpop.f32.mrb[0].mxu0
    %v2757 = vadd.f32 %v2661, %v2756
    %v2758 = vpop.f32.mrb[0].mxu0
    %2759 = vdwg.mxu0
    %vm2760 = vcmp.lt.s32.totalorder %v219, 0
    %v2761 = vsub.s32 0, %v219
    %v2762 = vsel %vm2760, %v2761, %v219
    %v2763 = vshrl.u32 %v2762, 1
    %v2764 = vand.u32 %v2762, 1
    %v2765 = vsub.s32 0, %v2764
    %v2766 = vsel %vm2760, %v2765, %v2764
    %vm2767 = vcmp.lt.s32.totalorder %v225, 0
    %v2768 = vsub.s32 0, %v225
    %v2769 = vsel %vm2767, %v2768, %v225
    %v2770 = vshrl.u32 %v2769, 1
    %v2771 = vand.u32 %v2769, 1
    %v2772 = vsub.s32 0, %v2771
    %v2773 = vsel %vm2767, %v2772, %v2771
    %vm2774 = vcmp.ne.s32.totalorder %v2766, 0
    %vm2775 = vcmp.ne.s32.totalorder %v2773, 0
    %vm2776 = vcmp.lt.s32.totalorder %v2766, 0
    %vm2777 = vcmp.lt.s32.totalorder %v2773, 0
    %vm2778 = vmand %vm2776, %vm2774
    %vm2779 = vmand %vm2777, %vm2775
    %v2780 = vadd.s32 %v2766, 2
    %v2781 = vadd.s32 %v2773, 2
    %v2782 = vsel %vm2778, %v2780, %v2766
    %v2783 = vsel %vm2779, %v2781, %v2773
    %vm2784 = vcmp.eq.s32.totalorder %v2782, 0
    %vm2785 = vcmp.eq.s32.totalorder %v2783, 0
    %v2786 = vsel %vm2784, %v2742, -1e+30
    %v2787 = vsel %vm2785, %v2747, -1e+30
    %v2788 = vsel %vm2784, %v2752, -1e+30
    %v2789 = vsel %vm2785, %v2757, -1e+30
    %vm2790 = vcmask 72768
    %v2791 = vsel %vm2790, %v2786, -inf
    %v2792 = vsel %vm2790, %v2787, -inf
    %v2793 = vmax.f32 %v2791, %v2792
    %v2794 = vrot.slane %v2793, 4
    %v2795 = vmax.f32 %v2793, %v2794
    %v2796 = vrot.slane %v2795, 2
    %v2797 = vmax.f32 %v2795, %v2796
    %v2798 = vrot.slane %v2797, 1
    %v2799 = vmax.f32 %v2797, %v2798
    %v2800 = vsel %vm2790, %v2788, -inf
    %v2801 = vsel %vm2790, %v2789, -inf
    %v2802 = vmax.f32 %v2800, %v2801
    %v2803 = vrot.slane %v2802, 4
    %v2804 = vmax.f32 %v2802, %v2803
    %v2805 = vrot.slane %v2804, 2
    %v2806 = vmax.f32 %v2804, %v2805
    %v2807 = vrot.slane %v2806, 1
    %v2808 = vmax.f32 %v2806, %v2807
    %v2809 = vsub.f32 %v2786, %v2799
    %v2810 = vsub.f32 %v2787, %v2799
    %v2811 = vsub.f32 %v2788, %v2808
    %v2812 = vsub.f32 %v2789, %v2808
    %v2813 = vmul.f32 %v2809, 1.442695
    %v2814 = vpow.pop %v2813
    %v2815 = vmul.f32 %v2810, 1.442695
    %v2816 = vpow.pop %v2815
    %v2817 = vmul.f32 %v2811, 1.442695
    %v2818 = vpow.pop %v2817
    %v2819 = vmul.f32 %v2812, 1.442695
    %v2820 = vpow.pop %v2819
    %v2821 = vsel %vm2790, %v2814, 0.0
    %v2822 = vsel %vm2790, %v2816, 0.0
    %v2823 = vadd.f32 %v2821, %v2822
    %v2824 = vrot.slane %v2823, 4
    %v2825 = vadd.f32 %v2823, %v2824
    %v2826 = vrot.slane %v2825, 2
    %v2827 = vadd.f32 %v2825, %v2826
    %v2828 = vrot.slane %v2827, 1
    %v2829 = vadd.f32 %v2827, %v2828
    %v2830 = vsel %vm2790, %v2818, 0.0
    %v2831 = vsel %vm2790, %v2820, 0.0
    %v2832 = vadd.f32 %v2830, %v2831
    %v2833 = vrot.slane %v2832, 4
    %v2834 = vadd.f32 %v2832, %v2833
    %v2835 = vrot.slane %v2834, 2
    %v2836 = vadd.f32 %v2834, %v2835
    %v2837 = vrot.slane %v2836, 1
    %v2838 = vadd.f32 %v2836, %v2837
    %v2839 = vrcp.pop %v2829
    %v2840 = vmul.f32 %v2814, %v2839
    %v2841 = vmul.f32 %v2816, %v2839
    %v2842 = vrcp.pop %v2838
    %v2843 = vmul.f32 %v2818, %v2842
    %v2844 = vmul.f32 %v2820, %v2842
    %2846 = vset.pattern.permute.xlu0 8
    %2847 = vperm.xlu0 %2846, %v2840
    %v2848 = vpop.permute.xlu0 %2847
    %2851 = vset.pattern.permute.xlu0 8
    %2852 = vperm.xlu0 %2851, %v2841
    %v2853 = vpop.permute.xlu0 %2852
    %2856 = vset.pattern.permute.xlu0 8
    %2857 = vperm.xlu0 %2856, %v2843
    %v2858 = vpop.permute.xlu0 %2857
    %2861 = vset.pattern.permute.xlu0 8
    %2862 = vperm.xlu0 %2861, %v2844
    %v2863 = vpop.permute.xlu0 %2862
    %v2865 = vmul.f32 %v2742, %v2848
    %v2866 = vmul.f32 %v2747, %v2853
    %v2867 = vmul.f32 %v2752, %v2858
    %v2868 = vmul.f32 %v2757, %v2863
    %vm2869 = vcmask 64512
    %v2870 = vsel %vm2869, %v2865, 0.0
    %v2871 = vsel %vm2869, %v2866, 0.0
    %v2872 = vadd.f32 %v2870, %v2871
    %v2873 = vrot.slane %v2872, 4
    %v2874 = vadd.f32 %v2872, %v2873
    %v2875 = vrot.slane %v2874, 2
    %v2876 = vadd.f32 %v2874, %v2875
    %v2877 = vrot.slane %v2876, 1
    %v2878 = vadd.f32 %v2876, %v2877
    %v2879 = vsel %vm2869, %v2867, 0.0
    %v2880 = vsel %vm2869, %v2868, 0.0
    %v2881 = vadd.f32 %v2879, %v2880
    %v2882 = vrot.slane %v2881, 4
    %v2883 = vadd.f32 %v2881, %v2882
    %v2884 = vrot.slane %v2883, 2
    %v2885 = vadd.f32 %v2883, %v2884
    %v2886 = vrot.slane %v2885, 1
    %v2887 = vadd.f32 %v2885, %v2886
    %v2888 = vmul.f32 %v2878, 0.125
    %v2889 = vmul.f32 %v2887, 0.125
    %vm2892 = vcmask 1041409
    %v2893 = vsel %vm2892, %v2889, %v2888
    %vm2895 = vcmask 58368
    %2896 = vst.msk [vmem:[#allocation8] sm:$0x3] %vm2895, %v2893
    // Predicated region
    $region74: #{tpu_custom_call.1} parent=1 // pred_check
      _
    $region75: #{tpu_custom_call.1} parent=1 // pred_check_branch
      %2898 = sbr.rel (0) target = $region77
    $region76: #{tpu_custom_call.1} parent=1 // pred_region
      %s2900 = ssub.s32 32, 32
      %2901 = vsyncadd [#allocation4], %s2900
      %s2903 = sshll.u32 [#allocation8], 4
      %s2904 = int_to_ptr.vmem [resolvable:$true] %s2903
      %2906 = dma.vmem_to_hbm [thread:$0]  %s2904, 32, %s15, [#allocation4]
    $region77: #{tpu_custom_call.1} parent=1 // pred_fallthru
      _
    // Predicated region
    $region78: #{tpu_custom_call.1} parent=1 // pred_check
      _
    $region79: #{tpu_custom_call.1} parent=1 // pred_check_branch
      %2908 = sbr.rel (0) target = $region81
    $region80: #{tpu_custom_call.1} parent=1 // pred_region
      %2909 = dma.done [#allocation4], 32
    $region81: #{tpu_custom_call.1} parent=1 // pred_fallthru
      _
    %2910 = vsyncpa [#allocation3], 1
    %2911 = vsyncpa [#allocation6], 1
    %2912 = vsyncpa [#allocation4], 1

</llo_original>
